<compile_context>
chip_gen: v6e
topology: v6e:2x2x1
jax: 0.10.0
libtpu: 0.0.40
codegen_flags: <defaults>
</compile_context>

<pallas_src>
import numpy as np
import jax
import jax.numpy as jnp
from jax.experimental import pallas as pl
from jax.experimental.pallas import tpu as pltpu

# ----------------------------- configuration -------------------------------
SIZE = 32                   # TreeLSTM `size`
CHUNK = SIZE // 2           # chunk_size
EMBED_DIM = 24              # embed.output_size
VOCAB = 50
BATCH = 2
NODES_PER_TREE = 7          # node 0 = root, children (1,2), grandchildren (3..6)
N_TOTAL = BATCH * NODES_PER_TREE
N_CHILD = 2                 # every internal node has 2 children

N_ROOT = BATCH              # roots
N_LVL1 = 2 * BATCH          # level-1 nodes
N_LEAF = 4 * BATCH          # leaves
OUT_LANES = 8 * CHUNK       # 128 — lane-dense output slab width

_GATE_W = ("W_i", "W_f", "W_o", "W_u")
_GATE_U = ("U_i", "U_f", "U_o", "U_u")
_GATE_B = ("b_i", "b_f", "b_o", "b_u")

# --------------------- tree topology (static, host-side) --------------------
# original (tree-major) node ids, used by the pure-JAX reference
_LEAF_IDS = np.array([b * NODES_PER_TREE + i for b in range(BATCH) for i in (3, 4, 5, 6)])
_LVL1_PARENTS = np.array([b * NODES_PER_TREE + i for b in range(BATCH) for i in (1, 2)])
_LVL1_CHILDREN = np.array([[b * NODES_PER_TREE + c for c in ch]
                           for b in range(BATCH) for ch in ([3, 4], [5, 6])])
_ROOT_PARENTS = np.array([b * NODES_PER_TREE for b in range(BATCH)])
_ROOT_CHILDREN = np.array([[b * NODES_PER_TREE + 1, b * NODES_PER_TREE + 2]
                           for b in range(BATCH)])


def _build_layout():
    """Kernel row layout: [roots | level-1 | leaves], children blocked by position."""
    roots = [b * NODES_PER_TREE for b in range(BATCH)]
    lvl1 = [b * NODES_PER_TREE + n for n in (1, 2) for b in range(BATCH)]
    lvl1_row_order = [(b, n) for n in (1, 2) for b in range(BATCH)]
    child_of = {1: (3, 4), 2: (5, 6)}
    leaves = [b * NODES_PER_TREE + child_of[n][pos]
              for pos in (0, 1) for (b, n) in lvl1_row_order]
    perm = np.array(roots + lvl1 + leaves, dtype=np.int32)
    inv = np.argsort(perm).astype(np.int32)
    return perm, inv


_PERM, _INV_PERM = _build_layout()


# --------------------------- Pallas plumbing --------------------------------
def _fullspec(shape):
    nd = len(shape)
    return pl.BlockSpec(shape, lambda *args, _nd=nd: (0,) * _nd)


# ------------------------------ fused kernel --------------------------------
def _fused_tree_kernel(emb_ref, wn_ref, wgbd_ref, bg_ref, ugi_ref, ugo_ref,
                       o_ref, state_ref, wx_ref, zpar_ref):
    """One kernel for the full TreeEncoder_v2 forward on the static forest.

    Row layout (N_TOTAL rows): [roots(0:2) | level-1(2:6) | leaves(6:14)],
    children blocked by child position inside each level.
    state_ref lanes : [enc_in  z_children (h|c) | enc_out z_children (h|c)]
    wx_ref    lanes : [enc_in  W*x+b (i|f|o|u)  | enc_out W*x+b (i|f|o|u)]
    o_ref     lanes : [ctxt_in(enc_in) | ctxt_in(enc_out) | ctxt_out(enc_out) | pad]
    """
    def mm(a, b):
        return jnp.dot(a, b, preferred_element_type=jnp.float32)

    sig = jax.nn.sigmoid

    # ---- shared prologue: one MXU push for node features (both encoders) and
    #      one push for every node's W-side gate pre-activations (bias folded).
    nf_both = mm(emb_ref[...], wn_ref[...])                    # (N_TOTAL, 2*SIZE)
    bg = bg_ref[...]                                           # (1, 8*CHUNK)
    wx_ref[...] = mm(nf_both, wgbd_ref[...]) + bg              # (N_TOTAL, 8*CHUNK)
    # leaf z_children = tanh(node_features); internal rows are placeholders
    # overwritten by the inside cells before ever being read.
    state_ref[...] = jnp.tanh(nf_both)                         # (N_TOTAL, 2*SIZE)
    # lane-dense output slab: zero covers roots' outside ctxt, leaves' inside
    # ctxt and the padding lanes.
    o_ref[...] = jnp.zeros_like(o_ref)

    b_u_in = bg[:, 3 * CHUNK:4 * CHUNK]
    b_u_out = bg[:, 7 * CHUNK:8 * CHUNK]
    ug_in = ugi_ref[...]
    ug_out = ugo_ref[...]

    L1_LO, L1_HI = N_ROOT, N_ROOT + N_LVL1      # level-1 rows  [2, 6)
    LF_LO = N_ROOT + N_LVL1                     # leaves start   6
    LF_MID = LF_LO + N_LVL1                     # child-1 block 10
    LF_HI = LF_LO + N_LEAF                      # 14

    # ------------------------ inside (child-sum) cell ------------------------
    def inside_level(enc, ug, b_u, par_lo, par_hi, c0_lo, c0_hi, c1_lo, c1_hi):
        zo = enc * SIZE              # this encoder's state lane offset
        go = enc * 4 * CHUNK         # this encoder's wx lane offset
        h0 = state_ref[c0_lo:c0_hi, zo:zo + CHUNK]
        c0 = state_ref[c0_lo:c0_hi, zo + CHUNK:zo + SIZE]
        h1 = state_ref[c1_lo:c1_hi, zo:zo + CHUNK]
        c1 = state_ref[c1_lo:c1_hi, zo + CHUNK:zo + SIZE]
        wx = wx_ref[par_lo:par_hi, go:go + 4 * CHUNK]          # W*x + b, all gates
        h_tilde = h0 + h1
        u_t = mm(h_tilde, ug)                                   # U_*(h_tilde)
        uf = ug[:, CHUNK:2 * CHUNK]                             # U_f columns
        u_f0 = mm(h0, uf)
        u_f1 = mm(h1, uf)
        i_j = sig(wx[:, 0:CHUNK] + u_t[:, 0:CHUNK])
        f_0 = sig(wx[:, CHUNK:2 * CHUNK] + u_f0)
        f_1 = sig(wx[:, CHUNK:2 * CHUNK] + u_f1)
        o_j = sig(wx[:, 2 * CHUNK:3 * CHUNK] + u_t[:, 2 * CHUNK:3 * CHUNK])
        uu_ht = u_t[:, 3 * CHUNK:4 * CHUNK]
        u_j = jnp.tanh(wx[:, 3 * CHUNK:4 * CHUNK] + uu_ht)
        c_j = i_j * u_j + f_0 * c0 + f_1 * c1
        h_j = o_j * jnp.tanh(c_j)
        # this level's inside state (consumed by the level above / outside pass)
        state_ref[par_lo:par_hi, zo:zo + CHUNK] = h_j
        state_ref[par_lo:par_hi, zo + CHUNK:zo + SIZE] = c_j
        # z_ctxt_inside = tanh(U_u(h_tilde) + b_u)
        o_ref[par_lo:par_hi, enc * CHUNK:(enc + 1) * CHUNK] = jnp.tanh(uu_ht + b_u)

    for enc, ug, b_u in ((0, ug_in, b_u_in), (1, ug_out, b_u_out)):
        # level-1 parents: children are the leaves
        inside_level(enc, ug, b_u, L1_LO, L1_HI, LF_LO, LF_MID, LF_MID, LF_HI)
        # roots: children are the level-1 nodes (rows 2:4 child0, 4:6 child1)
        inside_level(enc, ug, b_u, 0, N_ROOT, N_ROOT, 2 * N_ROOT, 2 * N_ROOT, L1_HI)

    # ------------------- outside-with-parent cell (enc_out) ------------------
    def outside_level(par_lo, par_hi, c0_lo, c0_hi, c1_lo, c1_hi, hp, cp):
        zo, go = SIZE, 4 * CHUNK                                # enc_out lanes
        h0 = state_ref[c0_lo:c0_hi, zo:zo + CHUNK]
        c0 = state_ref[c0_lo:c0_hi, zo + CHUNK:zo + SIZE]
        h1 = state_ref[c1_lo:c1_hi, zo:zo + CHUNK]
        c1 = state_ref[c1_lo:c1_hi, zo + CHUNK:zo + SIZE]
        wx = wx_ref[par_lo:par_hi, go:go + 4 * CHUNK]           # reused from inside
        u_h0 = mm(h0, ug_out)
        u_h1 = mm(h1, ug_out)
        u_p = mm(hp, ug_out)
        # linearity: U(h_tilde - h_k + h_parent) = U(h_other) + U(h_parent)
        u_m0 = u_h1 + u_p
        u_m1 = u_h0 + u_p
        wx_f = wx[:, CHUNK:2 * CHUNK]
        fc0 = sig(wx_f + u_h0[:, CHUNK:2 * CHUNK]) * c0
        fc1 = sig(wx_f + u_h1[:, CHUNK:2 * CHUNK]) * c1
        fcp = sig(wx_f + u_p[:, CHUNK:2 * CHUNK]) * cp

        def one_child(u_m, fc_other):
            i_j = sig(wx[:, 0:CHUNK] + u_m[:, 0:CHUNK])
            o_j = sig(wx[:, 2 * CHUNK:3 * CHUNK] + u_m[:, 2 * CHUNK:3 * CHUNK])
            u_j = jnp.tanh(wx[:, 3 * CHUNK:4 * CHUNK] + u_m[:, 3 * CHUNK:4 * CHUNK])
            c_j = i_j * u_j + fc_other + fcp
            h_j = o_j * jnp.tanh(c_j)
            return h_j, c_j

        h_o0, c_o0 = one_child(u_m0, fc1)
        h_o1, c_o1 = one_child(u_m1, fc0)
        return h_o0, c_o0, h_o1, c_o1

    # step 1: parents = roots (zero parent state), children = level-1 nodes
    zeros_p = jnp.zeros((N_ROOT, CHUNK), jnp.float32)
    ho0, co0, ho1, co1 = outside_level(0, N_ROOT, N_ROOT, 2 * N_ROOT, 2 * N_ROOT, L1_HI,
                                       zeros_p, zeros_p)
    o_ref[N_ROOT:2 * N_ROOT, 2 * CHUNK:3 * CHUNK] = ho0        # z_ctxt_outside (h)
    o_ref[2 * N_ROOT:L1_HI, 2 * CHUNK:3 * CHUNK] = ho1
    # stash level-1 outside states [h | c] in level-row order for step 2
    zpar_ref[0:N_ROOT, 0:CHUNK] = ho0
    zpar_ref[N_ROOT:N_LVL1, 0:CHUNK] = ho1
    zpar_ref[0:N_ROOT, CHUNK:SIZE] = co0
    zpar_ref[N_ROOT:N_LVL1, CHUNK:SIZE] = co1

    # step 2: parents = level-1 nodes, children = leaves
    hp = zpar_ref[:, 0:CHUNK]
    cp = zpar_ref[:, CHUNK:SIZE]
    gh0, _, gh1, _ = outside_level(L1_LO, L1_HI, LF_LO, LF_MID, LF_MID, LF_HI, hp, cp)
    o_ref[LF_LO:LF_MID, 2 * CHUNK:3 * CHUNK] = gh0
    o_ref[LF_MID:LF_HI, 2 * CHUNK:3 * CHUNK] = gh1


# ------------------------------ host wrappers --------------------------------
def _pack_params(params_in, params_out):
    def cat_gates(p):
        wg = jnp.concatenate([p[k] for k in _GATE_W], axis=1)   # (SIZE, 4*CHUNK)
        ug = jnp.concatenate([p[k] for k in _GATE_U], axis=1)   # (CHUNK, 4*CHUNK)
        bg = jnp.concatenate([p[k] for k in _GATE_B], axis=1)   # (1, 4*CHUNK)
        return wg, ug, bg

    wg_i, ug_i, bg_i = cat_gates(params_in)
    wg_o, ug_o, bg_o = cat_gates(params_out)
    wn_cat = jnp.concatenate([params_in["W_node"], params_out["W_node"]], axis=1)
    # block-diagonal W-gate matrix: [nf_in | nf_out] @ wg_bd -> [wx_in | wx_out]
    wg_bd = jnp.zeros((2 * SIZE, 8 * CHUNK), jnp.float32)
    wg_bd = wg_bd.at[:SIZE, :4 * CHUNK].set(wg_i)
    wg_bd = wg_bd.at[SIZE:, 4 * CHUNK:].set(wg_o)
    bg_cat = jnp.concatenate([bg_i, bg_o], axis=1)              # (1, 8*CHUNK)
    return wn_cat, wg_bd, bg_cat, ug_i, ug_o


def tree_encoder_v2_forward(params_in, params_out, embed_table, tokens, node_ids):
    emb = embed_table[tokens]                      # embedding gather (host glue)
    emb_p = emb[_PERM]                             # level/child-blocked row order
    wn_cat, wg_bd, bg_cat, ug_i, ug_o = _pack_params(params_in, params_out)

    args = (emb_p, wn_cat, wg_bd, bg_cat, ug_i, ug_o)
    slab = pl.pallas_call(
        _fused_tree_kernel,
        out_shape=jax.ShapeDtypeStruct((N_TOTAL, OUT_LANES), jnp.float32),
        grid=(1,),
        in_specs=[_fullspec(a.shape) for a in args],
        out_specs=_fullspec((N_TOTAL, OUT_LANES)),
        scratch_shapes=[
            pltpu.VMEM((N_TOTAL, 2 * SIZE), jnp.float32),       # inside z_children, both enc
            pltpu.VMEM((N_TOTAL, 8 * CHUNK), jnp.float32),      # W-side gate pre-acts
            pltpu.VMEM((N_LVL1, SIZE), jnp.float32),            # level-1 outside state
        ],
        compiler_params=pltpu.CompilerParams(dimension_semantics=("arbitrary",)),
    )(*args)

    h_all = slab[_INV_PERM, :3 * CHUNK]            # undo row permutation (glue)
    output = h_all.reshape(BATCH, NODES_PER_TREE, 3 * CHUNK)
    labels = tokens.reshape(BATCH, NODES_PER_TREE)                 # torch int64 -> int32
    labels_mask = jnp.ones((BATCH, NODES_PER_TREE), dtype=bool)
    label_node_ids = node_ids.reshape(BATCH, NODES_PER_TREE)
    return output, labels, labels_mask, label_node_ids


# --------------------------- pure-JAX reference ------------------------------
def _inside_cell_ref(z_node, z_ch_flat, params, n_children):
    size = z_node.shape[-1]
    chunk = size // 2
    Wi, Wf, Wo, Wu = (params[k] for k in _GATE_W)
    Ui, Uf, Uo, Uu = (params[k] for k in _GATE_U)
    bi, bf, bo, bu = (params[k] for k in _GATE_B)
    wf_x = z_node @ Wf
    h_tilde = jnp.zeros((z_node.shape[0], chunk), jnp.float32)
    fc_sum = jnp.zeros_like(h_tilde)
    for k in range(n_children):
        base = k * size
        h_k = z_ch_flat[:, base:base + chunk]
        c_k = z_ch_flat[:, base + chunk:base + size]
        h_tilde = h_tilde + h_k
        fc_sum = fc_sum + jax.nn.sigmoid(wf_x + h_k @ Uf + bf) * c_k
    uu_ht = h_tilde @ Uu + bu
    i_j = jax.nn.sigmoid(z_node @ Wi + h_tilde @ Ui + bi)
    o_j = jax.nn.sigmoid(z_node @ Wo + h_tilde @ Uo + bo)
    u_j = jnp.tanh(z_node @ Wu + uu_ht)
    c_j = i_j * u_j + fc_sum
    h_j = o_j * jnp.tanh(c_j)
    return jnp.concatenate([h_j, c_j], -1), h_tilde, jnp.tanh(uu_ht)


def _outside_cell_ref(z_node, z_ch_flat, z_parent, params, n_children):
    size = z_node.shape[-1]
    chunk = size // 2
    Wi, Wf, Wo, Wu = (params[k] for k in _GATE_W)
    Ui, Uf, Uo, Uu = (params[k] for k in _GATE_U)
    bi, bf, bo, bu = (params[k] for k in _GATE_B)
    h_parent, c_parent = z_parent[:, :chunk], z_parent[:, chunk:]
    wi_x, wf_x, wo_x, wu_x = z_node @ Wi, z_node @ Wf, z_node @ Wo, z_node @ Wu
    h_tilde = jnp.zeros((z_node.shape[0], chunk), jnp.float32)
    fc_sum = jnp.zeros_like(h_tilde)
    h_ks, fc_ks = [], []
    for k in range(n_children):
        base = k * size
        h_k = z_ch_flat[:, base:base + chunk]
        c_k = z_ch_flat[:, base + chunk:base + size]
        fc_k = jax.nn.sigmoid(wf_x + h_k @ Uf + bf) * c_k
        h_tilde = h_tilde + h_k
        fc_sum = fc_sum + fc_k
        h_ks.append(h_k)
        fc_ks.append(fc_k)
    fc_par = jax.nn.sigmoid(wf_x + h_parent @ Uf + bf) * c_parent
    outs = []
    for k in range(n_children):
        htm1 = h_tilde - h_ks[k] + h_parent
        i_j = jax.nn.sigmoid(wi_x + htm1 @ Ui + bi)
        o_j = jax.nn.sigmoid(wo_x + htm1 @ Uo + bo)
        u_j = jnp.tanh(wu_x + htm1 @ Uu + bu)
        c_j = i_j * u_j + (fc_sum - fc_ks[k] + fc_par)
        h_j = o_j * jnp.tanh(c_j)
        outs += [h_j, c_j]
    return jnp.concatenate(outs, -1)


def tree_encoder_v2_reference(params_in, params_out, embed_table, tokens, node_ids):
    def inside(params):
        emb = embed_table[tokens]
        nf = emb @ params["W_node"]
        z_children = jnp.zeros((N_TOTAL, SIZE), jnp.float32)
        z_ctxt = jnp.zeros((N_TOTAL, CHUNK), jnp.float32)
        z_children = z_children.at[_LEAF_IDS].set(jnp.tanh(nf[_LEAF_IDS]))
        for parents, children in ((_LVL1_PARENTS, _LVL1_CHILDREN),
                                  (_ROOT_PARENTS, _ROOT_CHILDREN)):
            z_node = nf[parents]
            z_ch = z_children[children].reshape(len(parents), N_CHILD * SIZE)
            z_in, _ht, ctxt = _inside_cell_ref(z_node, z_ch, params, N_CHILD)
            z_children = z_children.at[parents].set(z_in)
            z_ctxt = z_ctxt.at[parents].set(ctxt)
        return nf, z_children, z_ctxt

    def outside(params, nf, z_children):
        z_parent = jnp.zeros((N_TOTAL, SIZE), jnp.float32)
        z_ctxt_out = jnp.zeros((N_TOTAL, CHUNK), jnp.float32)
        for parents, children in ((_ROOT_PARENTS, _ROOT_CHILDREN),
                                  (_LVL1_PARENTS, _LVL1_CHILDREN)):
            g = len(parents)
            z_node = nf[parents]
            z_ch = z_children[children].reshape(g, N_CHILD * SIZE)
            z_par = z_parent[parents]
            z_out = _outside_cell_ref(z_node, z_ch, z_par, params, N_CHILD)
            z_out = z_out.reshape(g * N_CHILD, SIZE)
            child_ids = children.reshape(-1)
            z_parent = z_parent.at[child_ids].set(z_out)
            z_ctxt_out = z_ctxt_out.at[child_ids].set(z_out[:, :CHUNK])
        return z_ctxt_out

    _, _, zci_in = inside(params_in)
    nf, zch, zci_out = inside(params_out)
    zco_out = outside(params_out, nf, zch)
    output_in = zci_in.reshape(BATCH, NODES_PER_TREE, CHUNK)
    output_out = jnp.concatenate([zci_out, zco_out], -1).reshape(BATCH, NODES_PER_TREE, SIZE)
    output = jnp.concatenate([output_in, output_out], -1)       # dropout_p=0 -> identity
    labels = tokens.reshape(BATCH, NODES_PER_TREE)
    labels_mask = jnp.ones((BATCH, NODES_PER_TREE), dtype=bool)
    label_node_ids = node_ids.reshape(BATCH, NODES_PER_TREE)
    return output, labels, labels_mask, label_node_ids


# -------------------------------- parameters ---------------------------------
def init_treelstm_params(key, embed_dim, size):
    chunk = size // 2
    ks = jax.random.split(key, 13)
    p = {"W_node": jax.random.normal(ks[0], (embed_dim, size), jnp.float32) * 0.1}
    for i, g in enumerate("ifou"):
        p["W_" + g] = jax.random.normal(ks[1 + i], (size, chunk), jnp.float32) * 0.1
        p["U_" + g] = jax.random.normal(ks[5 + i], (chunk, chunk), jnp.float32) * 0.1
        p["b_" + g] = jax.random.normal(ks[9 + i], (1, chunk), jnp.float32) * 0.1
    return p


# ----------------------------------- main -------------------------------------
if __name__ == "__main__":
    key = jax.random.PRNGKey(0)
    k_emb, k_in, k_out, k_tok = jax.random.split(key, 4)

    embed_table = jax.random.normal(k_emb, (VOCAB, EMBED_DIM), jnp.float32) * 0.1
    params_in = init_treelstm_params(k_in, EMBED_DIM, SIZE)
    params_out = init_treelstm_params(k_out, EMBED_DIM, SIZE)
    tokens = jax.random.randint(k_tok, (N_TOTAL,), 0, VOCAB, dtype=jnp.int32)
    node_ids = jnp.tile(jnp.arange(NODES_PER_TREE, dtype=jnp.int32), BATCH)

    fwd = jax.jit(tree_encoder_v2_forward)
    out = fwd(params_in, params_out, embed_table, tokens, node_ids)
    out = jax.block_until_ready(out)

    ref = tree_encoder_v2_reference(params_in, params_out, embed_table, tokens, node_ids)
    np.testing.assert_allclose(np.asarray(out[0]), np.asarray(ref[0]),
                               rtol=1e-3, atol=1e-3)
    assert out[0].shape == (BATCH, NODES_PER_TREE, CHUNK + SIZE)
    assert out[1].shape == (BATCH, NODES_PER_TREE)
    assert out[2].shape == (BATCH, NODES_PER_TREE)
    assert out[3].shape == (BATCH, NODES_PER_TREE)
    assert np.array_equal(np.asarray(out[1]), np.asarray(ref[1]))
    assert np.array_equal(np.asarray(out[3]), np.asarray(ref[3]))
    print("KERNEL_OK")
</pallas_src>

<mosaic_0001>
module attributes {stable_mosaic.version = 11 : i64} {
  func.func @_fused_tree_kernel(%arg0: i32, %arg1: memref<14x24xf32, #tpu.memory_space<vmem>>, %arg2: memref<24x64xf32, #tpu.memory_space<vmem>>, %arg3: memref<64x128xf32, #tpu.memory_space<vmem>>, %arg4: memref<1x128xf32, #tpu.memory_space<vmem>>, %arg5: memref<16x64xf32, #tpu.memory_space<vmem>>, %arg6: memref<16x64xf32, #tpu.memory_space<vmem>>, %arg7: memref<14x128xf32, #tpu.memory_space<vmem>>, %arg8: memref<14x64xf32, #tpu.memory_space<vmem>>, %arg9: memref<14x128xf32, #tpu.memory_space<vmem>>, %arg10: memref<4x32xf32, #tpu.memory_space<vmem>>) attributes {dimension_semantics = [#tpu.dimension_semantics<arbitrary>], iteration_bounds = array<i64: 1>, scalar_prefetch = 0 : i64, scratch_operands = 3 : i64, tpu.core_type = #tpu.core_type<tc>, window_params = [{pipeline_mode = #tpu.pipeline_mode<synchronous>, transform_indices = @transform_0, window_bounds = array<i64: 14, 24>}, {pipeline_mode = #tpu.pipeline_mode<synchronous>, transform_indices = @transform_1, window_bounds = array<i64: 24, 64>}, {pipeline_mode = #tpu.pipeline_mode<synchronous>, transform_indices = @transform_2, window_bounds = array<i64: 64, 128>}, {pipeline_mode = #tpu.pipeline_mode<synchronous>, transform_indices = @transform_3, window_bounds = array<i64: 1, 128>}, {pipeline_mode = #tpu.pipeline_mode<synchronous>, transform_indices = @transform_4, window_bounds = array<i64: 16, 64>}, {pipeline_mode = #tpu.pipeline_mode<synchronous>, transform_indices = @transform_5, window_bounds = array<i64: 16, 64>}, {pipeline_mode = #tpu.pipeline_mode<synchronous>, transform_indices = @transform_6, window_bounds = array<i64: 14, 128>}]} {
    %c0 = arith.constant 0 : index
    %c0_0 = arith.constant 0 : index
    %0 = vector.load %arg1[%c0, %c0_0] : memref<14x24xf32, #tpu.memory_space<vmem>>, vector<14x24xf32>
    %c0_1 = arith.constant 0 : index
    %c0_2 = arith.constant 0 : index
    %1 = vector.load %arg2[%c0_1, %c0_2] : memref<24x64xf32, #tpu.memory_space<vmem>>, vector<24x64xf32>
    %cst = arith.constant dense<0.000000e+00> : vector<14x64xf32>
    %2 = tpu.matmul %0, %1, %cst {dimension_numbers = #tpu.dot_dimension_numbers<[1], [0], [0], [1], [0, 0, 1, 1], [], []>} : vector<14x24xf32>, vector<24x64xf32>, vector<14x64xf32> -> vector<14x64xf32>
    %c0_3 = arith.constant 0 : index
    %c0_4 = arith.constant 0 : index
    %3 = vector.load %arg4[%c0_3, %c0_4] : memref<1x128xf32, #tpu.memory_space<vmem>>, vector<1x128xf32>
    %c0_5 = arith.constant 0 : index
    %c0_6 = arith.constant 0 : index
    %4 = vector.load %arg3[%c0_5, %c0_6] : memref<64x128xf32, #tpu.memory_space<vmem>>, vector<64x128xf32>
    %cst_7 = arith.constant dense<0.000000e+00> : vector<14x128xf32>
    %5 = tpu.matmul %2, %4, %cst_7 {dimension_numbers = #tpu.dot_dimension_numbers<[1], [0], [0], [1], [0, 0, 1, 1], [], []>} : vector<14x64xf32>, vector<64x128xf32>, vector<14x128xf32> -> vector<14x128xf32>
    %6 = vector.broadcast %3 : vector<1x128xf32> to vector<14x128xf32>
    %7 = arith.addf %5, %6 : vector<14x128xf32>
    %c0_8 = arith.constant 0 : index
    %c0_9 = arith.constant 0 : index
    %8 = vector.load %arg9[%c0_8, %c0_9] : memref<14x128xf32, #tpu.memory_space<vmem>>, vector<14x128xf32>
    tpu.vector_store %arg9[%c0_8, %c0_9], %7 {strides = array<i32>} : memref<14x128xf32, #tpu.memory_space<vmem>>, vector<14x128xf32>,
    %9 = math.tanh %2 : vector<14x64xf32>
    %c0_10 = arith.constant 0 : index
    %c0_11 = arith.constant 0 : index
    %10 = vector.load %arg8[%c0_10, %c0_11] : memref<14x64xf32, #tpu.memory_space<vmem>>, vector<14x64xf32>
    tpu.vector_store %arg8[%c0_10, %c0_11], %9 {strides = array<i32>} : memref<14x64xf32, #tpu.memory_space<vmem>>, vector<14x64xf32>,
    %cst_12 = arith.constant 0.000000e+00 : f32
    %11 = vector.broadcast %cst_12 : f32 to vector<14x128xf32>
    %c0_13 = arith.constant 0 : index
    %c0_14 = arith.constant 0 : index
    %12 = vector.load %arg7[%c0_13, %c0_14] : memref<14x128xf32, #tpu.memory_space<vmem>>, vector<14x128xf32>
    tpu.vector_store %arg7[%c0_13, %c0_14], %11 {strides = array<i32>} : memref<14x128xf32, #tpu.memory_space<vmem>>, vector<14x128xf32>,
    %13 = vector.extract_strided_slice %3 {offsets = [0, 48], sizes = [1, 16], strides = [1, 1]} : vector<1x128xf32> to vector<1x16xf32>
    %14 = vector.extract_strided_slice %3 {offsets = [0, 112], sizes = [1, 16], strides = [1, 1]} : vector<1x128xf32> to vector<1x16xf32>
    %c0_15 = arith.constant 0 : index
    %c0_16 = arith.constant 0 : index
    %15 = vector.load %arg5[%c0_15, %c0_16] : memref<16x64xf32, #tpu.memory_space<vmem>>, vector<16x64xf32>
    %c0_17 = arith.constant 0 : index
    %c0_18 = arith.constant 0 : index
    %16 = vector.load %arg6[%c0_17, %c0_18] : memref<16x64xf32, #tpu.memory_space<vmem>>, vector<16x64xf32>
    %c6 = arith.constant 6 : index
    %c0_19 = arith.constant 0 : index
    %17 = vector.load %arg8[%c6, %c0_19] : memref<14x64xf32, #tpu.memory_space<vmem>>, vector<4x16xf32>
    %c6_20 = arith.constant 6 : index
    %c16 = arith.constant 16 : index
    %18 = vector.load %arg8[%c6_20, %c16] : memref<14x64xf32, #tpu.memory_space<vmem>>, vector<4x16xf32>
    %c10 = arith.constant 10 : index
    %c0_21 = arith.constant 0 : index
    %19 = vector.load %arg8[%c10, %c0_21] : memref<14x64xf32, #tpu.memory_space<vmem>>, vector<4x16xf32>
    %c10_22 = arith.constant 10 : index
    %c16_23 = arith.constant 16 : index
    %20 = vector.load %arg8[%c10_22, %c16_23] : memref<14x64xf32, #tpu.memory_space<vmem>>, vector<4x16xf32>
    %c2 = arith.constant 2 : index
    %c0_24 = arith.constant 0 : index
    %21 = vector.load %arg9[%c2, %c0_24] : memref<14x128xf32, #tpu.memory_space<vmem>>, vector<4x64xf32>
    %22 = arith.addf %17, %19 : vector<4x16xf32>
    %cst_25 = arith.constant dense<0.000000e+00> : vector<4x64xf32>
    %23 = tpu.matmul %22, %15, %cst_25 {dimension_numbers = #tpu.dot_dimension_numbers<[1], [0], [0], [1], [0, 0, 1, 1], [], []>} : vector<4x16xf32>, vector<16x64xf32>, vector<4x64xf32> -> vector<4x64xf32>
    %24 = vector.extract_strided_slice %15 {offsets = [0, 16], sizes = [16, 16], strides = [1, 1]} : vector<16x64xf32> to vector<16x16xf32>
    %cst_26 = arith.constant dense<0.000000e+00> : vector<4x16xf32>
    %25 = tpu.matmul %17, %24, %cst_26 {dimension_numbers = #tpu.dot_dimension_numbers<[1], [0], [0], [1], [0, 0, 1, 1], [], []>} : vector<4x16xf32>, vector<16x16xf32>, vector<4x16xf32> -> vector<4x16xf32>
    %cst_27 = arith.constant dense<0.000000e+00> : vector<4x16xf32>
    %26 = tpu.matmul %19, %24, %cst_27 {dimension_numbers = #tpu.dot_dimension_numbers<[1], [0], [0], [1], [0, 0, 1, 1], [], []>} : vector<4x16xf32>, vector<16x16xf32>, vector<4x16xf32> -> vector<4x16xf32>
    %27 = vector.extract_strided_slice %21 {offsets = [0, 0], sizes = [4, 16], strides = [1, 1]} : vector<4x64xf32> to vector<4x16xf32>
    %28 = vector.extract_strided_slice %23 {offsets = [0, 0], sizes = [4, 16], strides = [1, 1]} : vector<4x64xf32> to vector<4x16xf32>
    %29 = arith.addf %27, %28 : vector<4x16xf32>
    %30 = arith.negf %29 : vector<4x16xf32>
    %31 = math.exp %30 : vector<4x16xf32>
    %cst_28 = arith.constant 1.000000e+00 : f32
    %32 = vector.broadcast %cst_28 : f32 to vector<4x16xf32>
    %33 = arith.addf %32, %31 : vector<4x16xf32>
    %34 = arith.divf %32, %33 : vector<4x16xf32>
    %35 = vector.extract_strided_slice %21 {offsets = [0, 16], sizes = [4, 16], strides = [1, 1]} : vector<4x64xf32> to vector<4x16xf32>
    %36 = arith.addf %35, %25 : vector<4x16xf32>
    %37 = arith.negf %36 : vector<4x16xf32>
    %38 = math.exp %37 : vector<4x16xf32>
    %cst_29 = arith.constant 1.000000e+00 : f32
    %39 = vector.broadcast %cst_29 : f32 to vector<4x16xf32>
    %40 = arith.addf %39, %38 : vector<4x16xf32>
    %41 = arith.divf %39, %40 : vector<4x16xf32>
    %42 = vector.extract_strided_slice %21 {offsets = [0, 16], sizes = [4, 16], strides = [1, 1]} : vector<4x64xf32> to vector<4x16xf32>
    %43 = arith.addf %42, %26 : vector<4x16xf32>
    %44 = arith.negf %43 : vector<4x16xf32>
    %45 = math.exp %44 : vector<4x16xf32>
    %cst_30 = arith.constant 1.000000e+00 : f32
    %46 = vector.broadcast %cst_30 : f32 to vector<4x16xf32>
    %47 = arith.addf %46, %45 : vector<4x16xf32>
    %48 = arith.divf %46, %47 : vector<4x16xf32>
    %49 = vector.extract_strided_slice %21 {offsets = [0, 32], sizes = [4, 16], strides = [1, 1]} : vector<4x64xf32> to vector<4x16xf32>
    %50 = vector.extract_strided_slice %23 {offsets = [0, 32], sizes = [4, 16], strides = [1, 1]} : vector<4x64xf32> to vector<4x16xf32>
    %51 = arith.addf %49, %50 : vector<4x16xf32>
    %52 = arith.negf %51 : vector<4x16xf32>
    %53 = math.exp %52 : vector<4x16xf32>
    %cst_31 = arith.constant 1.000000e+00 : f32
    %54 = vector.broadcast %cst_31 : f32 to vector<4x16xf32>
    %55 = arith.addf %54, %53 : vector<4x16xf32>
    %56 = arith.divf %54, %55 : vector<4x16xf32>
    %57 = vector.extract_strided_slice %23 {offsets = [0, 48], sizes = [4, 16], strides = [1, 1]} : vector<4x64xf32> to vector<4x16xf32>
    %58 = vector.extract_strided_slice %21 {offsets = [0, 48], sizes = [4, 16], strides = [1, 1]} : vector<4x64xf32> to vector<4x16xf32>
    %59 = arith.addf %58, %57 : vector<4x16xf32>
    %60 = math.tanh %59 : vector<4x16xf32>
    %61 = arith.mulf %34, %60 : vector<4x16xf32>
    %62 = arith.mulf %41, %18 : vector<4x16xf32>
    %63 = arith.addf %61, %62 : vector<4x16xf32>
    %64 = arith.mulf %48, %20 : vector<4x16xf32>
    %65 = arith.addf %63, %64 : vector<4x16xf32>
    %66 = math.tanh %65 : vector<4x16xf32>
    %67 = arith.mulf %56, %66 : vector<4x16xf32>
    %c2_32 = arith.constant 2 : index
    %c0_33 = arith.constant 0 : index
    %68 = vector.load %arg8[%c2_32, %c0_33] : memref<14x64xf32, #tpu.memory_space<vmem>>, vector<4x16xf32>
    tpu.vector_store %arg8[%c2_32, %c0_33], %67 {strides = array<i32>} : memref<14x64xf32, #tpu.memory_space<vmem>>, vector<4x16xf32>,
    %c2_34 = arith.constant 2 : index
    %c16_35 = arith.constant 16 : index
    %69 = vector.load %arg8[%c2_34, %c16_35] : memref<14x64xf32, #tpu.memory_space<vmem>>, vector<4x16xf32>
    tpu.vector_store %arg8[%c2_34, %c16_35], %65 {strides = array<i32>} : memref<14x64xf32, #tpu.memory_space<vmem>>, vector<4x16xf32>,
    %70 = vector.broadcast %13 : vector<1x16xf32> to vector<4x16xf32>
    %71 = arith.addf %57, %70 : vector<4x16xf32>
    %72 = math.tanh %71 : vector<4x16xf32>
    %c2_36 = arith.constant 2 : index
    %c0_37 = arith.constant 0 : index
    %73 = vector.load %arg7[%c2_36, %c0_37] : memref<14x128xf32, #tpu.memory_space<vmem>>, vector<4x16xf32>
    tpu.vector_store %arg7[%c2_36, %c0_37], %72 {strides = array<i32>} : memref<14x128xf32, #tpu.memory_space<vmem>>, vector<4x16xf32>,
    %c2_38 = arith.constant 2 : index
    %c0_39 = arith.constant 0 : index
    %74 = vector.load %arg8[%c2_38, %c0_39] : memref<14x64xf32, #tpu.memory_space<vmem>>, vector<2x16xf32>
    %c2_40 = arith.constant 2 : index
    %c16_41 = arith.constant 16 : index
    %75 = vector.load %arg8[%c2_40, %c16_41] : memref<14x64xf32, #tpu.memory_space<vmem>>, vector<2x16xf32>
    %c4 = arith.constant 4 : index
    %c0_42 = arith.constant 0 : index
    %76 = vector.load %arg8[%c4, %c0_42] : memref<14x64xf32, #tpu.memory_space<vmem>>, vector<2x16xf32>
    %c4_43 = arith.constant 4 : index
    %c16_44 = arith.constant 16 : index
    %77 = vector.load %arg8[%c4_43, %c16_44] : memref<14x64xf32, #tpu.memory_space<vmem>>, vector<2x16xf32>
    %c0_45 = arith.constant 0 : index
    %c0_46 = arith.constant 0 : index
    %78 = vector.load %arg9[%c0_45, %c0_46] : memref<14x128xf32, #tpu.memory_space<vmem>>, vector<2x64xf32>
    %79 = arith.addf %74, %76 : vector<2x16xf32>
    %cst_47 = arith.constant dense<0.000000e+00> : vector<2x64xf32>
    %80 = tpu.matmul %79, %15, %cst_47 {dimension_numbers = #tpu.dot_dimension_numbers<[1], [0], [0], [1], [0, 0, 1, 1], [], []>} : vector<2x16xf32>, vector<16x64xf32>, vector<2x64xf32> -> vector<2x64xf32>
    %81 = vector.extract_strided_slice %15 {offsets = [0, 16], sizes = [16, 16], strides = [1, 1]} : vector<16x64xf32> to vector<16x16xf32>
    %cst_48 = arith.constant dense<0.000000e+00> : vector<2x16xf32>
    %82 = tpu.matmul %74, %81, %cst_48 {dimension_numbers = #tpu.dot_dimension_numbers<[1], [0], [0], [1], [0, 0, 1, 1], [], []>} : vector<2x16xf32>, vector<16x16xf32>, vector<2x16xf32> -> vector<2x16xf32>
    %cst_49 = arith.constant dense<0.000000e+00> : vector<2x16xf32>
    %83 = tpu.matmul %76, %81, %cst_49 {dimension_numbers = #tpu.dot_dimension_numbers<[1], [0], [0], [1], [0, 0, 1, 1], [], []>} : vector<2x16xf32>, vector<16x16xf32>, vector<2x16xf32> -> vector<2x16xf32>
    %84 = vector.extract_strided_slice %78 {offsets = [0, 0], sizes = [2, 16], strides = [1, 1]} : vector<2x64xf32> to vector<2x16xf32>
    %85 = vector.extract_strided_slice %80 {offsets = [0, 0], sizes = [2, 16], strides = [1, 1]} : vector<2x64xf32> to vector<2x16xf32>
    %86 = arith.addf %84, %85 : vector<2x16xf32>
    %87 = arith.negf %86 : vector<2x16xf32>
    %88 = math.exp %87 : vector<2x16xf32>
    %cst_50 = arith.constant 1.000000e+00 : f32
    %89 = vector.broadcast %cst_50 : f32 to vector<2x16xf32>
    %90 = arith.addf %89, %88 : vector<2x16xf32>
    %91 = arith.divf %89, %90 : vector<2x16xf32>
    %92 = vector.extract_strided_slice %78 {offsets = [0, 16], sizes = [2, 16], strides = [1, 1]} : vector<2x64xf32> to vector<2x16xf32>
    %93 = arith.addf %92, %82 : vector<2x16xf32>
    %94 = arith.negf %93 : vector<2x16xf32>
    %95 = math.exp %94 : vector<2x16xf32>
    %cst_51 = arith.constant 1.000000e+00 : f32
    %96 = vector.broadcast %cst_51 : f32 to vector<2x16xf32>
    %97 = arith.addf %96, %95 : vector<2x16xf32>
    %98 = arith.divf %96, %97 : vector<2x16xf32>
    %99 = vector.extract_strided_slice %78 {offsets = [0, 16], sizes = [2, 16], strides = [1, 1]} : vector<2x64xf32> to vector<2x16xf32>
    %100 = arith.addf %99, %83 : vector<2x16xf32>
    %101 = arith.negf %100 : vector<2x16xf32>
    %102 = math.exp %101 : vector<2x16xf32>
    %cst_52 = arith.constant 1.000000e+00 : f32
    %103 = vector.broadcast %cst_52 : f32 to vector<2x16xf32>
    %104 = arith.addf %103, %102 : vector<2x16xf32>
    %105 = arith.divf %103, %104 : vector<2x16xf32>
    %106 = vector.extract_strided_slice %78 {offsets = [0, 32], sizes = [2, 16], strides = [1, 1]} : vector<2x64xf32> to vector<2x16xf32>
    %107 = vector.extract_strided_slice %80 {offsets = [0, 32], sizes = [2, 16], strides = [1, 1]} : vector<2x64xf32> to vector<2x16xf32>
    %108 = arith.addf %106, %107 : vector<2x16xf32>
    %109 = arith.negf %108 : vector<2x16xf32>
    %110 = math.exp %109 : vector<2x16xf32>
    %cst_53 = arith.constant 1.000000e+00 : f32
    %111 = vector.broadcast %cst_53 : f32 to vector<2x16xf32>
    %112 = arith.addf %111, %110 : vector<2x16xf32>
    %113 = arith.divf %111, %112 : vector<2x16xf32>
    %114 = vector.extract_strided_slice %80 {offsets = [0, 48], sizes = [2, 16], strides = [1, 1]} : vector<2x64xf32> to vector<2x16xf32>
    %115 = vector.extract_strided_slice %78 {offsets = [0, 48], sizes = [2, 16], strides = [1, 1]} : vector<2x64xf32> to vector<2x16xf32>
    %116 = arith.addf %115, %114 : vector<2x16xf32>
    %117 = math.tanh %116 : vector<2x16xf32>
    %118 = arith.mulf %91, %117 : vector<2x16xf32>
    %119 = arith.mulf %98, %75 : vector<2x16xf32>
    %120 = arith.addf %118, %119 : vector<2x16xf32>
    %121 = arith.mulf %105, %77 : vector<2x16xf32>
    %122 = arith.addf %120, %121 : vector<2x16xf32>
    %123 = math.tanh %122 : vector<2x16xf32>
    %124 = arith.mulf %113, %123 : vector<2x16xf32>
    %c0_54 = arith.constant 0 : index
    %c0_55 = arith.constant 0 : index
    %125 = vector.load %arg8[%c0_54, %c0_55] : memref<14x64xf32, #tpu.memory_space<vmem>>, vector<2x16xf32>
    tpu.vector_store %arg8[%c0_54, %c0_55], %124 {strides = array<i32>} : memref<14x64xf32, #tpu.memory_space<vmem>>, vector<2x16xf32>,
    %c0_56 = arith.constant 0 : index
    %c16_57 = arith.constant 16 : index
    %126 = vector.load %arg8[%c0_56, %c16_57] : memref<14x64xf32, #tpu.memory_space<vmem>>, vector<2x16xf32>
    tpu.vector_store %arg8[%c0_56, %c16_57], %122 {strides = array<i32>} : memref<14x64xf32, #tpu.memory_space<vmem>>, vector<2x16xf32>,
    %127 = vector.broadcast %13 : vector<1x16xf32> to vector<2x16xf32>
    %128 = arith.addf %114, %127 : vector<2x16xf32>
    %129 = math.tanh %128 : vector<2x16xf32>
    %c0_58 = arith.constant 0 : index
    %c0_59 = arith.constant 0 : index
    %130 = vector.load %arg7[%c0_58, %c0_59] : memref<14x128xf32, #tpu.memory_space<vmem>>, vector<2x16xf32>
    tpu.vector_store %arg7[%c0_58, %c0_59], %129 {strides = array<i32>} : memref<14x128xf32, #tpu.memory_space<vmem>>, vector<2x16xf32>,
    %c6_60 = arith.constant 6 : index
    %c32 = arith.constant 32 : index
    %131 = vector.load %arg8[%c6_60, %c32] : memref<14x64xf32, #tpu.memory_space<vmem>>, vector<4x16xf32>
    %c6_61 = arith.constant 6 : index
    %c48 = arith.constant 48 : index
    %132 = vector.load %arg8[%c6_61, %c48] : memref<14x64xf32, #tpu.memory_space<vmem>>, vector<4x16xf32>
    %c10_62 = arith.constant 10 : index
    %c32_63 = arith.constant 32 : index
    %133 = vector.load %arg8[%c10_62, %c32_63] : memref<14x64xf32, #tpu.memory_space<vmem>>, vector<4x16xf32>
    %c10_64 = arith.constant 10 : index
    %c48_65 = arith.constant 48 : index
    %134 = vector.load %arg8[%c10_64, %c48_65] : memref<14x64xf32, #tpu.memory_space<vmem>>, vector<4x16xf32>
    %c2_66 = arith.constant 2 : index
    %c64 = arith.constant 64 : index
    %135 = vector.load %arg9[%c2_66, %c64] : memref<14x128xf32, #tpu.memory_space<vmem>>, vector<4x64xf32>
    %136 = arith.addf %131, %133 : vector<4x16xf32>
    %cst_67 = arith.constant dense<0.000000e+00> : vector<4x64xf32>
    %137 = tpu.matmul %136, %16, %cst_67 {dimension_numbers = #tpu.dot_dimension_numbers<[1], [0], [0], [1], [0, 0, 1, 1], [], []>} : vector<4x16xf32>, vector<16x64xf32>, vector<4x64xf32> -> vector<4x64xf32>
    %138 = vector.extract_strided_slice %16 {offsets = [0, 16], sizes = [16, 16], strides = [1, 1]} : vector<16x64xf32> to vector<16x16xf32>
    %cst_68 = arith.constant dense<0.000000e+00> : vector<4x16xf32>
    %139 = tpu.matmul %131, %138, %cst_68 {dimension_numbers = #tpu.dot_dimension_numbers<[1], [0], [0], [1], [0, 0, 1, 1], [], []>} : vector<4x16xf32>, vector<16x16xf32>, vector<4x16xf32> -> vector<4x16xf32>
    %cst_69 = arith.constant dense<0.000000e+00> : vector<4x16xf32>
    %140 = tpu.matmul %133, %138, %cst_69 {dimension_numbers = #tpu.dot_dimension_numbers<[1], [0], [0], [1], [0, 0, 1, 1], [], []>} : vector<4x16xf32>, vector<16x16xf32>, vector<4x16xf32> -> vector<4x16xf32>
    %141 = vector.extract_strided_slice %135 {offsets = [0, 0], sizes = [4, 16], strides = [1, 1]} : vector<4x64xf32> to vector<4x16xf32>
    %142 = vector.extract_strided_slice %137 {offsets = [0, 0], sizes = [4, 16], strides = [1, 1]} : vector<4x64xf32> to vector<4x16xf32>
    %143 = arith.addf %141, %142 : vector<4x16xf32>
    %144 = arith.negf %143 : vector<4x16xf32>
    %145 = math.exp %144 : vector<4x16xf32>
    %cst_70 = arith.constant 1.000000e+00 : f32
    %146 = vector.broadcast %cst_70 : f32 to vector<4x16xf32>
    %147 = arith.addf %146, %145 : vector<4x16xf32>
    %148 = arith.divf %146, %147 : vector<4x16xf32>
    %149 = vector.extract_strided_slice %135 {offsets = [0, 16], sizes = [4, 16], strides = [1, 1]} : vector<4x64xf32> to vector<4x16xf32>
    %150 = arith.addf %149, %139 : vector<4x16xf32>
    %151 = arith.negf %150 : vector<4x16xf32>
    %152 = math.exp %151 : vector<4x16xf32>
    %cst_71 = arith.constant 1.000000e+00 : f32
    %153 = vector.broadcast %cst_71 : f32 to vector<4x16xf32>
    %154 = arith.addf %153, %152 : vector<4x16xf32>
    %155 = arith.divf %153, %154 : vector<4x16xf32>
    %156 = vector.extract_strided_slice %135 {offsets = [0, 16], sizes = [4, 16], strides = [1, 1]} : vector<4x64xf32> to vector<4x16xf32>
    %157 = arith.addf %156, %140 : vector<4x16xf32>
    %158 = arith.negf %157 : vector<4x16xf32>
    %159 = math.exp %158 : vector<4x16xf32>
    %cst_72 = arith.constant 1.000000e+00 : f32
    %160 = vector.broadcast %cst_72 : f32 to vector<4x16xf32>
    %161 = arith.addf %160, %159 : vector<4x16xf32>
    %162 = arith.divf %160, %161 : vector<4x16xf32>
    %163 = vector.extract_strided_slice %135 {offsets = [0, 32], sizes = [4, 16], strides = [1, 1]} : vector<4x64xf32> to vector<4x16xf32>
    %164 = vector.extract_strided_slice %137 {offsets = [0, 32], sizes = [4, 16], strides = [1, 1]} : vector<4x64xf32> to vector<4x16xf32>
    %165 = arith.addf %163, %164 : vector<4x16xf32>
    %166 = arith.negf %165 : vector<4x16xf32>
    %167 = math.exp %166 : vector<4x16xf32>
    %cst_73 = arith.constant 1.000000e+00 : f32
    %168 = vector.broadcast %cst_73 : f32 to vector<4x16xf32>
    %169 = arith.addf %168, %167 : vector<4x16xf32>
    %170 = arith.divf %168, %169 : vector<4x16xf32>
    %171 = vector.extract_strided_slice %137 {offsets = [0, 48], sizes = [4, 16], strides = [1, 1]} : vector<4x64xf32> to vector<4x16xf32>
    %172 = vector.extract_strided_slice %135 {offsets = [0, 48], sizes = [4, 16], strides = [1, 1]} : vector<4x64xf32> to vector<4x16xf32>
    %173 = arith.addf %172, %171 : vector<4x16xf32>
    %174 = math.tanh %173 : vector<4x16xf32>
    %175 = arith.mulf %148, %174 : vector<4x16xf32>
    %176 = arith.mulf %155, %132 : vector<4x16xf32>
    %177 = arith.addf %175, %176 : vector<4x16xf32>
    %178 = arith.mulf %162, %134 : vector<4x16xf32>
    %179 = arith.addf %177, %178 : vector<4x16xf32>
    %180 = math.tanh %179 : vector<4x16xf32>
    %181 = arith.mulf %170, %180 : vector<4x16xf32>
    %c2_74 = arith.constant 2 : index
    %c32_75 = arith.constant 32 : index
    %182 = vector.load %arg8[%c2_74, %c32_75] : memref<14x64xf32, #tpu.memory_space<vmem>>, vector<4x16xf32>
    tpu.vector_store %arg8[%c2_74, %c32_75], %181 {strides = array<i32>} : memref<14x64xf32, #tpu.memory_space<vmem>>, vector<4x16xf32>,
    %c2_76 = arith.constant 2 : index
    %c48_77 = arith.constant 48 : index
    %183 = vector.load %arg8[%c2_76, %c48_77] : memref<14x64xf32, #tpu.memory_space<vmem>>, vector<4x16xf32>
    tpu.vector_store %arg8[%c2_76, %c48_77], %179 {strides = array<i32>} : memref<14x64xf32, #tpu.memory_space<vmem>>, vector<4x16xf32>,
    %184 = vector.broadcast %14 : vector<1x16xf32> to vector<4x16xf32>
    %185 = arith.addf %171, %184 : vector<4x16xf32>
    %186 = math.tanh %185 : vector<4x16xf32>
    %c2_78 = arith.constant 2 : index
    %c16_79 = arith.constant 16 : index
    %187 = vector.load %arg7[%c2_78, %c16_79] : memref<14x128xf32, #tpu.memory_space<vmem>>, vector<4x16xf32>
    tpu.vector_store %arg7[%c2_78, %c16_79], %186 {strides = array<i32>} : memref<14x128xf32, #tpu.memory_space<vmem>>, vector<4x16xf32>,
    %c2_80 = arith.constant 2 : index
    %c32_81 = arith.constant 32 : index
    %188 = vector.load %arg8[%c2_80, %c32_81] : memref<14x64xf32, #tpu.memory_space<vmem>>, vector<2x16xf32>
    %c2_82 = arith.constant 2 : index
    %c48_83 = arith.constant 48 : index
    %189 = vector.load %arg8[%c2_82, %c48_83] : memref<14x64xf32, #tpu.memory_space<vmem>>, vector<2x16xf32>
    %c4_84 = arith.constant 4 : index
    %c32_85 = arith.constant 32 : index
    %190 = vector.load %arg8[%c4_84, %c32_85] : memref<14x64xf32, #tpu.memory_space<vmem>>, vector<2x16xf32>
    %c4_86 = arith.constant 4 : index
    %c48_87 = arith.constant 48 : index
    %191 = vector.load %arg8[%c4_86, %c48_87] : memref<14x64xf32, #tpu.memory_space<vmem>>, vector<2x16xf32>
    %c0_88 = arith.constant 0 : index
    %c64_89 = arith.constant 64 : index
    %192 = vector.load %arg9[%c0_88, %c64_89] : memref<14x128xf32, #tpu.memory_space<vmem>>, vector<2x64xf32>
    %193 = arith.addf %188, %190 : vector<2x16xf32>
    %cst_90 = arith.constant dense<0.000000e+00> : vector<2x64xf32>
    %194 = tpu.matmul %193, %16, %cst_90 {dimension_numbers = #tpu.dot_dimension_numbers<[1], [0], [0], [1], [0, 0, 1, 1], [], []>} : vector<2x16xf32>, vector<16x64xf32>, vector<2x64xf32> -> vector<2x64xf32>
    %195 = vector.extract_strided_slice %16 {offsets = [0, 16], sizes = [16, 16], strides = [1, 1]} : vector<16x64xf32> to vector<16x16xf32>
    %cst_91 = arith.constant dense<0.000000e+00> : vector<2x16xf32>
    %196 = tpu.matmul %188, %195, %cst_91 {dimension_numbers = #tpu.dot_dimension_numbers<[1], [0], [0], [1], [0, 0, 1, 1], [], []>} : vector<2x16xf32>, vector<16x16xf32>, vector<2x16xf32> -> vector<2x16xf32>
    %cst_92 = arith.constant dense<0.000000e+00> : vector<2x16xf32>
    %197 = tpu.matmul %190, %195, %cst_92 {dimension_numbers = #tpu.dot_dimension_numbers<[1], [0], [0], [1], [0, 0, 1, 1], [], []>} : vector<2x16xf32>, vector<16x16xf32>, vector<2x16xf32> -> vector<2x16xf32>
    %198 = vector.extract_strided_slice %192 {offsets = [0, 0], sizes = [2, 16], strides = [1, 1]} : vector<2x64xf32> to vector<2x16xf32>
    %199 = vector.extract_strided_slice %194 {offsets = [0, 0], sizes = [2, 16], strides = [1, 1]} : vector<2x64xf32> to vector<2x16xf32>
    %200 = arith.addf %198, %199 : vector<2x16xf32>
    %201 = arith.negf %200 : vector<2x16xf32>
    %202 = math.exp %201 : vector<2x16xf32>
    %cst_93 = arith.constant 1.000000e+00 : f32
    %203 = vector.broadcast %cst_93 : f32 to vector<2x16xf32>
    %204 = arith.addf %203, %202 : vector<2x16xf32>
    %205 = arith.divf %203, %204 : vector<2x16xf32>
    %206 = vector.extract_strided_slice %192 {offsets = [0, 16], sizes = [2, 16], strides = [1, 1]} : vector<2x64xf32> to vector<2x16xf32>
    %207 = arith.addf %206, %196 : vector<2x16xf32>
    %208 = arith.negf %207 : vector<2x16xf32>
    %209 = math.exp %208 : vector<2x16xf32>
    %cst_94 = arith.constant 1.000000e+00 : f32
    %210 = vector.broadcast %cst_94 : f32 to vector<2x16xf32>
    %211 = arith.addf %210, %209 : vector<2x16xf32>
    %212 = arith.divf %210, %211 : vector<2x16xf32>
    %213 = vector.extract_strided_slice %192 {offsets = [0, 16], sizes = [2, 16], strides = [1, 1]} : vector<2x64xf32> to vector<2x16xf32>
    %214 = arith.addf %213, %197 : vector<2x16xf32>
    %215 = arith.negf %214 : vector<2x16xf32>
    %216 = math.exp %215 : vector<2x16xf32>
    %cst_95 = arith.constant 1.000000e+00 : f32
    %217 = vector.broadcast %cst_95 : f32 to vector<2x16xf32>
    %218 = arith.addf %217, %216 : vector<2x16xf32>
    %219 = arith.divf %217, %218 : vector<2x16xf32>
    %220 = vector.extract_strided_slice %192 {offsets = [0, 32], sizes = [2, 16], strides = [1, 1]} : vector<2x64xf32> to vector<2x16xf32>
    %221 = vector.extract_strided_slice %194 {offsets = [0, 32], sizes = [2, 16], strides = [1, 1]} : vector<2x64xf32> to vector<2x16xf32>
    %222 = arith.addf %220, %221 : vector<2x16xf32>
    %223 = arith.negf %222 : vector<2x16xf32>
    %224 = math.exp %223 : vector<2x16xf32>
    %cst_96 = arith.constant 1.000000e+00 : f32
    %225 = vector.broadcast %cst_96 : f32 to vector<2x16xf32>
    %226 = arith.addf %225, %224 : vector<2x16xf32>
    %227 = arith.divf %225, %226 : vector<2x16xf32>
    %228 = vector.extract_strided_slice %194 {offsets = [0, 48], sizes = [2, 16], strides = [1, 1]} : vector<2x64xf32> to vector<2x16xf32>
    %229 = vector.extract_strided_slice %192 {offsets = [0, 48], sizes = [2, 16], strides = [1, 1]} : vector<2x64xf32> to vector<2x16xf32>
    %230 = arith.addf %229, %228 : vector<2x16xf32>
    %231 = math.tanh %230 : vector<2x16xf32>
    %232 = arith.mulf %205, %231 : vector<2x16xf32>
    %233 = arith.mulf %212, %189 : vector<2x16xf32>
    %234 = arith.addf %232, %233 : vector<2x16xf32>
    %235 = arith.mulf %219, %191 : vector<2x16xf32>
    %236 = arith.addf %234, %235 : vector<2x16xf32>
    %237 = math.tanh %236 : vector<2x16xf32>
    %238 = arith.mulf %227, %237 : vector<2x16xf32>
    %c0_97 = arith.constant 0 : index
    %c32_98 = arith.constant 32 : index
    %239 = vector.load %arg8[%c0_97, %c32_98] : memref<14x64xf32, #tpu.memory_space<vmem>>, vector<2x16xf32>
    tpu.vector_store %arg8[%c0_97, %c32_98], %238 {strides = array<i32>} : memref<14x64xf32, #tpu.memory_space<vmem>>, vector<2x16xf32>,
    %c0_99 = arith.constant 0 : index
    %c48_100 = arith.constant 48 : index
    %240 = vector.load %arg8[%c0_99, %c48_100] : memref<14x64xf32, #tpu.memory_space<vmem>>, vector<2x16xf32>
    tpu.vector_store %arg8[%c0_99, %c48_100], %236 {strides = array<i32>} : memref<14x64xf32, #tpu.memory_space<vmem>>, vector<2x16xf32>,
    %241 = vector.broadcast %14 : vector<1x16xf32> to vector<2x16xf32>
    %242 = arith.addf %228, %241 : vector<2x16xf32>
    %243 = math.tanh %242 : vector<2x16xf32>
    %c0_101 = arith.constant 0 : index
    %c16_102 = arith.constant 16 : index
    %244 = vector.load %arg7[%c0_101, %c16_102] : memref<14x128xf32, #tpu.memory_space<vmem>>, vector<2x16xf32>
    tpu.vector_store %arg7[%c0_101, %c16_102], %243 {strides = array<i32>} : memref<14x128xf32, #tpu.memory_space<vmem>>, vector<2x16xf32>,
    %cst_103 = arith.constant 0.000000e+00 : f32
    %245 = vector.broadcast %cst_103 : f32 to vector<2x16xf32>
    %c2_104 = arith.constant 2 : index
    %c32_105 = arith.constant 32 : index
    %246 = vector.load %arg8[%c2_104, %c32_105] : memref<14x64xf32, #tpu.memory_space<vmem>>, vector<2x16xf32>
    %c2_106 = arith.constant 2 : index
    %c48_107 = arith.constant 48 : index
    %247 = vector.load %arg8[%c2_106, %c48_107] : memref<14x64xf32, #tpu.memory_space<vmem>>, vector<2x16xf32>
    %c4_108 = arith.constant 4 : index
    %c32_109 = arith.constant 32 : index
    %248 = vector.load %arg8[%c4_108, %c32_109] : memref<14x64xf32, #tpu.memory_space<vmem>>, vector<2x16xf32>
    %c4_110 = arith.constant 4 : index
    %c48_111 = arith.constant 48 : index
    %249 = vector.load %arg8[%c4_110, %c48_111] : memref<14x64xf32, #tpu.memory_space<vmem>>, vector<2x16xf32>
    %c0_112 = arith.constant 0 : index
    %c64_113 = arith.constant 64 : index
    %250 = vector.load %arg9[%c0_112, %c64_113] : memref<14x128xf32, #tpu.memory_space<vmem>>, vector<2x64xf32>
    %cst_114 = arith.constant dense<0.000000e+00> : vector<2x64xf32>
    %251 = tpu.matmul %246, %16, %cst_114 {dimension_numbers = #tpu.dot_dimension_numbers<[1], [0], [0], [1], [0, 0, 1, 1], [], []>} : vector<2x16xf32>, vector<16x64xf32>, vector<2x64xf32> -> vector<2x64xf32>
    %cst_115 = arith.constant dense<0.000000e+00> : vector<2x64xf32>
    %252 = tpu.matmul %248, %16, %cst_115 {dimension_numbers = #tpu.dot_dimension_numbers<[1], [0], [0], [1], [0, 0, 1, 1], [], []>} : vector<2x16xf32>, vector<16x64xf32>, vector<2x64xf32> -> vector<2x64xf32>
    %cst_116 = arith.constant dense<0.000000e+00> : vector<2x64xf32>
    %253 = tpu.matmul %245, %16, %cst_116 {dimension_numbers = #tpu.dot_dimension_numbers<[1], [0], [0], [1], [0, 0, 1, 1], [], []>} : vector<2x16xf32>, vector<16x64xf32>, vector<2x64xf32> -> vector<2x64xf32>
    %254 = arith.addf %252, %253 : vector<2x64xf32>
    %255 = arith.addf %251, %253 : vector<2x64xf32>
    %256 = vector.extract_strided_slice %250 {offsets = [0, 16], sizes = [2, 16], strides = [1, 1]} : vector<2x64xf32> to vector<2x16xf32>
    %257 = vector.extract_strided_slice %251 {offsets = [0, 16], sizes = [2, 16], strides = [1, 1]} : vector<2x64xf32> to vector<2x16xf32>
    %258 = arith.addf %256, %257 : vector<2x16xf32>
    %259 = arith.negf %258 : vector<2x16xf32>
    %260 = math.exp %259 : vector<2x16xf32>
    %cst_117 = arith.constant 1.000000e+00 : f32
    %261 = vector.broadcast %cst_117 : f32 to vector<2x16xf32>
    %262 = arith.addf %261, %260 : vector<2x16xf32>
    %263 = arith.divf %261, %262 : vector<2x16xf32>
    %264 = arith.mulf %263, %247 : vector<2x16xf32>
    %265 = vector.extract_strided_slice %252 {offsets = [0, 16], sizes = [2, 16], strides = [1, 1]} : vector<2x64xf32> to vector<2x16xf32>
    %266 = arith.addf %256, %265 : vector<2x16xf32>
    %267 = arith.negf %266 : vector<2x16xf32>
    %268 = math.exp %267 : vector<2x16xf32>
    %cst_118 = arith.constant 1.000000e+00 : f32
    %269 = vector.broadcast %cst_118 : f32 to vector<2x16xf32>
    %270 = arith.addf %269, %268 : vector<2x16xf32>
    %271 = arith.divf %269, %270 : vector<2x16xf32>
    %272 = arith.mulf %271, %249 : vector<2x16xf32>
    %273 = vector.extract_strided_slice %253 {offsets = [0, 16], sizes = [2, 16], strides = [1, 1]} : vector<2x64xf32> to vector<2x16xf32>
    %274 = arith.addf %256, %273 : vector<2x16xf32>
    %275 = arith.negf %274 : vector<2x16xf32>
    %276 = math.exp %275 : vector<2x16xf32>
    %cst_119 = arith.constant 1.000000e+00 : f32
    %277 = vector.broadcast %cst_119 : f32 to vector<2x16xf32>
    %278 = arith.addf %277, %276 : vector<2x16xf32>
    %279 = arith.divf %277, %278 : vector<2x16xf32>
    %280 = arith.mulf %279, %245 : vector<2x16xf32>
    %281 = vector.extract_strided_slice %250 {offsets = [0, 0], sizes = [2, 16], strides = [1, 1]} : vector<2x64xf32> to vector<2x16xf32>
    %282 = vector.extract_strided_slice %254 {offsets = [0, 0], sizes = [2, 16], strides = [1, 1]} : vector<2x64xf32> to vector<2x16xf32>
    %283 = arith.addf %281, %282 : vector<2x16xf32>
    %284 = arith.negf %283 : vector<2x16xf32>
    %285 = math.exp %284 : vector<2x16xf32>
    %cst_120 = arith.constant 1.000000e+00 : f32
    %286 = vector.broadcast %cst_120 : f32 to vector<2x16xf32>
    %287 = arith.addf %286, %285 : vector<2x16xf32>
    %288 = arith.divf %286, %287 : vector<2x16xf32>
    %289 = vector.extract_strided_slice %250 {offsets = [0, 32], sizes = [2, 16], strides = [1, 1]} : vector<2x64xf32> to vector<2x16xf32>
    %290 = vector.extract_strided_slice %254 {offsets = [0, 32], sizes = [2, 16], strides = [1, 1]} : vector<2x64xf32> to vector<2x16xf32>
    %291 = arith.addf %289, %290 : vector<2x16xf32>
    %292 = arith.negf %291 : vector<2x16xf32>
    %293 = math.exp %292 : vector<2x16xf32>
    %cst_121 = arith.constant 1.000000e+00 : f32
    %294 = vector.broadcast %cst_121 : f32 to vector<2x16xf32>
    %295 = arith.addf %294, %293 : vector<2x16xf32>
    %296 = arith.divf %294, %295 : vector<2x16xf32>
    %297 = vector.extract_strided_slice %250 {offsets = [0, 48], sizes = [2, 16], strides = [1, 1]} : vector<2x64xf32> to vector<2x16xf32>
    %298 = vector.extract_strided_slice %254 {offsets = [0, 48], sizes = [2, 16], strides = [1, 1]} : vector<2x64xf32> to vector<2x16xf32>
    %299 = arith.addf %297, %298 : vector<2x16xf32>
    %300 = math.tanh %299 : vector<2x16xf32>
    %301 = arith.mulf %288, %300 : vector<2x16xf32>
    %302 = arith.addf %301, %272 : vector<2x16xf32>
    %303 = arith.addf %302, %280 : vector<2x16xf32>
    %304 = math.tanh %303 : vector<2x16xf32>
    %305 = arith.mulf %296, %304 : vector<2x16xf32>
    %306 = vector.extract_strided_slice %250 {offsets = [0, 0], sizes = [2, 16], strides = [1, 1]} : vector<2x64xf32> to vector<2x16xf32>
    %307 = vector.extract_strided_slice %255 {offsets = [0, 0], sizes = [2, 16], strides = [1, 1]} : vector<2x64xf32> to vector<2x16xf32>
    %308 = arith.addf %306, %307 : vector<2x16xf32>
    %309 = arith.negf %308 : vector<2x16xf32>
    %310 = math.exp %309 : vector<2x16xf32>
    %cst_122 = arith.constant 1.000000e+00 : f32
    %311 = vector.broadcast %cst_122 : f32 to vector<2x16xf32>
    %312 = arith.addf %311, %310 : vector<2x16xf32>
    %313 = arith.divf %311, %312 : vector<2x16xf32>
    %314 = vector.extract_strided_slice %250 {offsets = [0, 32], sizes = [2, 16], strides = [1, 1]} : vector<2x64xf32> to vector<2x16xf32>
    %315 = vector.extract_strided_slice %255 {offsets = [0, 32], sizes = [2, 16], strides = [1, 1]} : vector<2x64xf32> to vector<2x16xf32>
    %316 = arith.addf %314, %315 : vector<2x16xf32>
    %317 = arith.negf %316 : vector<2x16xf32>
    %318 = math.exp %317 : vector<2x16xf32>
    %cst_123 = arith.constant 1.000000e+00 : f32
    %319 = vector.broadcast %cst_123 : f32 to vector<2x16xf32>
    %320 = arith.addf %319, %318 : vector<2x16xf32>
    %321 = arith.divf %319, %320 : vector<2x16xf32>
    %322 = vector.extract_strided_slice %250 {offsets = [0, 48], sizes = [2, 16], strides = [1, 1]} : vector<2x64xf32> to vector<2x16xf32>
    %323 = vector.extract_strided_slice %255 {offsets = [0, 48], sizes = [2, 16], strides = [1, 1]} : vector<2x64xf32> to vector<2x16xf32>
    %324 = arith.addf %322, %323 : vector<2x16xf32>
    %325 = math.tanh %324 : vector<2x16xf32>
    %326 = arith.mulf %313, %325 : vector<2x16xf32>
    %327 = arith.addf %326, %264 : vector<2x16xf32>
    %328 = arith.addf %327, %280 : vector<2x16xf32>
    %329 = math.tanh %328 : vector<2x16xf32>
    %330 = arith.mulf %321, %329 : vector<2x16xf32>
    %c2_124 = arith.constant 2 : index
    %c32_125 = arith.constant 32 : index
    %331 = vector.load %arg7[%c2_124, %c32_125] : memref<14x128xf32, #tpu.memory_space<vmem>>, vector<2x16xf32>
    tpu.vector_store %arg7[%c2_124, %c32_125], %305 {strides = array<i32>} : memref<14x128xf32, #tpu.memory_space<vmem>>, vector<2x16xf32>,
    %c4_126 = arith.constant 4 : index
    %c32_127 = arith.constant 32 : index
    %332 = vector.load %arg7[%c4_126, %c32_127] : memref<14x128xf32, #tpu.memory_space<vmem>>, vector<2x16xf32>
    tpu.vector_store %arg7[%c4_126, %c32_127], %330 {strides = array<i32>} : memref<14x128xf32, #tpu.memory_space<vmem>>, vector<2x16xf32>,
    %c0_128 = arith.constant 0 : index
    %c0_129 = arith.constant 0 : index
    %333 = vector.load %arg10[%c0_128, %c0_129] : memref<4x32xf32, #tpu.memory_space<vmem>>, vector<2x16xf32>
    tpu.vector_store %arg10[%c0_128, %c0_129], %305 {strides = array<i32>} : memref<4x32xf32, #tpu.memory_space<vmem>>, vector<2x16xf32>,
    %c2_130 = arith.constant 2 : index
    %c0_131 = arith.constant 0 : index
    %334 = vector.load %arg10[%c2_130, %c0_131] : memref<4x32xf32, #tpu.memory_space<vmem>>, vector<2x16xf32>
    tpu.vector_store %arg10[%c2_130, %c0_131], %330 {strides = array<i32>} : memref<4x32xf32, #tpu.memory_space<vmem>>, vector<2x16xf32>,
    %c0_132 = arith.constant 0 : index
    %c16_133 = arith.constant 16 : index
    %335 = vector.load %arg10[%c0_132, %c16_133] : memref<4x32xf32, #tpu.memory_space<vmem>>, vector<2x16xf32>
    tpu.vector_store %arg10[%c0_132, %c16_133], %303 {strides = array<i32>} : memref<4x32xf32, #tpu.memory_space<vmem>>, vector<2x16xf32>,
    %c2_134 = arith.constant 2 : index
    %c16_135 = arith.constant 16 : index
    %336 = vector.load %arg10[%c2_134, %c16_135] : memref<4x32xf32, #tpu.memory_space<vmem>>, vector<2x16xf32>
    tpu.vector_store %arg10[%c2_134, %c16_135], %328 {strides = array<i32>} : memref<4x32xf32, #tpu.memory_space<vmem>>, vector<2x16xf32>,
    %c0_136 = arith.constant 0 : index
    %c0_137 = arith.constant 0 : index
    %337 = vector.load %arg10[%c0_136, %c0_137] : memref<4x32xf32, #tpu.memory_space<vmem>>, vector<4x16xf32>
    %c0_138 = arith.constant 0 : index
    %c16_139 = arith.constant 16 : index
    %338 = vector.load %arg10[%c0_138, %c16_139] : memref<4x32xf32, #tpu.memory_space<vmem>>, vector<4x16xf32>
    %c6_140 = arith.constant 6 : index
    %c32_141 = arith.constant 32 : index
    %339 = vector.load %arg8[%c6_140, %c32_141] : memref<14x64xf32, #tpu.memory_space<vmem>>, vector<4x16xf32>
    %c6_142 = arith.constant 6 : index
    %c48_143 = arith.constant 48 : index
    %340 = vector.load %arg8[%c6_142, %c48_143] : memref<14x64xf32, #tpu.memory_space<vmem>>, vector<4x16xf32>
    %c10_144 = arith.constant 10 : index
    %c32_145 = arith.constant 32 : index
    %341 = vector.load %arg8[%c10_144, %c32_145] : memref<14x64xf32, #tpu.memory_space<vmem>>, vector<4x16xf32>
    %c10_146 = arith.constant 10 : index
    %c48_147 = arith.constant 48 : index
    %342 = vector.load %arg8[%c10_146, %c48_147] : memref<14x64xf32, #tpu.memory_space<vmem>>, vector<4x16xf32>
    %c2_148 = arith.constant 2 : index
    %c64_149 = arith.constant 64 : index
    %343 = vector.load %arg9[%c2_148, %c64_149] : memref<14x128xf32, #tpu.memory_space<vmem>>, vector<4x64xf32>
    %cst_150 = arith.constant dense<0.000000e+00> : vector<4x64xf32>
    %344 = tpu.matmul %339, %16, %cst_150 {dimension_numbers = #tpu.dot_dimension_numbers<[1], [0], [0], [1], [0, 0, 1, 1], [], []>} : vector<4x16xf32>, vector<16x64xf32>, vector<4x64xf32> -> vector<4x64xf32>
    %cst_151 = arith.constant dense<0.000000e+00> : vector<4x64xf32>
    %345 = tpu.matmul %341, %16, %cst_151 {dimension_numbers = #tpu.dot_dimension_numbers<[1], [0], [0], [1], [0, 0, 1, 1], [], []>} : vector<4x16xf32>, vector<16x64xf32>, vector<4x64xf32> -> vector<4x64xf32>
    %cst_152 = arith.constant dense<0.000000e+00> : vector<4x64xf32>
    %346 = tpu.matmul %337, %16, %cst_152 {dimension_numbers = #tpu.dot_dimension_numbers<[1], [0], [0], [1], [0, 0, 1, 1], [], []>} : vector<4x16xf32>, vector<16x64xf32>, vector<4x64xf32> -> vector<4x64xf32>
    %347 = arith.addf %345, %346 : vector<4x64xf32>
    %348 = arith.addf %344, %346 : vector<4x64xf32>
    %349 = vector.extract_strided_slice %343 {offsets = [0, 16], sizes = [4, 16], strides = [1, 1]} : vector<4x64xf32> to vector<4x16xf32>
    %350 = vector.extract_strided_slice %344 {offsets = [0, 16], sizes = [4, 16], strides = [1, 1]} : vector<4x64xf32> to vector<4x16xf32>
    %351 = arith.addf %349, %350 : vector<4x16xf32>
    %352 = arith.negf %351 : vector<4x16xf32>
    %353 = math.exp %352 : vector<4x16xf32>
    %cst_153 = arith.constant 1.000000e+00 : f32
    %354 = vector.broadcast %cst_153 : f32 to vector<4x16xf32>
    %355 = arith.addf %354, %353 : vector<4x16xf32>
    %356 = arith.divf %354, %355 : vector<4x16xf32>
    %357 = arith.mulf %356, %340 : vector<4x16xf32>
    %358 = vector.extract_strided_slice %345 {offsets = [0, 16], sizes = [4, 16], strides = [1, 1]} : vector<4x64xf32> to vector<4x16xf32>
    %359 = arith.addf %349, %358 : vector<4x16xf32>
    %360 = arith.negf %359 : vector<4x16xf32>
    %361 = math.exp %360 : vector<4x16xf32>
    %cst_154 = arith.constant 1.000000e+00 : f32
    %362 = vector.broadcast %cst_154 : f32 to vector<4x16xf32>
    %363 = arith.addf %362, %361 : vector<4x16xf32>
    %364 = arith.divf %362, %363 : vector<4x16xf32>
    %365 = arith.mulf %364, %342 : vector<4x16xf32>
    %366 = vector.extract_strided_slice %346 {offsets = [0, 16], sizes = [4, 16], strides = [1, 1]} : vector<4x64xf32> to vector<4x16xf32>
    %367 = arith.addf %349, %366 : vector<4x16xf32>
    %368 = arith.negf %367 : vector<4x16xf32>
    %369 = math.exp %368 : vector<4x16xf32>
    %cst_155 = arith.constant 1.000000e+00 : f32
    %370 = vector.broadcast %cst_155 : f32 to vector<4x16xf32>
    %371 = arith.addf %370, %369 : vector<4x16xf32>
    %372 = arith.divf %370, %371 : vector<4x16xf32>
    %373 = arith.mulf %372, %338 : vector<4x16xf32>
    %374 = vector.extract_strided_slice %343 {offsets = [0, 0], sizes = [4, 16], strides = [1, 1]} : vector<4x64xf32> to vector<4x16xf32>
    %375 = vector.extract_strided_slice %347 {offsets = [0, 0], sizes = [4, 16], strides = [1, 1]} : vector<4x64xf32> to vector<4x16xf32>
    %376 = arith.addf %374, %375 : vector<4x16xf32>
    %377 = arith.negf %376 : vector<4x16xf32>
    %378 = math.exp %377 : vector<4x16xf32>
    %cst_156 = arith.constant 1.000000e+00 : f32
    %379 = vector.broadcast %cst_156 : f32 to vector<4x16xf32>
    %380 = arith.addf %379, %378 : vector<4x16xf32>
    %381 = arith.divf %379, %380 : vector<4x16xf32>
    %382 = vector.extract_strided_slice %343 {offsets = [0, 32], sizes = [4, 16], strides = [1, 1]} : vector<4x64xf32> to vector<4x16xf32>
    %383 = vector.extract_strided_slice %347 {offsets = [0, 32], sizes = [4, 16], strides = [1, 1]} : vector<4x64xf32> to vector<4x16xf32>
    %384 = arith.addf %382, %383 : vector<4x16xf32>
    %385 = arith.negf %384 : vector<4x16xf32>
    %386 = math.exp %385 : vector<4x16xf32>
    %cst_157 = arith.constant 1.000000e+00 : f32
    %387 = vector.broadcast %cst_157 : f32 to vector<4x16xf32>
    %388 = arith.addf %387, %386 : vector<4x16xf32>
    %389 = arith.divf %387, %388 : vector<4x16xf32>
    %390 = vector.extract_strided_slice %343 {offsets = [0, 48], sizes = [4, 16], strides = [1, 1]} : vector<4x64xf32> to vector<4x16xf32>
    %391 = vector.extract_strided_slice %347 {offsets = [0, 48], sizes = [4, 16], strides = [1, 1]} : vector<4x64xf32> to vector<4x16xf32>
    %392 = arith.addf %390, %391 : vector<4x16xf32>
    %393 = math.tanh %392 : vector<4x16xf32>
    %394 = arith.mulf %381, %393 : vector<4x16xf32>
    %395 = arith.addf %394, %365 : vector<4x16xf32>
    %396 = arith.addf %395, %373 : vector<4x16xf32>
    %397 = math.tanh %396 : vector<4x16xf32>
    %398 = arith.mulf %389, %397 : vector<4x16xf32>
    %399 = vector.extract_strided_slice %343 {offsets = [0, 0], sizes = [4, 16], strides = [1, 1]} : vector<4x64xf32> to vector<4x16xf32>
    %400 = vector.extract_strided_slice %348 {offsets = [0, 0], sizes = [4, 16], strides = [1, 1]} : vector<4x64xf32> to vector<4x16xf32>
    %401 = arith.addf %399, %400 : vector<4x16xf32>
    %402 = arith.negf %401 : vector<4x16xf32>
    %403 = math.exp %402 : vector<4x16xf32>
    %cst_158 = arith.constant 1.000000e+00 : f32
    %404 = vector.broadcast %cst_158 : f32 to vector<4x16xf32>
    %405 = arith.addf %404, %403 : vector<4x16xf32>
    %406 = arith.divf %404, %405 : vector<4x16xf32>
    %407 = vector.extract_strided_slice %343 {offsets = [0, 32], sizes = [4, 16], strides = [1, 1]} : vector<4x64xf32> to vector<4x16xf32>
    %408 = vector.extract_strided_slice %348 {offsets = [0, 32], sizes = [4, 16], strides = [1, 1]} : vector<4x64xf32> to vector<4x16xf32>
    %409 = arith.addf %407, %408 : vector<4x16xf32>
    %410 = arith.negf %409 : vector<4x16xf32>
    %411 = math.exp %410 : vector<4x16xf32>
    %cst_159 = arith.constant 1.000000e+00 : f32
    %412 = vector.broadcast %cst_159 : f32 to vector<4x16xf32>
    %413 = arith.addf %412, %411 : vector<4x16xf32>
    %414 = arith.divf %412, %413 : vector<4x16xf32>
    %415 = vector.extract_strided_slice %343 {offsets = [0, 48], sizes = [4, 16], strides = [1, 1]} : vector<4x64xf32> to vector<4x16xf32>
    %416 = vector.extract_strided_slice %348 {offsets = [0, 48], sizes = [4, 16], strides = [1, 1]} : vector<4x64xf32> to vector<4x16xf32>
    %417 = arith.addf %415, %416 : vector<4x16xf32>
    %418 = math.tanh %417 : vector<4x16xf32>
    %419 = arith.mulf %406, %418 : vector<4x16xf32>
    %420 = arith.addf %419, %357 : vector<4x16xf32>
    %421 = arith.addf %420, %373 : vector<4x16xf32>
    %422 = math.tanh %421 : vector<4x16xf32>
    %423 = arith.mulf %414, %422 : vector<4x16xf32>
    %c6_160 = arith.constant 6 : index
    %c32_161 = arith.constant 32 : index
    %424 = vector.load %arg7[%c6_160, %c32_161] : memref<14x128xf32, #tpu.memory_space<vmem>>, vector<4x16xf32>
    tpu.vector_store %arg7[%c6_160, %c32_161], %398 {strides = array<i32>} : memref<14x128xf32, #tpu.memory_space<vmem>>, vector<4x16xf32>,
    %c10_162 = arith.constant 10 : index
    %c32_163 = arith.constant 32 : index
    %425 = vector.load %arg7[%c10_162, %c32_163] : memref<14x128xf32, #tpu.memory_space<vmem>>, vector<4x16xf32>
    tpu.vector_store %arg7[%c10_162, %c32_163], %423 {strides = array<i32>} : memref<14x128xf32, #tpu.memory_space<vmem>>, vector<4x16xf32>,
    return
  }
  func.func @transform_0(%arg0: i32) -> (i32, i32) {
    %c0_i32 = arith.constant 0 : i32
    %c0_i32_0 = arith.constant 0 : i32
    %c0_i32_1 = arith.constant 0 : i32
    return %c0_i32, %c0_i32_0 : i32, i32
  }
  func.func @transform_1(%arg0: i32) -> (i32, i32) {
    %c0_i32 = arith.constant 0 : i32
    %c0_i32_0 = arith.constant 0 : i32
    %c0_i32_1 = arith.constant 0 : i32
    return %c0_i32, %c0_i32_0 : i32, i32
  }
  func.func @transform_2(%arg0: i32) -> (i32, i32) {
    %c0_i32 = arith.constant 0 : i32
    %c0_i32_0 = arith.constant 0 : i32
    %c0_i32_1 = arith.constant 0 : i32
    return %c0_i32, %c0_i32_0 : i32, i32
  }
  func.func @transform_3(%arg0: i32) -> (i32, i32) {
    %c0_i32 = arith.constant 0 : i32
    %c0_i32_0 = arith.constant 0 : i32
    %c0_i32_1 = arith.constant 0 : i32
    return %c0_i32, %c0_i32_0 : i32, i32
  }
  func.func @transform_4(%arg0: i32) -> (i32, i32) {
    %c0_i32 = arith.constant 0 : i32
    %c0_i32_0 = arith.constant 0 : i32
    %c0_i32_1 = arith.constant 0 : i32
    return %c0_i32, %c0_i32_0 : i32, i32
  }
  func.func @transform_5(%arg0: i32) -> (i32, i32) {
    %c0_i32 = arith.constant 0 : i32
    %c0_i32_0 = arith.constant 0 : i32
    %c0_i32_1 = arith.constant 0 : i32
    return %c0_i32, %c0_i32_0 : i32, i32
  }
  func.func @transform_6(%arg0: i32) -> (i32, i32) {
    %c0_i32 = arith.constant 0 : i32
    %c0_i32_0 = arith.constant 0 : i32
    %c0_i32_1 = arith.constant 0 : i32
    return %c0_i32, %c0_i32_0 : i32, i32
  }
}

</mosaic_0001>

<llo_original>
// kernel: custom-call.4
$region0: #{custom-call.4}
  %s0 = inlined_call_operand.vmem [shape: f32[14,48], index: 0, kind: output, shape index: {}]

// kernel: tree_encoder_v2_forward.1
$region0: #{tree_encoder_v2_forward.1}
  #allocation0 [shape = 'u32[]', space=smem, size = 0x4, offset = 0x4, fixed_abs, tag = 'smem constant byte address 0x4 - core index']
  #allocation1 [shape = 'u32[144,128]{1,0:T(1,128)}', space=vmem, size = 0x12000, scoped, tag = 'internal scratch']
  #allocation2 [shape = 'f32[14,64]{1,0:T(8,128)}', space=vmem, size = 0x2000, scoped, tag = 'scratch operand']
  #allocation3 [shape = 'f32[14,128]{1,0:T(8,128)}', space=vmem, size = 0x2000, scoped, tag = 'scratch operand']
  #allocation4 [shape = 'f32[4,32]{1,0:T(4,128)}', space=vmem, size = 0x800, scoped, tag = 'scratch operand']
  %s0 = inlined_call_operand.vmem [shape: f32[14,24], index: 0, kind: input, shape index: {}]
  %s1 = inlined_call_operand.vmem [shape: f32[24,64], index: 1, kind: input, shape index: {}]
  %s2 = inlined_call_operand.vmem [shape: f32[64,128], index: 2, kind: input, shape index: {}]
  %s3 = inlined_call_operand.vmem [shape: f32[1,128], index: 3, kind: input, shape index: {}]
  %s4 = inlined_call_operand.vmem [shape: f32[16,64], index: 4, kind: input, shape index: {}]
  %s5 = inlined_call_operand.vmem [shape: f32[16,64], index: 5, kind: input, shape index: {}]
  %s6 = inlined_call_operand.vmem [shape: f32[14,128], index: 6, kind: output, shape index: {}]
  %s7 = sld [smem:[#allocation0]]
  $region34: #{tree_encoder_v2_forward.1} parent=0
    _
  %s9 = ssub.s32 1, %s7
  %s10 = scalar_select 0, %s9, %s7
  // Predicated region
  $region2: #{tree_encoder_v2_forward.1} parent=0 // pred_check
    _
  $region3: #{tree_encoder_v2_forward.1} parent=0 // pred_check_branch
    %12 = sbr.rel (0) target = $region5
  $region4: #{tree_encoder_v2_forward.1} parent=0 // pred_region
    _
  $region5: #{tree_encoder_v2_forward.1} parent=0 // pred_fallthru
    _
  // Predicated region
  $region6: #{tree_encoder_v2_forward.1} parent=0 // pred_check
    _
  $region7: #{tree_encoder_v2_forward.1} parent=0 // pred_check_branch
    %14 = sbr.rel (0) target = $region9
  $region8: #{tree_encoder_v2_forward.1} parent=0 // pred_region
    _
  $region9: #{tree_encoder_v2_forward.1} parent=0 // pred_fallthru
    _
  // Predicated region
  $region10: #{tree_encoder_v2_forward.1} parent=0 // pred_check
    _
  $region11: #{tree_encoder_v2_forward.1} parent=0 // pred_check_branch
    %16 = sbr.rel (0) target = $region13
  $region12: #{tree_encoder_v2_forward.1} parent=0 // pred_region
    _
  $region13: #{tree_encoder_v2_forward.1} parent=0 // pred_fallthru
    _
  // Predicated region
  $region14: #{tree_encoder_v2_forward.1} parent=0 // pred_check
    _
  $region15: #{tree_encoder_v2_forward.1} parent=0 // pred_check_branch
    %18 = sbr.rel (0) target = $region17
  $region16: #{tree_encoder_v2_forward.1} parent=0 // pred_region
    _
  $region17: #{tree_encoder_v2_forward.1} parent=0 // pred_fallthru
    _
  // Predicated region
  $region18: #{tree_encoder_v2_forward.1} parent=0 // pred_check
    _
  $region19: #{tree_encoder_v2_forward.1} parent=0 // pred_check_branch
    %20 = sbr.rel (0) target = $region21
  $region20: #{tree_encoder_v2_forward.1} parent=0 // pred_region
    _
  $region21: #{tree_encoder_v2_forward.1} parent=0 // pred_fallthru
    _
  // Predicated region
  $region22: #{tree_encoder_v2_forward.1} parent=0 // pred_check
    _
  $region23: #{tree_encoder_v2_forward.1} parent=0 // pred_check_branch
    %22 = sbr.rel (0) target = $region25
  $region24: #{tree_encoder_v2_forward.1} parent=0 // pred_region
    _
  $region25: #{tree_encoder_v2_forward.1} parent=0 // pred_fallthru
    _
  %v23 = vld [vmem:[%s0] sm:$0xff]
  %v24 = vld [vmem:[%s0 + $0x8] sm:$0x3f]
  %v25 = vld [vmem:[%s1] sm:$0xff]
  %v26 = vld [vmem:[%s1 + $0x8] sm:$0xff]
  %v27 = vld [vmem:[%s1 + $0x10] sm:$0xff]
  %vm28 = vcmask 195584
  %v30 = vsel %vm28, %v23, 0
  %v33 = vsel %vm28, %v24, 0
  %35 = vmatprep.subr.mxu0 0.0
  %36 = vmatpush1.msra.mxu0 0.0
  %37 = vmatprep.subr.mxu0 0.0
  %38 = vmatpush1.msra.mxu0 0.0
  %39 = vmatprep.subr.mxu0 0.0
  %40 = vmatpush1.msra.mxu0 0.0
  %41 = vmatprep.subr.mxu0 0.0
  %42 = vmatpush1.msra.mxu0 0.0
  %43 = vmatprep.subr.mxu0 0.0
  %44 = vmatpush1.msra.mxu0 0.0
  %45 = vmatprep.subr.mxu0 0.0
  %46 = vmatpush1.msra.mxu0 0.0
  %47 = vmatprep.subr.mxu0 0.0
  %48 = vmatpush1.msra.mxu0 0.0
  %49 = vmatprep.subr.mxu0 0.0
  %50 = vmatpush1.msra.mxu0 0.0
  %51 = vmatprep.subr.mxu0 0.0
  %52 = vmatpush1.msra.mxu0 0.0
  %53 = vmatprep.subr.mxu0 0.0
  %54 = vmatpush1.msra.mxu0 0.0
  %55 = vmatprep.subr.mxu0 0.0
  %56 = vmatpush1.msra.mxu0 0.0
  %57 = vmatprep.subr.mxu0 0.0
  %58 = vmatpush1.msra.mxu0 0.0
  %59 = vmatprep.subr.mxu0 0.0
  %60 = vmatpush1.msra.mxu0 0.0
  %61 = vmatprep.subr.mxu0 0.0
  %62 = vmatpush1.msra.mxu0 %v27
  %63 = vmatprep.subr.mxu0 0.0
  %64 = vmatpush1.msra.mxu0 %v26
  %65 = vmatprep.subr.mxu0 0.0
  %66 = vmatpush1.msra.mxu0 %v25
  %67 = vmatprep.subr.mxu0 0.0
  %68 = vmatpush2.msra.mxu0 0.0
  %69 = vmatprep.subr.mxu0 0.0
  %70 = vmatpush2.msra.mxu0 0.0
  %71 = vmatprep.subr.mxu0 0.0
  %72 = vmatpush2.msra.mxu0 0.0
  %73 = vmatprep.subr.mxu0 0.0
  %74 = vmatpush2.msra.mxu0 0.0
  %75 = vmatprep.subr.mxu0 0.0
  %76 = vmatpush2.msra.mxu0 0.0
  %77 = vmatprep.subr.mxu0 0.0
  %78 = vmatpush2.msra.mxu0 0.0
  %79 = vmatprep.subr.mxu0 0.0
  %80 = vmatpush2.msra.mxu0 0.0
  %81 = vmatprep.subr.mxu0 0.0
  %82 = vmatpush2.msra.mxu0 0.0
  %83 = vmatprep.subr.mxu0 0.0
  %84 = vmatpush2.msra.mxu0 0.0
  %85 = vmatprep.subr.mxu0 0.0
  %86 = vmatpush2.msra.mxu0 0.0
  %87 = vmatprep.subr.mxu0 0.0
  %88 = vmatpush2.msra.mxu0 0.0
  %89 = vmatprep.subr.mxu0 0.0
  %90 = vmatpush2.msra.mxu0 0.0
  %91 = vmatprep.subr.mxu0 0.0
  %92 = vmatpush2.msra.mxu0 0.0
  %93 = vmatprep.subr.mxu0 0.0
  %94 = vmatpush2.msra.mxu0 0.0
  %95 = vmatprep.subr.mxu0 0.0
  %96 = vmatpush2.msra.mxu0 0.0
  %97 = vmatprep.subr.mxu0 0.0
  %98 = vmatpush2.msra.mxu0 0.0
  %99 = vmatprep.mubr.f32.mxu0 0.0
  %100 = vmatmul.mubr.f32.gmra.mxu0 %v30
  %v101 = vpop.f32.mrf.mxu0
  %v102 = vadd.f32 0.0, %v101
  %v103 = vpop.f32.mrf.mxu0
  %104 = vmatprep.mubr.f32.mxu0 0.0
  %105 = vmatmul.mubr.f32.gmra.mxu0 %v33
  %v106 = vpop.f32.mrf.mxu0
  %v107 = vadd.f32 0.0, %v106
  %v108 = vpop.f32.mrf.mxu0
  %109 = vdwg.mxu0
  %v110 = vld [vmem:[%s3] sm:$0x1]
  %v111 = vld [vmem:[%s2] sm:$0xff]
  %v112 = vld [vmem:[%s2 + $0x8] sm:$0xff]
  %v113 = vld [vmem:[%s2 + $0x10] sm:$0xff]
  %v114 = vld [vmem:[%s2 + $0x18] sm:$0xff]
  %v115 = vld [vmem:[%s2 + $0x20] sm:$0xff]
  %v116 = vld [vmem:[%s2 + $0x28] sm:$0xff]
  %v117 = vld [vmem:[%s2 + $0x30] sm:$0xff]
  %v118 = vld [vmem:[%s2 + $0x38] sm:$0xff]
  %v120 = vlaneseq
  %v121 = vshrl.u32 %v120, 7
  %v122 = vsub.s32 0, %v121
  %v123 = vrot.slane %v110, %v122
  %vm125 = vcmask 523264
  %v127 = vsel %vm125, %v102, 0
  %v130 = vsel %vm125, %v107, 0
  %132 = vmatprep.subr.mxu0 0.0
  %133 = vmatpush1.msra.mxu0 0.0
  %134 = vmatprep.subr.mxu0 0.0
  %135 = vmatpush1.msra.mxu0 0.0
  %136 = vmatprep.subr.mxu0 0.0
  %137 = vmatpush1.msra.mxu0 0.0
  %138 = vmatprep.subr.mxu0 0.0
  %139 = vmatpush1.msra.mxu0 0.0
  %140 = vmatprep.subr.mxu0 0.0
  %141 = vmatpush1.msra.mxu0 0.0
  %142 = vmatprep.subr.mxu0 0.0
  %143 = vmatpush1.msra.mxu0 0.0
  %144 = vmatprep.subr.mxu0 0.0
  %145 = vmatpush1.msra.mxu0 0.0
  %146 = vmatprep.subr.mxu0 0.0
  %147 = vmatpush1.msra.mxu0 0.0
  %148 = vmatprep.subr.mxu0 0.0
  %149 = vmatpush1.msra.mxu0 %v118
  %150 = vmatprep.subr.mxu0 0.0
  %151 = vmatpush1.msra.mxu0 %v117
  %152 = vmatprep.subr.mxu0 0.0
  %153 = vmatpush1.msra.mxu0 %v116
  %154 = vmatprep.subr.mxu0 0.0
  %155 = vmatpush1.msra.mxu0 %v115
  %156 = vmatprep.subr.mxu0 0.0
  %157 = vmatpush1.msra.mxu0 %v114
  %158 = vmatprep.subr.mxu0 0.0
  %159 = vmatpush1.msra.mxu0 %v113
  %160 = vmatprep.subr.mxu0 0.0
  %161 = vmatpush1.msra.mxu0 %v112
  %162 = vmatprep.subr.mxu0 0.0
  %163 = vmatpush1.msra.mxu0 %v111
  %164 = vmatprep.subr.mxu0 0.0
  %165 = vmatpush2.msra.mxu0 0.0
  %166 = vmatprep.subr.mxu0 0.0
  %167 = vmatpush2.msra.mxu0 0.0
  %168 = vmatprep.subr.mxu0 0.0
  %169 = vmatpush2.msra.mxu0 0.0
  %170 = vmatprep.subr.mxu0 0.0
  %171 = vmatpush2.msra.mxu0 0.0
  %172 = vmatprep.subr.mxu0 0.0
  %173 = vmatpush2.msra.mxu0 0.0
  %174 = vmatprep.subr.mxu0 0.0
  %175 = vmatpush2.msra.mxu0 0.0
  %176 = vmatprep.subr.mxu0 0.0
  %177 = vmatpush2.msra.mxu0 0.0
  %178 = vmatprep.subr.mxu0 0.0
  %179 = vmatpush2.msra.mxu0 0.0
  %180 = vmatprep.subr.mxu0 0.0
  %181 = vmatpush2.msra.mxu0 0.0
  %182 = vmatprep.subr.mxu0 0.0
  %183 = vmatpush2.msra.mxu0 0.0
  %184 = vmatprep.subr.mxu0 0.0
  %185 = vmatpush2.msra.mxu0 0.0
  %186 = vmatprep.subr.mxu0 0.0
  %187 = vmatpush2.msra.mxu0 0.0
  %188 = vmatprep.subr.mxu0 0.0
  %189 = vmatpush2.msra.mxu0 0.0
  %190 = vmatprep.subr.mxu0 0.0
  %191 = vmatpush2.msra.mxu0 0.0
  %192 = vmatprep.subr.mxu0 0.0
  %193 = vmatpush2.msra.mxu0 0.0
  %194 = vmatprep.subr.mxu0 0.0
  %195 = vmatpush2.msra.mxu0 0.0
  %196 = vmatprep.mubr.f32.mxu0 0.0
  %197 = vmatmul.mubr.f32.gmra.mxu0 %v127
  %v198 = vpop.f32.mrf.mxu0
  %v199 = vadd.f32 %v123, %v198
  %v200 = vpop.f32.mrf.mxu0
  %201 = vmatprep.mubr.f32.mxu0 0.0
  %202 = vmatmul.mubr.f32.gmra.mxu0 %v130
  %v203 = vpop.f32.mrf.mxu0
  %v204 = vadd.f32 %v123, %v203
  %v205 = vpop.f32.mrf.mxu0
  %206 = vdwg.mxu0
  %207 = vst [vmem:[#allocation3] sm:$0xff] %v199
  %208 = vst [vmem:[#allocation3 + $0x8] sm:$0x3f] %v204
  %v209 = vtanh.pop %v102
  %v210 = vtanh.pop %v107
  %211 = vst.msk [vmem:[#allocation2] sm:$0xff] %vm125, %v209
  %vm212 = vcmask 521216
  %213 = vst.msk [vmem:[#allocation2 + $0x8] sm:$0x3f] %vm212, %v210
  %214 = vst [vmem:[%s6] sm:$0xff] 0.0
  %215 = vst [vmem:[%s6 + $0x8] sm:$0x3f] 0.0
  %v216 = vld [vmem:[%s4] sm:$0xff]
  %v217 = vld [vmem:[%s4 + $0x8] sm:$0xff]
  %v218 = vld [vmem:[%s5] sm:$0xff]
  %v219 = vld [vmem:[%s5 + $0x8] sm:$0xff]
  %v220 = vld [vmem:[#allocation2 + $0x6] sm:$0xf]
  %v221 = vld [vmem:[#allocation2 + $0xa] sm:$0xf]
  %v222 = vld [vmem:[#allocation3 + $0x2] sm:$0xf]
  %v223 = vadd.f32 %v220, %v221
  %vm224 = vcmask 130048
  %v226 = vsel %vm224, %v223, 0
  %228 = vmatprep.subr.mxu0 0.0
  %229 = vmatpush1.msra.mxu0 0.0
  %230 = vmatprep.subr.mxu0 0.0
  %231 = vmatpush1.msra.mxu0 0.0
  %232 = vmatprep.subr.mxu0 0.0
  %233 = vmatpush1.msra.mxu0 0.0
  %234 = vmatprep.subr.mxu0 0.0
  %235 = vmatpush1.msra.mxu0 0.0
  %236 = vmatprep.subr.mxu0 0.0
  %237 = vmatpush1.msra.mxu0 0.0
  %238 = vmatprep.subr.mxu0 0.0
  %239 = vmatpush1.msra.mxu0 0.0
  %240 = vmatprep.subr.mxu0 0.0
  %241 = vmatpush1.msra.mxu0 0.0
  %242 = vmatprep.subr.mxu0 0.0
  %243 = vmatpush1.msra.mxu0 0.0
  %244 = vmatprep.subr.mxu0 0.0
  %245 = vmatpush1.msra.mxu0 0.0
  %246 = vmatprep.subr.mxu0 0.0
  %247 = vmatpush1.msra.mxu0 0.0
  %248 = vmatprep.subr.mxu0 0.0
  %249 = vmatpush1.msra.mxu0 0.0
  %250 = vmatprep.subr.mxu0 0.0
  %251 = vmatpush1.msra.mxu0 0.0
  %252 = vmatprep.subr.mxu0 0.0
  %253 = vmatpush1.msra.mxu0 0.0
  %254 = vmatprep.subr.mxu0 0.0
  %255 = vmatpush1.msra.mxu0 0.0
  %256 = vmatprep.subr.mxu0 0.0
  %257 = vmatpush1.msra.mxu0 %v217
  %258 = vmatprep.subr.mxu0 0.0
  %259 = vmatpush1.msra.mxu0 %v216
  %260 = vmatprep.subr.mxu0 0.0
  %261 = vmatpush2.msra.mxu0 0.0
  %262 = vmatprep.subr.mxu0 0.0
  %263 = vmatpush2.msra.mxu0 0.0
  %264 = vmatprep.subr.mxu0 0.0
  %265 = vmatpush2.msra.mxu0 0.0
  %266 = vmatprep.subr.mxu0 0.0
  %267 = vmatpush2.msra.mxu0 0.0
  %268 = vmatprep.subr.mxu0 0.0
  %269 = vmatpush2.msra.mxu0 0.0
  %270 = vmatprep.subr.mxu0 0.0
  %271 = vmatpush2.msra.mxu0 0.0
  %272 = vmatprep.subr.mxu0 0.0
  %273 = vmatpush2.msra.mxu0 0.0
  %274 = vmatprep.subr.mxu0 0.0
  %275 = vmatpush2.msra.mxu0 0.0
  %276 = vmatprep.subr.mxu0 0.0
  %277 = vmatpush2.msra.mxu0 0.0
  %278 = vmatprep.subr.mxu0 0.0
  %279 = vmatpush2.msra.mxu0 0.0
  %280 = vmatprep.subr.mxu0 0.0
  %281 = vmatpush2.msra.mxu0 0.0
  %282 = vmatprep.subr.mxu0 0.0
  %283 = vmatpush2.msra.mxu0 0.0
  %284 = vmatprep.subr.mxu0 0.0
  %285 = vmatpush2.msra.mxu0 0.0
  %286 = vmatprep.subr.mxu0 0.0
  %287 = vmatpush2.msra.mxu0 0.0
  %288 = vmatprep.subr.mxu0 0.0
  %289 = vmatpush2.msra.mxu0 0.0
  %290 = vmatprep.subr.mxu0 0.0
  %291 = vmatpush2.msra.mxu0 0.0
  %292 = vmatprep.mubr.f32.mxu0 0.0
  %293 = vmatmul.mubr.f32.gmra.mxu0 %v226
  %v294 = vpop.f32.mrf.mxu0
  %v295 = vadd.f32 0.0, %v294
  %v296 = vpop.f32.mrf.mxu0
  %297 = vdwg.mxu0
  %300 = vrot.lane.b32.xlu0 %v216, 112
  %v301 = vpop.permute.xlu0 %300
  %302 = vrot.lane.b32.xlu0 %v217, 112
  %v303 = vpop.permute.xlu0 %302
  %v307 = vsel %vm224, %v220, 0
  %309 = vmatprep.subr.mxu0 0.0
  %310 = vmatpush1.msra.mxu0 0.0
  %311 = vmatprep.subr.mxu0 0.0
  %312 = vmatpush1.msra.mxu0 0.0
  %313 = vmatprep.subr.mxu0 0.0
  %314 = vmatpush1.msra.mxu0 0.0
  %315 = vmatprep.subr.mxu0 0.0
  %316 = vmatpush1.msra.mxu0 0.0
  %317 = vmatprep.subr.mxu0 0.0
  %318 = vmatpush1.msra.mxu0 0.0
  %319 = vmatprep.subr.mxu0 0.0
  %320 = vmatpush1.msra.mxu0 0.0
  %321 = vmatprep.subr.mxu0 0.0
  %322 = vmatpush1.msra.mxu0 0.0
  %323 = vmatprep.subr.mxu0 0.0
  %324 = vmatpush1.msra.mxu0 0.0
  %325 = vmatprep.subr.mxu0 0.0
  %326 = vmatpush1.msra.mxu0 0.0
  %327 = vmatprep.subr.mxu0 0.0
  %328 = vmatpush1.msra.mxu0 0.0
  %329 = vmatprep.subr.mxu0 0.0
  %330 = vmatpush1.msra.mxu0 0.0
  %331 = vmatprep.subr.mxu0 0.0
  %332 = vmatpush1.msra.mxu0 0.0
  %333 = vmatprep.subr.mxu0 0.0
  %334 = vmatpush1.msra.mxu0 0.0
  %335 = vmatprep.subr.mxu0 0.0
  %336 = vmatpush1.msra.mxu0 0.0
  %337 = vmatprep.subr.mxu0 0.0
  %338 = vmatpush1.msra.mxu0 %v303
  %339 = vmatprep.subr.mxu0 0.0
  %340 = vmatpush1.msra.mxu0 %v301
  %341 = vmatprep.subr.mxu0 0.0
  %342 = vmatpush2.msra.mxu0 0.0
  %343 = vmatprep.subr.mxu0 0.0
  %344 = vmatpush2.msra.mxu0 0.0
  %345 = vmatprep.subr.mxu0 0.0
  %346 = vmatpush2.msra.mxu0 0.0
  %347 = vmatprep.subr.mxu0 0.0
  %348 = vmatpush2.msra.mxu0 0.0
  %349 = vmatprep.subr.mxu0 0.0
  %350 = vmatpush2.msra.mxu0 0.0
  %351 = vmatprep.subr.mxu0 0.0
  %352 = vmatpush2.msra.mxu0 0.0
  %353 = vmatprep.subr.mxu0 0.0
  %354 = vmatpush2.msra.mxu0 0.0
  %355 = vmatprep.subr.mxu0 0.0
  %356 = vmatpush2.msra.mxu0 0.0
  %357 = vmatprep.subr.mxu0 0.0
  %358 = vmatpush2.msra.mxu0 0.0
  %359 = vmatprep.subr.mxu0 0.0
  %360 = vmatpush2.msra.mxu0 0.0
  %361 = vmatprep.subr.mxu0 0.0
  %362 = vmatpush2.msra.mxu0 0.0
  %363 = vmatprep.subr.mxu0 0.0
  %364 = vmatpush2.msra.mxu0 0.0
  %365 = vmatprep.subr.mxu0 0.0
  %366 = vmatpush2.msra.mxu0 0.0
  %367 = vmatprep.subr.mxu0 0.0
  %368 = vmatpush2.msra.mxu0 0.0
  %369 = vmatprep.subr.mxu0 0.0
  %370 = vmatpush2.msra.mxu0 0.0
  %371 = vmatprep.subr.mxu0 0.0
  %372 = vmatpush2.msra.mxu0 0.0
  %373 = vmatprep.mubr.f32.mxu0 0.0
  %374 = vmatmul.mubr.f32.gmra.mxu0 %v307
  %v375 = vpop.f32.mrf.mxu0
  %v376 = vadd.f32 0.0, %v375
  %v377 = vpop.f32.mrf.mxu0
  %378 = vdwg.mxu0
  %v380 = vsel %vm224, %v221, 0
  %382 = vmatprep.subr.mxu0 0.0
  %383 = vmatpush1.msra.mxu0 0.0
  %384 = vmatprep.subr.mxu0 0.0
  %385 = vmatpush1.msra.mxu0 0.0
  %386 = vmatprep.subr.mxu0 0.0
  %387 = vmatpush1.msra.mxu0 0.0
  %388 = vmatprep.subr.mxu0 0.0
  %389 = vmatpush1.msra.mxu0 0.0
  %390 = vmatprep.subr.mxu0 0.0
  %391 = vmatpush1.msra.mxu0 0.0
  %392 = vmatprep.subr.mxu0 0.0
  %393 = vmatpush1.msra.mxu0 0.0
  %394 = vmatprep.subr.mxu0 0.0
  %395 = vmatpush1.msra.mxu0 0.0
  %396 = vmatprep.subr.mxu0 0.0
  %397 = vmatpush1.msra.mxu0 0.0
  %398 = vmatprep.subr.mxu0 0.0
  %399 = vmatpush1.msra.mxu0 0.0
  %400 = vmatprep.subr.mxu0 0.0
  %401 = vmatpush1.msra.mxu0 0.0
  %402 = vmatprep.subr.mxu0 0.0
  %403 = vmatpush1.msra.mxu0 0.0
  %404 = vmatprep.subr.mxu0 0.0
  %405 = vmatpush1.msra.mxu0 0.0
  %406 = vmatprep.subr.mxu0 0.0
  %407 = vmatpush1.msra.mxu0 0.0
  %408 = vmatprep.subr.mxu0 0.0
  %409 = vmatpush1.msra.mxu0 0.0
  %410 = vmatprep.subr.mxu0 0.0
  %411 = vmatpush1.msra.mxu0 %v303
  %412 = vmatprep.subr.mxu0 0.0
  %413 = vmatpush1.msra.mxu0 %v301
  %414 = vmatprep.subr.mxu0 0.0
  %415 = vmatpush2.msra.mxu0 0.0
  %416 = vmatprep.subr.mxu0 0.0
  %417 = vmatpush2.msra.mxu0 0.0
  %418 = vmatprep.subr.mxu0 0.0
  %419 = vmatpush2.msra.mxu0 0.0
  %420 = vmatprep.subr.mxu0 0.0
  %421 = vmatpush2.msra.mxu0 0.0
  %422 = vmatprep.subr.mxu0 0.0
  %423 = vmatpush2.msra.mxu0 0.0
  %424 = vmatprep.subr.mxu0 0.0
  %425 = vmatpush2.msra.mxu0 0.0
  %426 = vmatprep.subr.mxu0 0.0
  %427 = vmatpush2.msra.mxu0 0.0
  %428 = vmatprep.subr.mxu0 0.0
  %429 = vmatpush2.msra.mxu0 0.0
  %430 = vmatprep.subr.mxu0 0.0
  %431 = vmatpush2.msra.mxu0 0.0
  %432 = vmatprep.subr.mxu0 0.0
  %433 = vmatpush2.msra.mxu0 0.0
  %434 = vmatprep.subr.mxu0 0.0
  %435 = vmatpush2.msra.mxu0 0.0
  %436 = vmatprep.subr.mxu0 0.0
  %437 = vmatpush2.msra.mxu0 0.0
  %438 = vmatprep.subr.mxu0 0.0
  %439 = vmatpush2.msra.mxu0 0.0
  %440 = vmatprep.subr.mxu0 0.0
  %441 = vmatpush2.msra.mxu0 0.0
  %442 = vmatprep.subr.mxu0 0.0
  %443 = vmatpush2.msra.mxu0 0.0
  %444 = vmatprep.subr.mxu0 0.0
  %445 = vmatpush2.msra.mxu0 0.0
  %446 = vmatprep.mubr.f32.mxu0 0.0
  %447 = vmatmul.mubr.f32.gmra.mxu0 %v380
  %v448 = vpop.f32.mrf.mxu0
  %v449 = vadd.f32 0.0, %v448
  %v450 = vpop.f32.mrf.mxu0
  %451 = vdwg.mxu0
  %v452 = vadd.f32 %v222, %v295
  %v453 = vxor.u32 %v452, 2147483648
  %v454 = vmul.f32 %v453, 1.442695
  %v455 = vpow.pop %v454
  %v456 = vadd.f32 %v455, 1.0
  %v457 = vrcp.pop %v456
  %v458 = vmul.f32 1.0, %v457
  %460 = vrot.lane.b32.xlu0 %v376, 16
  %v461 = vpop.permute.xlu0 %460
  %v463 = vadd.f32 %v222, %v461
  %v464 = vxor.u32 %v463, 2147483648
  %v465 = vmul.f32 %v464, 1.442695
  %v466 = vpow.pop %v465
  %v467 = vadd.f32 %v466, 1.0
  %v468 = vrcp.pop %v467
  %v469 = vmul.f32 1.0, %v468
  %471 = vrot.lane.b32.xlu0 %v449, 16
  %v472 = vpop.permute.xlu0 %471
  %v474 = vadd.f32 %v222, %v472
  %v475 = vxor.u32 %v474, 2147483648
  %v476 = vmul.f32 %v475, 1.442695
  %v477 = vpow.pop %v476
  %v478 = vadd.f32 %v477, 1.0
  %v479 = vrcp.pop %v478
  %v480 = vmul.f32 1.0, %v479
  %v481 = vtanh.pop %v452
  %483 = vrot.lane.b32.xlu0 %v481, 80
  %v484 = vpop.permute.xlu0 %483
  %v486 = vmul.f32 %v458, %v484
  %v487 = vmul.f32 %v469, %v220
  %489 = vrot.lane.b32.xlu0 %v487, 112
  %v490 = vpop.permute.xlu0 %489
  %v492 = vadd.f32 %v486, %v490
  %v493 = vmul.f32 %v480, %v221
  %495 = vrot.lane.b32.xlu0 %v493, 112
  %v496 = vpop.permute.xlu0 %495
  %v498 = vadd.f32 %v492, %v496
  %v499 = vtanh.pop %v498
  %501 = vrot.lane.b32.xlu0 %v499, 32
  %v502 = vpop.permute.xlu0 %501
  %v504 = vmul.f32 %v458, %v502
  %506 = vrot.lane.b32.xlu0 %v504, 96
  %v507 = vpop.permute.xlu0 %506
  %vm509 = vcmask 125952
  %510 = vst.msk [vmem:[#allocation2 + $0x2] sm:$0xf] %vm509, %v507
  %512 = vrot.lane.b32.xlu0 %v498, 16
  %v513 = vpop.permute.xlu0 %512
  %vm515 = vcmask 257152
  %516 = vst.msk [vmem:[#allocation2 + $0x2] sm:$0xf] %vm515, %v513
  %v517 = vadd.f32 %v295, %v123
  %v518 = vtanh.pop %v517
  %520 = vrot.lane.b32.xlu0 %v518, 80
  %v521 = vpop.permute.xlu0 %520
  %523 = vst.msk [vmem:[%s6 + $0x2] sm:$0xf] %vm509, %v521
  %v524 = vld [vmem:[#allocation2 + $0x2] sm:$0x3]
  %v525 = vld [vmem:[#allocation2 + $0x4] sm:$0x3]
  %v526 = vld [vmem:[#allocation3] sm:$0x3]
  %v527 = vadd.f32 %v524, %v525
  %v529 = vsel %vm224, %v527, 0
  %531 = vmatprep.subr.mxu0 0.0
  %532 = vmatpush1.msra.mxu0 0.0
  %533 = vmatprep.subr.mxu0 0.0
  %534 = vmatpush1.msra.mxu0 0.0
  %535 = vmatprep.subr.mxu0 0.0
  %536 = vmatpush1.msra.mxu0 0.0
  %537 = vmatprep.subr.mxu0 0.0
  %538 = vmatpush1.msra.mxu0 0.0
  %539 = vmatprep.subr.mxu0 0.0
  %540 = vmatpush1.msra.mxu0 0.0
  %541 = vmatprep.subr.mxu0 0.0
  %542 = vmatpush1.msra.mxu0 0.0
  %543 = vmatprep.subr.mxu0 0.0
  %544 = vmatpush1.msra.mxu0 0.0
  %545 = vmatprep.subr.mxu0 0.0
  %546 = vmatpush1.msra.mxu0 0.0
  %547 = vmatprep.subr.mxu0 0.0
  %548 = vmatpush1.msra.mxu0 0.0
  %549 = vmatprep.subr.mxu0 0.0
  %550 = vmatpush1.msra.mxu0 0.0
  %551 = vmatprep.subr.mxu0 0.0
  %552 = vmatpush1.msra.mxu0 0.0
  %553 = vmatprep.subr.mxu0 0.0
  %554 = vmatpush1.msra.mxu0 0.0
  %555 = vmatprep.subr.mxu0 0.0
  %556 = vmatpush1.msra.mxu0 0.0
  %557 = vmatprep.subr.mxu0 0.0
  %558 = vmatpush1.msra.mxu0 0.0
  %559 = vmatprep.subr.mxu0 0.0
  %560 = vmatpush1.msra.mxu0 %v217
  %561 = vmatprep.subr.mxu0 0.0
  %562 = vmatpush1.msra.mxu0 %v216
  %563 = vmatprep.subr.mxu0 0.0
  %564 = vmatpush2.msra.mxu0 0.0
  %565 = vmatprep.subr.mxu0 0.0
  %566 = vmatpush2.msra.mxu0 0.0
  %567 = vmatprep.subr.mxu0 0.0
  %568 = vmatpush2.msra.mxu0 0.0
  %569 = vmatprep.subr.mxu0 0.0
  %570 = vmatpush2.msra.mxu0 0.0
  %571 = vmatprep.subr.mxu0 0.0
  %572 = vmatpush2.msra.mxu0 0.0
  %573 = vmatprep.subr.mxu0 0.0
  %574 = vmatpush2.msra.mxu0 0.0
  %575 = vmatprep.subr.mxu0 0.0
  %576 = vmatpush2.msra.mxu0 0.0
  %577 = vmatprep.subr.mxu0 0.0
  %578 = vmatpush2.msra.mxu0 0.0
  %579 = vmatprep.subr.mxu0 0.0
  %580 = vmatpush2.msra.mxu0 0.0
  %581 = vmatprep.subr.mxu0 0.0
  %582 = vmatpush2.msra.mxu0 0.0
  %583 = vmatprep.subr.mxu0 0.0
  %584 = vmatpush2.msra.mxu0 0.0
  %585 = vmatprep.subr.mxu0 0.0
  %586 = vmatpush2.msra.mxu0 0.0
  %587 = vmatprep.subr.mxu0 0.0
  %588 = vmatpush2.msra.mxu0 0.0
  %589 = vmatprep.subr.mxu0 0.0
  %590 = vmatpush2.msra.mxu0 0.0
  %591 = vmatprep.subr.mxu0 0.0
  %592 = vmatpush2.msra.mxu0 0.0
  %593 = vmatprep.subr.mxu0 0.0
  %594 = vmatpush2.msra.mxu0 0.0
  %595 = vmatprep.mubr.f32.mxu0 0.0
  %596 = vmatmul.mubr.f32.gmra.mxu0 %v529
  %v597 = vpop.f32.mrf.mxu0
  %v598 = vadd.f32 0.0, %v597
  %v599 = vpop.f32.mrf.mxu0
  %600 = vdwg.mxu0
  %v602 = vsel %vm224, %v524, 0
  %604 = vmatprep.subr.mxu0 0.0
  %605 = vmatpush1.msra.mxu0 0.0
  %606 = vmatprep.subr.mxu0 0.0
  %607 = vmatpush1.msra.mxu0 0.0
  %608 = vmatprep.subr.mxu0 0.0
  %609 = vmatpush1.msra.mxu0 0.0
  %610 = vmatprep.subr.mxu0 0.0
  %611 = vmatpush1.msra.mxu0 0.0
  %612 = vmatprep.subr.mxu0 0.0
  %613 = vmatpush1.msra.mxu0 0.0
  %614 = vmatprep.subr.mxu0 0.0
  %615 = vmatpush1.msra.mxu0 0.0
  %616 = vmatprep.subr.mxu0 0.0
  %617 = vmatpush1.msra.mxu0 0.0
  %618 = vmatprep.subr.mxu0 0.0
  %619 = vmatpush1.msra.mxu0 0.0
  %620 = vmatprep.subr.mxu0 0.0
  %621 = vmatpush1.msra.mxu0 0.0
  %622 = vmatprep.subr.mxu0 0.0
  %623 = vmatpush1.msra.mxu0 0.0
  %624 = vmatprep.subr.mxu0 0.0
  %625 = vmatpush1.msra.mxu0 0.0
  %626 = vmatprep.subr.mxu0 0.0
  %627 = vmatpush1.msra.mxu0 0.0
  %628 = vmatprep.subr.mxu0 0.0
  %629 = vmatpush1.msra.mxu0 0.0
  %630 = vmatprep.subr.mxu0 0.0
  %631 = vmatpush1.msra.mxu0 0.0
  %632 = vmatprep.subr.mxu0 0.0
  %633 = vmatpush1.msra.mxu0 %v303
  %634 = vmatprep.subr.mxu0 0.0
  %635 = vmatpush1.msra.mxu0 %v301
  %636 = vmatprep.subr.mxu0 0.0
  %637 = vmatpush2.msra.mxu0 0.0
  %638 = vmatprep.subr.mxu0 0.0
  %639 = vmatpush2.msra.mxu0 0.0
  %640 = vmatprep.subr.mxu0 0.0
  %641 = vmatpush2.msra.mxu0 0.0
  %642 = vmatprep.subr.mxu0 0.0
  %643 = vmatpush2.msra.mxu0 0.0
  %644 = vmatprep.subr.mxu0 0.0
  %645 = vmatpush2.msra.mxu0 0.0
  %646 = vmatprep.subr.mxu0 0.0
  %647 = vmatpush2.msra.mxu0 0.0
  %648 = vmatprep.subr.mxu0 0.0
  %649 = vmatpush2.msra.mxu0 0.0
  %650 = vmatprep.subr.mxu0 0.0
  %651 = vmatpush2.msra.mxu0 0.0
  %652 = vmatprep.subr.mxu0 0.0
  %653 = vmatpush2.msra.mxu0 0.0
  %654 = vmatprep.subr.mxu0 0.0
  %655 = vmatpush2.msra.mxu0 0.0
  %656 = vmatprep.subr.mxu0 0.0
  %657 = vmatpush2.msra.mxu0 0.0
  %658 = vmatprep.subr.mxu0 0.0
  %659 = vmatpush2.msra.mxu0 0.0
  %660 = vmatprep.subr.mxu0 0.0
  %661 = vmatpush2.msra.mxu0 0.0
  %662 = vmatprep.subr.mxu0 0.0
  %663 = vmatpush2.msra.mxu0 0.0
  %664 = vmatprep.subr.mxu0 0.0
  %665 = vmatpush2.msra.mxu0 0.0
  %666 = vmatprep.subr.mxu0 0.0
  %667 = vmatpush2.msra.mxu0 0.0
  %668 = vmatprep.mubr.f32.mxu0 0.0
  %669 = vmatmul.mubr.f32.gmra.mxu0 %v602
  %v670 = vpop.f32.mrf.mxu0
  %v671 = vadd.f32 0.0, %v670
  %v672 = vpop.f32.mrf.mxu0
  %673 = vdwg.mxu0
  %v675 = vsel %vm224, %v525, 0
  %677 = vmatprep.subr.mxu0 0.0
  %678 = vmatpush1.msra.mxu0 0.0
  %679 = vmatprep.subr.mxu0 0.0
  %680 = vmatpush1.msra.mxu0 0.0
  %681 = vmatprep.subr.mxu0 0.0
  %682 = vmatpush1.msra.mxu0 0.0
  %683 = vmatprep.subr.mxu0 0.0
  %684 = vmatpush1.msra.mxu0 0.0
  %685 = vmatprep.subr.mxu0 0.0
  %686 = vmatpush1.msra.mxu0 0.0
  %687 = vmatprep.subr.mxu0 0.0
  %688 = vmatpush1.msra.mxu0 0.0
  %689 = vmatprep.subr.mxu0 0.0
  %690 = vmatpush1.msra.mxu0 0.0
  %691 = vmatprep.subr.mxu0 0.0
  %692 = vmatpush1.msra.mxu0 0.0
  %693 = vmatprep.subr.mxu0 0.0
  %694 = vmatpush1.msra.mxu0 0.0
  %695 = vmatprep.subr.mxu0 0.0
  %696 = vmatpush1.msra.mxu0 0.0
  %697 = vmatprep.subr.mxu0 0.0
  %698 = vmatpush1.msra.mxu0 0.0
  %699 = vmatprep.subr.mxu0 0.0
  %700 = vmatpush1.msra.mxu0 0.0
  %701 = vmatprep.subr.mxu0 0.0
  %702 = vmatpush1.msra.mxu0 0.0
  %703 = vmatprep.subr.mxu0 0.0
  %704 = vmatpush1.msra.mxu0 0.0
  %705 = vmatprep.subr.mxu0 0.0
  %706 = vmatpush1.msra.mxu0 %v303
  %707 = vmatprep.subr.mxu0 0.0
  %708 = vmatpush1.msra.mxu0 %v301
  %709 = vmatprep.subr.mxu0 0.0
  %710 = vmatpush2.msra.mxu0 0.0
  %711 = vmatprep.subr.mxu0 0.0
  %712 = vmatpush2.msra.mxu0 0.0
  %713 = vmatprep.subr.mxu0 0.0
  %714 = vmatpush2.msra.mxu0 0.0
  %715 = vmatprep.subr.mxu0 0.0
  %716 = vmatpush2.msra.mxu0 0.0
  %717 = vmatprep.subr.mxu0 0.0
  %718 = vmatpush2.msra.mxu0 0.0
  %719 = vmatprep.subr.mxu0 0.0
  %720 = vmatpush2.msra.mxu0 0.0
  %721 = vmatprep.subr.mxu0 0.0
  %722 = vmatpush2.msra.mxu0 0.0
  %723 = vmatprep.subr.mxu0 0.0
  %724 = vmatpush2.msra.mxu0 0.0
  %725 = vmatprep.subr.mxu0 0.0
  %726 = vmatpush2.msra.mxu0 0.0
  %727 = vmatprep.subr.mxu0 0.0
  %728 = vmatpush2.msra.mxu0 0.0
  %729 = vmatprep.subr.mxu0 0.0
  %730 = vmatpush2.msra.mxu0 0.0
  %731 = vmatprep.subr.mxu0 0.0
  %732 = vmatpush2.msra.mxu0 0.0
  %733 = vmatprep.subr.mxu0 0.0
  %734 = vmatpush2.msra.mxu0 0.0
  %735 = vmatprep.subr.mxu0 0.0
  %736 = vmatpush2.msra.mxu0 0.0
  %737 = vmatprep.subr.mxu0 0.0
  %738 = vmatpush2.msra.mxu0 0.0
  %739 = vmatprep.subr.mxu0 0.0
  %740 = vmatpush2.msra.mxu0 0.0
  %741 = vmatprep.mubr.f32.mxu0 0.0
  %742 = vmatmul.mubr.f32.gmra.mxu0 %v675
  %v743 = vpop.f32.mrf.mxu0
  %v744 = vadd.f32 0.0, %v743
  %v745 = vpop.f32.mrf.mxu0
  %746 = vdwg.mxu0
  %v747 = vadd.f32 %v526, %v598
  %v748 = vxor.u32 %v747, 2147483648
  %v749 = vmul.f32 %v748, 1.442695
  %v750 = vpow.pop %v749
  %v751 = vadd.f32 %v750, 1.0
  %v752 = vrcp.pop %v751
  %v753 = vmul.f32 1.0, %v752
  %755 = vrot.lane.b32.xlu0 %v671, 16
  %v756 = vpop.permute.xlu0 %755
  %v758 = vadd.f32 %v526, %v756
  %v759 = vxor.u32 %v758, 2147483648
  %v760 = vmul.f32 %v759, 1.442695
  %v761 = vpow.pop %v760
  %v762 = vadd.f32 %v761, 1.0
  %v763 = vrcp.pop %v762
  %v764 = vmul.f32 1.0, %v763
  %766 = vrot.lane.b32.xlu0 %v744, 16
  %v767 = vpop.permute.xlu0 %766
  %v769 = vadd.f32 %v526, %v767
  %v770 = vxor.u32 %v769, 2147483648
  %v771 = vmul.f32 %v770, 1.442695
  %v772 = vpow.pop %v771
  %v773 = vadd.f32 %v772, 1.0
  %v774 = vrcp.pop %v773
  %v775 = vmul.f32 1.0, %v774
  %v776 = vtanh.pop %v747
  %778 = vrot.lane.b32.xlu0 %v776, 80
  %v779 = vpop.permute.xlu0 %778
  %v781 = vmul.f32 %v753, %v779
  %v782 = vmul.f32 %v764, %v524
  %784 = vrot.lane.b32.xlu0 %v782, 112
  %v785 = vpop.permute.xlu0 %784
  %v787 = vadd.f32 %v781, %v785
  %v788 = vmul.f32 %v775, %v525
  %790 = vrot.lane.b32.xlu0 %v788, 112
  %v791 = vpop.permute.xlu0 %790
  %v793 = vadd.f32 %v787, %v791
  %v794 = vtanh.pop %v793
  %796 = vrot.lane.b32.xlu0 %v794, 32
  %v797 = vpop.permute.xlu0 %796
  %v799 = vmul.f32 %v753, %v797
  %801 = vrot.lane.b32.xlu0 %v799, 96
  %v802 = vpop.permute.xlu0 %801
  %vm804 = vcmask 123904
  %805 = vst.msk [vmem:[#allocation2] sm:$0x3] %vm804, %v802
  %807 = vrot.lane.b32.xlu0 %v793, 16
  %v808 = vpop.permute.xlu0 %807
  %vm810 = vcmask 255104
  %811 = vst.msk [vmem:[#allocation2] sm:$0x3] %vm810, %v808
  %v812 = vadd.f32 %v598, %v123
  %v813 = vtanh.pop %v812
  %815 = vrot.lane.b32.xlu0 %v813, 80
  %v816 = vpop.permute.xlu0 %815
  %818 = vst.msk [vmem:[%s6] sm:$0x3] %vm804, %v816
  %v819 = vld [vmem:[#allocation2 + $0x6] sm:$0xf]
  %v820 = vld [vmem:[#allocation2 + $0xa] sm:$0xf]
  %v821 = vld [vmem:[#allocation3 + $0x2] sm:$0xf]
  %v822 = vadd.f32 %v819, %v820
  %824 = vrot.lane.b32.xlu0 %v822, 96
  %v825 = vpop.permute.xlu0 %824
  %v826 = vsel %vm224, %v825, 0
  %828 = vmatprep.subr.mxu0 0.0
  %829 = vmatpush1.msra.mxu0 0.0
  %830 = vmatprep.subr.mxu0 0.0
  %831 = vmatpush1.msra.mxu0 0.0
  %832 = vmatprep.subr.mxu0 0.0
  %833 = vmatpush1.msra.mxu0 0.0
  %834 = vmatprep.subr.mxu0 0.0
  %835 = vmatpush1.msra.mxu0 0.0
  %836 = vmatprep.subr.mxu0 0.0
  %837 = vmatpush1.msra.mxu0 0.0
  %838 = vmatprep.subr.mxu0 0.0
  %839 = vmatpush1.msra.mxu0 0.0
  %840 = vmatprep.subr.mxu0 0.0
  %841 = vmatpush1.msra.mxu0 0.0
  %842 = vmatprep.subr.mxu0 0.0
  %843 = vmatpush1.msra.mxu0 0.0
  %844 = vmatprep.subr.mxu0 0.0
  %845 = vmatpush1.msra.mxu0 0.0
  %846 = vmatprep.subr.mxu0 0.0
  %847 = vmatpush1.msra.mxu0 0.0
  %848 = vmatprep.subr.mxu0 0.0
  %849 = vmatpush1.msra.mxu0 0.0
  %850 = vmatprep.subr.mxu0 0.0
  %851 = vmatpush1.msra.mxu0 0.0
  %852 = vmatprep.subr.mxu0 0.0
  %853 = vmatpush1.msra.mxu0 0.0
  %854 = vmatprep.subr.mxu0 0.0
  %855 = vmatpush1.msra.mxu0 0.0
  %856 = vmatprep.subr.mxu0 0.0
  %857 = vmatpush1.msra.mxu0 %v219
  %858 = vmatprep.subr.mxu0 0.0
  %859 = vmatpush1.msra.mxu0 %v218
  %860 = vmatprep.subr.mxu0 0.0
  %861 = vmatpush2.msra.mxu0 0.0
  %862 = vmatprep.subr.mxu0 0.0
  %863 = vmatpush2.msra.mxu0 0.0
  %864 = vmatprep.subr.mxu0 0.0
  %865 = vmatpush2.msra.mxu0 0.0
  %866 = vmatprep.subr.mxu0 0.0
  %867 = vmatpush2.msra.mxu0 0.0
  %868 = vmatprep.subr.mxu0 0.0
  %869 = vmatpush2.msra.mxu0 0.0
  %870 = vmatprep.subr.mxu0 0.0
  %871 = vmatpush2.msra.mxu0 0.0
  %872 = vmatprep.subr.mxu0 0.0
  %873 = vmatpush2.msra.mxu0 0.0
  %874 = vmatprep.subr.mxu0 0.0
  %875 = vmatpush2.msra.mxu0 0.0
  %876 = vmatprep.subr.mxu0 0.0
  %877 = vmatpush2.msra.mxu0 0.0
  %878 = vmatprep.subr.mxu0 0.0
  %879 = vmatpush2.msra.mxu0 0.0
  %880 = vmatprep.subr.mxu0 0.0
  %881 = vmatpush2.msra.mxu0 0.0
  %882 = vmatprep.subr.mxu0 0.0
  %883 = vmatpush2.msra.mxu0 0.0
  %884 = vmatprep.subr.mxu0 0.0
  %885 = vmatpush2.msra.mxu0 0.0
  %886 = vmatprep.subr.mxu0 0.0
  %887 = vmatpush2.msra.mxu0 0.0
  %888 = vmatprep.subr.mxu0 0.0
  %889 = vmatpush2.msra.mxu0 0.0
  %890 = vmatprep.subr.mxu0 0.0
  %891 = vmatpush2.msra.mxu0 0.0
  %892 = vmatprep.mubr.f32.mxu0 0.0
  %893 = vmatmul.mubr.f32.gmra.mxu0 %v826
  %v894 = vpop.f32.mrf.mxu0
  %v895 = vadd.f32 0.0, %v894
  %v896 = vpop.f32.mrf.mxu0
  %897 = vdwg.mxu0
  %899 = vrot.lane.b32.xlu0 %v819, 96
  %v900 = vpop.permute.xlu0 %899
  %903 = vrot.lane.b32.xlu0 %v218, 112
  %v904 = vpop.permute.xlu0 %903
  %905 = vrot.lane.b32.xlu0 %v219, 112
  %v906 = vpop.permute.xlu0 %905
  %v909 = vsel %vm224, %v900, 0
  %911 = vmatprep.subr.mxu0 0.0
  %912 = vmatpush1.msra.mxu0 0.0
  %913 = vmatprep.subr.mxu0 0.0
  %914 = vmatpush1.msra.mxu0 0.0
  %915 = vmatprep.subr.mxu0 0.0
  %916 = vmatpush1.msra.mxu0 0.0
  %917 = vmatprep.subr.mxu0 0.0
  %918 = vmatpush1.msra.mxu0 0.0
  %919 = vmatprep.subr.mxu0 0.0
  %920 = vmatpush1.msra.mxu0 0.0
  %921 = vmatprep.subr.mxu0 0.0
  %922 = vmatpush1.msra.mxu0 0.0
  %923 = vmatprep.subr.mxu0 0.0
  %924 = vmatpush1.msra.mxu0 0.0
  %925 = vmatprep.subr.mxu0 0.0
  %926 = vmatpush1.msra.mxu0 0.0
  %927 = vmatprep.subr.mxu0 0.0
  %928 = vmatpush1.msra.mxu0 0.0
  %929 = vmatprep.subr.mxu0 0.0
  %930 = vmatpush1.msra.mxu0 0.0
  %931 = vmatprep.subr.mxu0 0.0
  %932 = vmatpush1.msra.mxu0 0.0
  %933 = vmatprep.subr.mxu0 0.0
  %934 = vmatpush1.msra.mxu0 0.0
  %935 = vmatprep.subr.mxu0 0.0
  %936 = vmatpush1.msra.mxu0 0.0
  %937 = vmatprep.subr.mxu0 0.0
  %938 = vmatpush1.msra.mxu0 0.0
  %939 = vmatprep.subr.mxu0 0.0
  %940 = vmatpush1.msra.mxu0 %v906
  %941 = vmatprep.subr.mxu0 0.0
  %942 = vmatpush1.msra.mxu0 %v904
  %943 = vmatprep.subr.mxu0 0.0
  %944 = vmatpush2.msra.mxu0 0.0
  %945 = vmatprep.subr.mxu0 0.0
  %946 = vmatpush2.msra.mxu0 0.0
  %947 = vmatprep.subr.mxu0 0.0
  %948 = vmatpush2.msra.mxu0 0.0
  %949 = vmatprep.subr.mxu0 0.0
  %950 = vmatpush2.msra.mxu0 0.0
  %951 = vmatprep.subr.mxu0 0.0
  %952 = vmatpush2.msra.mxu0 0.0
  %953 = vmatprep.subr.mxu0 0.0
  %954 = vmatpush2.msra.mxu0 0.0
  %955 = vmatprep.subr.mxu0 0.0
  %956 = vmatpush2.msra.mxu0 0.0
  %957 = vmatprep.subr.mxu0 0.0
  %958 = vmatpush2.msra.mxu0 0.0
  %959 = vmatprep.subr.mxu0 0.0
  %960 = vmatpush2.msra.mxu0 0.0
  %961 = vmatprep.subr.mxu0 0.0
  %962 = vmatpush2.msra.mxu0 0.0
  %963 = vmatprep.subr.mxu0 0.0
  %964 = vmatpush2.msra.mxu0 0.0
  %965 = vmatprep.subr.mxu0 0.0
  %966 = vmatpush2.msra.mxu0 0.0
  %967 = vmatprep.subr.mxu0 0.0
  %968 = vmatpush2.msra.mxu0 0.0
  %969 = vmatprep.subr.mxu0 0.0
  %970 = vmatpush2.msra.mxu0 0.0
  %971 = vmatprep.subr.mxu0 0.0
  %972 = vmatpush2.msra.mxu0 0.0
  %973 = vmatprep.subr.mxu0 0.0
  %974 = vmatpush2.msra.mxu0 0.0
  %975 = vmatprep.mubr.f32.mxu0 0.0
  %976 = vmatmul.mubr.f32.gmra.mxu0 %v909
  %v977 = vpop.f32.mrf.mxu0
  %v978 = vadd.f32 0.0, %v977
  %v979 = vpop.f32.mrf.mxu0
  %980 = vdwg.mxu0
  %982 = vrot.lane.b32.xlu0 %v820, 96
  %v983 = vpop.permute.xlu0 %982
  %v984 = vsel %vm224, %v983, 0
  %986 = vmatprep.subr.mxu0 0.0
  %987 = vmatpush1.msra.mxu0 0.0
  %988 = vmatprep.subr.mxu0 0.0
  %989 = vmatpush1.msra.mxu0 0.0
  %990 = vmatprep.subr.mxu0 0.0
  %991 = vmatpush1.msra.mxu0 0.0
  %992 = vmatprep.subr.mxu0 0.0
  %993 = vmatpush1.msra.mxu0 0.0
  %994 = vmatprep.subr.mxu0 0.0
  %995 = vmatpush1.msra.mxu0 0.0
  %996 = vmatprep.subr.mxu0 0.0
  %997 = vmatpush1.msra.mxu0 0.0
  %998 = vmatprep.subr.mxu0 0.0
  %999 = vmatpush1.msra.mxu0 0.0
  %1000 = vmatprep.subr.mxu0 0.0
  %1001 = vmatpush1.msra.mxu0 0.0
  %1002 = vmatprep.subr.mxu0 0.0
  %1003 = vmatpush1.msra.mxu0 0.0
  %1004 = vmatprep.subr.mxu0 0.0
  %1005 = vmatpush1.msra.mxu0 0.0
  %1006 = vmatprep.subr.mxu0 0.0
  %1007 = vmatpush1.msra.mxu0 0.0
  %1008 = vmatprep.subr.mxu0 0.0
  %1009 = vmatpush1.msra.mxu0 0.0
  %1010 = vmatprep.subr.mxu0 0.0
  %1011 = vmatpush1.msra.mxu0 0.0
  %1012 = vmatprep.subr.mxu0 0.0
  %1013 = vmatpush1.msra.mxu0 0.0
  %1014 = vmatprep.subr.mxu0 0.0
  %1015 = vmatpush1.msra.mxu0 %v906
  %1016 = vmatprep.subr.mxu0 0.0
  %1017 = vmatpush1.msra.mxu0 %v904
  %1018 = vmatprep.subr.mxu0 0.0
  %1019 = vmatpush2.msra.mxu0 0.0
  %1020 = vmatprep.subr.mxu0 0.0
  %1021 = vmatpush2.msra.mxu0 0.0
  %1022 = vmatprep.subr.mxu0 0.0
  %1023 = vmatpush2.msra.mxu0 0.0
  %1024 = vmatprep.subr.mxu0 0.0
  %1025 = vmatpush2.msra.mxu0 0.0
  %1026 = vmatprep.subr.mxu0 0.0
  %1027 = vmatpush2.msra.mxu0 0.0
  %1028 = vmatprep.subr.mxu0 0.0
  %1029 = vmatpush2.msra.mxu0 0.0
  %1030 = vmatprep.subr.mxu0 0.0
  %1031 = vmatpush2.msra.mxu0 0.0
  %1032 = vmatprep.subr.mxu0 0.0
  %1033 = vmatpush2.msra.mxu0 0.0
  %1034 = vmatprep.subr.mxu0 0.0
  %1035 = vmatpush2.msra.mxu0 0.0
  %1036 = vmatprep.subr.mxu0 0.0
  %1037 = vmatpush2.msra.mxu0 0.0
  %1038 = vmatprep.subr.mxu0 0.0
  %1039 = vmatpush2.msra.mxu0 0.0
  %1040 = vmatprep.subr.mxu0 0.0
  %1041 = vmatpush2.msra.mxu0 0.0
  %1042 = vmatprep.subr.mxu0 0.0
  %1043 = vmatpush2.msra.mxu0 0.0
  %1044 = vmatprep.subr.mxu0 0.0
  %1045 = vmatpush2.msra.mxu0 0.0
  %1046 = vmatprep.subr.mxu0 0.0
  %1047 = vmatpush2.msra.mxu0 0.0
  %1048 = vmatprep.subr.mxu0 0.0
  %1049 = vmatpush2.msra.mxu0 0.0
  %1050 = vmatprep.mubr.f32.mxu0 0.0
  %1051 = vmatmul.mubr.f32.gmra.mxu0 %v984
  %v1052 = vpop.f32.mrf.mxu0
  %v1053 = vadd.f32 0.0, %v1052
  %v1054 = vpop.f32.mrf.mxu0
  %1055 = vdwg.mxu0
  %1057 = vrot.lane.b32.xlu0 %v895, 64
  %v1058 = vpop.permute.xlu0 %1057
  %v1060 = vadd.f32 %v821, %v1058
  %v1061 = vxor.u32 %v1060, 2147483648
  %v1062 = vmul.f32 %v1061, 1.442695
  %v1063 = vpow.pop %v1062
  %v1064 = vadd.f32 %v1063, 1.0
  %v1065 = vrcp.pop %v1064
  %v1066 = vmul.f32 1.0, %v1065
  %1068 = vrot.lane.b32.xlu0 %v978, 80
  %v1069 = vpop.permute.xlu0 %1068
  %v1071 = vadd.f32 %v821, %v1069
  %v1072 = vxor.u32 %v1071, 2147483648
  %v1073 = vmul.f32 %v1072, 1.442695
  %v1074 = vpow.pop %v1073
  %v1075 = vadd.f32 %v1074, 1.0
  %v1076 = vrcp.pop %v1075
  %v1077 = vmul.f32 1.0, %v1076
  %1079 = vrot.lane.b32.xlu0 %v1053, 80
  %v1080 = vpop.permute.xlu0 %1079
  %v1082 = vadd.f32 %v821, %v1080
  %v1083 = vxor.u32 %v1082, 2147483648
  %v1084 = vmul.f32 %v1083, 1.442695
  %v1085 = vpow.pop %v1084
  %v1086 = vadd.f32 %v1085, 1.0
  %v1087 = vrcp.pop %v1086
  %v1088 = vmul.f32 1.0, %v1087
  %v1089 = vtanh.pop %v1060
  %1091 = vrot.lane.b32.xlu0 %v1089, 80
  %v1092 = vpop.permute.xlu0 %1091
  %v1094 = vmul.f32 %v1066, %v1092
  %1095 = vrot.lane.b32.xlu0 %v819, 32
  %v1096 = vpop.permute.xlu0 %1095
  %v1098 = vmul.f32 %v1077, %v1096
  %1100 = vrot.lane.b32.xlu0 %v1098, 112
  %v1101 = vpop.permute.xlu0 %1100
  %v1103 = vadd.f32 %v1094, %v1101
  %1104 = vrot.lane.b32.xlu0 %v820, 32
  %v1105 = vpop.permute.xlu0 %1104
  %v1107 = vmul.f32 %v1088, %v1105
  %1109 = vrot.lane.b32.xlu0 %v1107, 112
  %v1110 = vpop.permute.xlu0 %1109
  %v1112 = vadd.f32 %v1103, %v1110
  %v1113 = vtanh.pop %v1112
  %1115 = vrot.lane.b32.xlu0 %v1113, 32
  %v1116 = vpop.permute.xlu0 %1115
  %v1118 = vmul.f32 %v1066, %v1116
  %1120 = vrot.lane.b32.xlu0 %v1118, 64
  %v1121 = vpop.permute.xlu0 %1120
  %vm1123 = vcmask 388352
  %1124 = vst.msk [vmem:[#allocation2 + $0x2] sm:$0xf] %vm1123, %v1121
  %1126 = vrot.lane.b32.xlu0 %v1112, 112
  %v1127 = vpop.permute.xlu0 %1126
  %vm1129 = vcmask 519552
  %1130 = vst.msk [vmem:[#allocation2 + $0x2] sm:$0xf] %vm1129, %v1127
  %1131 = vrot.lane.b32.xlu0 %v123, 64
  %v1132 = vpop.permute.xlu0 %1131
  %v1134 = vadd.f32 %v895, %v1132
  %v1135 = vtanh.pop %v1134
  %1137 = vrot.lane.b32.xlu0 %v1135, 96
  %v1138 = vpop.permute.xlu0 %1137
  %1140 = vst.msk [vmem:[%s6 + $0x2] sm:$0xf] %vm515, %v1138
  %v1141 = vld [vmem:[#allocation2 + $0x2] sm:$0x3]
  %v1142 = vld [vmem:[#allocation2 + $0x4] sm:$0x3]
  %v1143 = vld [vmem:[#allocation3] sm:$0x3]
  %v1144 = vadd.f32 %v1141, %v1142
  %1146 = vrot.lane.b32.xlu0 %v1144, 96
  %v1147 = vpop.permute.xlu0 %1146
  %v1148 = vsel %vm224, %v1147, 0
  %1150 = vmatprep.subr.mxu0 0.0
  %1151 = vmatpush1.msra.mxu0 0.0
  %1152 = vmatprep.subr.mxu0 0.0
  %1153 = vmatpush1.msra.mxu0 0.0
  %1154 = vmatprep.subr.mxu0 0.0
  %1155 = vmatpush1.msra.mxu0 0.0
  %1156 = vmatprep.subr.mxu0 0.0
  %1157 = vmatpush1.msra.mxu0 0.0
  %1158 = vmatprep.subr.mxu0 0.0
  %1159 = vmatpush1.msra.mxu0 0.0
  %1160 = vmatprep.subr.mxu0 0.0
  %1161 = vmatpush1.msra.mxu0 0.0
  %1162 = vmatprep.subr.mxu0 0.0
  %1163 = vmatpush1.msra.mxu0 0.0
  %1164 = vmatprep.subr.mxu0 0.0
  %1165 = vmatpush1.msra.mxu0 0.0
  %1166 = vmatprep.subr.mxu0 0.0
  %1167 = vmatpush1.msra.mxu0 0.0
  %1168 = vmatprep.subr.mxu0 0.0
  %1169 = vmatpush1.msra.mxu0 0.0
  %1170 = vmatprep.subr.mxu0 0.0
  %1171 = vmatpush1.msra.mxu0 0.0
  %1172 = vmatprep.subr.mxu0 0.0
  %1173 = vmatpush1.msra.mxu0 0.0
  %1174 = vmatprep.subr.mxu0 0.0
  %1175 = vmatpush1.msra.mxu0 0.0
  %1176 = vmatprep.subr.mxu0 0.0
  %1177 = vmatpush1.msra.mxu0 0.0
  %1178 = vmatprep.subr.mxu0 0.0
  %1179 = vmatpush1.msra.mxu0 %v219
  %1180 = vmatprep.subr.mxu0 0.0
  %1181 = vmatpush1.msra.mxu0 %v218
  %1182 = vmatprep.subr.mxu0 0.0
  %1183 = vmatpush2.msra.mxu0 0.0
  %1184 = vmatprep.subr.mxu0 0.0
  %1185 = vmatpush2.msra.mxu0 0.0
  %1186 = vmatprep.subr.mxu0 0.0
  %1187 = vmatpush2.msra.mxu0 0.0
  %1188 = vmatprep.subr.mxu0 0.0
  %1189 = vmatpush2.msra.mxu0 0.0
  %1190 = vmatprep.subr.mxu0 0.0
  %1191 = vmatpush2.msra.mxu0 0.0
  %1192 = vmatprep.subr.mxu0 0.0
  %1193 = vmatpush2.msra.mxu0 0.0
  %1194 = vmatprep.subr.mxu0 0.0
  %1195 = vmatpush2.msra.mxu0 0.0
  %1196 = vmatprep.subr.mxu0 0.0
  %1197 = vmatpush2.msra.mxu0 0.0
  %1198 = vmatprep.subr.mxu0 0.0
  %1199 = vmatpush2.msra.mxu0 0.0
  %1200 = vmatprep.subr.mxu0 0.0
  %1201 = vmatpush2.msra.mxu0 0.0
  %1202 = vmatprep.subr.mxu0 0.0
  %1203 = vmatpush2.msra.mxu0 0.0
  %1204 = vmatprep.subr.mxu0 0.0
  %1205 = vmatpush2.msra.mxu0 0.0
  %1206 = vmatprep.subr.mxu0 0.0
  %1207 = vmatpush2.msra.mxu0 0.0
  %1208 = vmatprep.subr.mxu0 0.0
  %1209 = vmatpush2.msra.mxu0 0.0
  %1210 = vmatprep.subr.mxu0 0.0
  %1211 = vmatpush2.msra.mxu0 0.0
  %1212 = vmatprep.subr.mxu0 0.0
  %1213 = vmatpush2.msra.mxu0 0.0
  %1214 = vmatprep.mubr.f32.mxu0 0.0
  %1215 = vmatmul.mubr.f32.gmra.mxu0 %v1148
  %v1216 = vpop.f32.mrf.mxu0
  %v1217 = vadd.f32 0.0, %v1216
  %v1218 = vpop.f32.mrf.mxu0
  %1219 = vdwg.mxu0
  %1221 = vrot.lane.b32.xlu0 %v1141, 96
  %v1222 = vpop.permute.xlu0 %1221
  %v1223 = vsel %vm224, %v1222, 0
  %1225 = vmatprep.subr.mxu0 0.0
  %1226 = vmatpush1.msra.mxu0 0.0
  %1227 = vmatprep.subr.mxu0 0.0
  %1228 = vmatpush1.msra.mxu0 0.0
  %1229 = vmatprep.subr.mxu0 0.0
  %1230 = vmatpush1.msra.mxu0 0.0
  %1231 = vmatprep.subr.mxu0 0.0
  %1232 = vmatpush1.msra.mxu0 0.0
  %1233 = vmatprep.subr.mxu0 0.0
  %1234 = vmatpush1.msra.mxu0 0.0
  %1235 = vmatprep.subr.mxu0 0.0
  %1236 = vmatpush1.msra.mxu0 0.0
  %1237 = vmatprep.subr.mxu0 0.0
  %1238 = vmatpush1.msra.mxu0 0.0
  %1239 = vmatprep.subr.mxu0 0.0
  %1240 = vmatpush1.msra.mxu0 0.0
  %1241 = vmatprep.subr.mxu0 0.0
  %1242 = vmatpush1.msra.mxu0 0.0
  %1243 = vmatprep.subr.mxu0 0.0
  %1244 = vmatpush1.msra.mxu0 0.0
  %1245 = vmatprep.subr.mxu0 0.0
  %1246 = vmatpush1.msra.mxu0 0.0
  %1247 = vmatprep.subr.mxu0 0.0
  %1248 = vmatpush1.msra.mxu0 0.0
  %1249 = vmatprep.subr.mxu0 0.0
  %1250 = vmatpush1.msra.mxu0 0.0
  %1251 = vmatprep.subr.mxu0 0.0
  %1252 = vmatpush1.msra.mxu0 0.0
  %1253 = vmatprep.subr.mxu0 0.0
  %1254 = vmatpush1.msra.mxu0 %v906
  %1255 = vmatprep.subr.mxu0 0.0
  %1256 = vmatpush1.msra.mxu0 %v904
  %1257 = vmatprep.subr.mxu0 0.0
  %1258 = vmatpush2.msra.mxu0 0.0
  %1259 = vmatprep.subr.mxu0 0.0
  %1260 = vmatpush2.msra.mxu0 0.0
  %1261 = vmatprep.subr.mxu0 0.0
  %1262 = vmatpush2.msra.mxu0 0.0
  %1263 = vmatprep.subr.mxu0 0.0
  %1264 = vmatpush2.msra.mxu0 0.0
  %1265 = vmatprep.subr.mxu0 0.0
  %1266 = vmatpush2.msra.mxu0 0.0
  %1267 = vmatprep.subr.mxu0 0.0
  %1268 = vmatpush2.msra.mxu0 0.0
  %1269 = vmatprep.subr.mxu0 0.0
  %1270 = vmatpush2.msra.mxu0 0.0
  %1271 = vmatprep.subr.mxu0 0.0
  %1272 = vmatpush2.msra.mxu0 0.0
  %1273 = vmatprep.subr.mxu0 0.0
  %1274 = vmatpush2.msra.mxu0 0.0
  %1275 = vmatprep.subr.mxu0 0.0
  %1276 = vmatpush2.msra.mxu0 0.0
  %1277 = vmatprep.subr.mxu0 0.0
  %1278 = vmatpush2.msra.mxu0 0.0
  %1279 = vmatprep.subr.mxu0 0.0
  %1280 = vmatpush2.msra.mxu0 0.0
  %1281 = vmatprep.subr.mxu0 0.0
  %1282 = vmatpush2.msra.mxu0 0.0
  %1283 = vmatprep.subr.mxu0 0.0
  %1284 = vmatpush2.msra.mxu0 0.0
  %1285 = vmatprep.subr.mxu0 0.0
  %1286 = vmatpush2.msra.mxu0 0.0
  %1287 = vmatprep.subr.mxu0 0.0
  %1288 = vmatpush2.msra.mxu0 0.0
  %1289 = vmatprep.mubr.f32.mxu0 0.0
  %1290 = vmatmul.mubr.f32.gmra.mxu0 %v1223
  %v1291 = vpop.f32.mrf.mxu0
  %v1292 = vadd.f32 0.0, %v1291
  %v1293 = vpop.f32.mrf.mxu0
  %1294 = vdwg.mxu0
  %1296 = vrot.lane.b32.xlu0 %v1142, 96
  %v1297 = vpop.permute.xlu0 %1296
  %v1298 = vsel %vm224, %v1297, 0
  %1300 = vmatprep.subr.mxu0 0.0
  %1301 = vmatpush1.msra.mxu0 0.0
  %1302 = vmatprep.subr.mxu0 0.0
  %1303 = vmatpush1.msra.mxu0 0.0
  %1304 = vmatprep.subr.mxu0 0.0
  %1305 = vmatpush1.msra.mxu0 0.0
  %1306 = vmatprep.subr.mxu0 0.0
  %1307 = vmatpush1.msra.mxu0 0.0
  %1308 = vmatprep.subr.mxu0 0.0
  %1309 = vmatpush1.msra.mxu0 0.0
  %1310 = vmatprep.subr.mxu0 0.0
  %1311 = vmatpush1.msra.mxu0 0.0
  %1312 = vmatprep.subr.mxu0 0.0
  %1313 = vmatpush1.msra.mxu0 0.0
  %1314 = vmatprep.subr.mxu0 0.0
  %1315 = vmatpush1.msra.mxu0 0.0
  %1316 = vmatprep.subr.mxu0 0.0
  %1317 = vmatpush1.msra.mxu0 0.0
  %1318 = vmatprep.subr.mxu0 0.0
  %1319 = vmatpush1.msra.mxu0 0.0
  %1320 = vmatprep.subr.mxu0 0.0
  %1321 = vmatpush1.msra.mxu0 0.0
  %1322 = vmatprep.subr.mxu0 0.0
  %1323 = vmatpush1.msra.mxu0 0.0
  %1324 = vmatprep.subr.mxu0 0.0
  %1325 = vmatpush1.msra.mxu0 0.0
  %1326 = vmatprep.subr.mxu0 0.0
  %1327 = vmatpush1.msra.mxu0 0.0
  %1328 = vmatprep.subr.mxu0 0.0
  %1329 = vmatpush1.msra.mxu0 %v906
  %1330 = vmatprep.subr.mxu0 0.0
  %1331 = vmatpush1.msra.mxu0 %v904
  %1332 = vmatprep.subr.mxu0 0.0
  %1333 = vmatpush2.msra.mxu0 0.0
  %1334 = vmatprep.subr.mxu0 0.0
  %1335 = vmatpush2.msra.mxu0 0.0
  %1336 = vmatprep.subr.mxu0 0.0
  %1337 = vmatpush2.msra.mxu0 0.0
  %1338 = vmatprep.subr.mxu0 0.0
  %1339 = vmatpush2.msra.mxu0 0.0
  %1340 = vmatprep.subr.mxu0 0.0
  %1341 = vmatpush2.msra.mxu0 0.0
  %1342 = vmatprep.subr.mxu0 0.0
  %1343 = vmatpush2.msra.mxu0 0.0
  %1344 = vmatprep.subr.mxu0 0.0
  %1345 = vmatpush2.msra.mxu0 0.0
  %1346 = vmatprep.subr.mxu0 0.0
  %1347 = vmatpush2.msra.mxu0 0.0
  %1348 = vmatprep.subr.mxu0 0.0
  %1349 = vmatpush2.msra.mxu0 0.0
  %1350 = vmatprep.subr.mxu0 0.0
  %1351 = vmatpush2.msra.mxu0 0.0
  %1352 = vmatprep.subr.mxu0 0.0
  %1353 = vmatpush2.msra.mxu0 0.0
  %1354 = vmatprep.subr.mxu0 0.0
  %1355 = vmatpush2.msra.mxu0 0.0
  %1356 = vmatprep.subr.mxu0 0.0
  %1357 = vmatpush2.msra.mxu0 0.0
  %1358 = vmatprep.subr.mxu0 0.0
  %1359 = vmatpush2.msra.mxu0 0.0
  %1360 = vmatprep.subr.mxu0 0.0
  %1361 = vmatpush2.msra.mxu0 0.0
  %1362 = vmatprep.subr.mxu0 0.0
  %1363 = vmatpush2.msra.mxu0 0.0
  %1364 = vmatprep.mubr.f32.mxu0 0.0
  %1365 = vmatmul.mubr.f32.gmra.mxu0 %v1298
  %v1366 = vpop.f32.mrf.mxu0
  %v1367 = vadd.f32 0.0, %v1366
  %v1368 = vpop.f32.mrf.mxu0
  %1369 = vdwg.mxu0
  %1371 = vrot.lane.b32.xlu0 %v1217, 64
  %v1372 = vpop.permute.xlu0 %1371
  %v1374 = vadd.f32 %v1143, %v1372
  %v1375 = vxor.u32 %v1374, 2147483648
  %v1376 = vmul.f32 %v1375, 1.442695
  %v1377 = vpow.pop %v1376
  %v1378 = vadd.f32 %v1377, 1.0
  %v1379 = vrcp.pop %v1378
  %v1380 = vmul.f32 1.0, %v1379
  %1382 = vrot.lane.b32.xlu0 %v1292, 80
  %v1383 = vpop.permute.xlu0 %1382
  %v1385 = vadd.f32 %v1143, %v1383
  %v1386 = vxor.u32 %v1385, 2147483648
  %v1387 = vmul.f32 %v1386, 1.442695
  %v1388 = vpow.pop %v1387
  %v1389 = vadd.f32 %v1388, 1.0
  %v1390 = vrcp.pop %v1389
  %v1391 = vmul.f32 1.0, %v1390
  %1393 = vrot.lane.b32.xlu0 %v1367, 80
  %v1394 = vpop.permute.xlu0 %1393
  %v1396 = vadd.f32 %v1143, %v1394
  %v1397 = vxor.u32 %v1396, 2147483648
  %v1398 = vmul.f32 %v1397, 1.442695
  %v1399 = vpow.pop %v1398
  %v1400 = vadd.f32 %v1399, 1.0
  %v1401 = vrcp.pop %v1400
  %v1402 = vmul.f32 1.0, %v1401
  %v1403 = vtanh.pop %v1374
  %1405 = vrot.lane.b32.xlu0 %v1403, 80
  %v1406 = vpop.permute.xlu0 %1405
  %v1408 = vmul.f32 %v1380, %v1406
  %1409 = vrot.lane.b32.xlu0 %v1141, 32
  %v1410 = vpop.permute.xlu0 %1409
  %v1412 = vmul.f32 %v1391, %v1410
  %1414 = vrot.lane.b32.xlu0 %v1412, 112
  %v1415 = vpop.permute.xlu0 %1414
  %v1417 = vadd.f32 %v1408, %v1415
  %1418 = vrot.lane.b32.xlu0 %v1142, 32
  %v1419 = vpop.permute.xlu0 %1418
  %v1421 = vmul.f32 %v1402, %v1419
  %1423 = vrot.lane.b32.xlu0 %v1421, 112
  %v1424 = vpop.permute.xlu0 %1423
  %v1426 = vadd.f32 %v1417, %v1424
  %v1427 = vtanh.pop %v1426
  %1429 = vrot.lane.b32.xlu0 %v1427, 32
  %v1430 = vpop.permute.xlu0 %1429
  %v1432 = vmul.f32 %v1380, %v1430
  %1434 = vrot.lane.b32.xlu0 %v1432, 64
  %v1435 = vpop.permute.xlu0 %1434
  %vm1437 = vcmask 386304
  %1438 = vst.msk [vmem:[#allocation2] sm:$0x3] %vm1437, %v1435
  %1440 = vrot.lane.b32.xlu0 %v1426, 112
  %v1441 = vpop.permute.xlu0 %1440
  %vm1443 = vcmask 517504
  %1444 = vst.msk [vmem:[#allocation2] sm:$0x3] %vm1443, %v1441
  %v1445 = vadd.f32 %v1217, %v1132
  %v1446 = vtanh.pop %v1445
  %1448 = vrot.lane.b32.xlu0 %v1446, 96
  %v1449 = vpop.permute.xlu0 %1448
  %1451 = vst.msk [vmem:[%s6] sm:$0x3] %vm810, %v1449
  %v1452 = vld [vmem:[#allocation2 + $0x2] sm:$0x3]
  %v1453 = vld [vmem:[#allocation2 + $0x4] sm:$0x3]
  %v1454 = vld [vmem:[#allocation3] sm:$0x3]
  %1456 = vrot.lane.b32.xlu0 %v1452, 96
  %v1457 = vpop.permute.xlu0 %1456
  %v1458 = vsel %vm224, %v1457, 0
  %1460 = vmatprep.subr.mxu0 0.0
  %1461 = vmatpush1.msra.mxu0 0.0
  %1462 = vmatprep.subr.mxu0 0.0
  %1463 = vmatpush1.msra.mxu0 0.0
  %1464 = vmatprep.subr.mxu0 0.0
  %1465 = vmatpush1.msra.mxu0 0.0
  %1466 = vmatprep.subr.mxu0 0.0
  %1467 = vmatpush1.msra.mxu0 0.0
  %1468 = vmatprep.subr.mxu0 0.0
  %1469 = vmatpush1.msra.mxu0 0.0
  %1470 = vmatprep.subr.mxu0 0.0
  %1471 = vmatpush1.msra.mxu0 0.0
  %1472 = vmatprep.subr.mxu0 0.0
  %1473 = vmatpush1.msra.mxu0 0.0
  %1474 = vmatprep.subr.mxu0 0.0
  %1475 = vmatpush1.msra.mxu0 0.0
  %1476 = vmatprep.subr.mxu0 0.0
  %1477 = vmatpush1.msra.mxu0 0.0
  %1478 = vmatprep.subr.mxu0 0.0
  %1479 = vmatpush1.msra.mxu0 0.0
  %1480 = vmatprep.subr.mxu0 0.0
  %1481 = vmatpush1.msra.mxu0 0.0
  %1482 = vmatprep.subr.mxu0 0.0
  %1483 = vmatpush1.msra.mxu0 0.0
  %1484 = vmatprep.subr.mxu0 0.0
  %1485 = vmatpush1.msra.mxu0 0.0
  %1486 = vmatprep.subr.mxu0 0.0
  %1487 = vmatpush1.msra.mxu0 0.0
  %1488 = vmatprep.subr.mxu0 0.0
  %1489 = vmatpush1.msra.mxu0 %v219
  %1490 = vmatprep.subr.mxu0 0.0
  %1491 = vmatpush1.msra.mxu0 %v218
  %1492 = vmatprep.subr.mxu0 0.0
  %1493 = vmatpush2.msra.mxu0 0.0
  %1494 = vmatprep.subr.mxu0 0.0
  %1495 = vmatpush2.msra.mxu0 0.0
  %1496 = vmatprep.subr.mxu0 0.0
  %1497 = vmatpush2.msra.mxu0 0.0
  %1498 = vmatprep.subr.mxu0 0.0
  %1499 = vmatpush2.msra.mxu0 0.0
  %1500 = vmatprep.subr.mxu0 0.0
  %1501 = vmatpush2.msra.mxu0 0.0
  %1502 = vmatprep.subr.mxu0 0.0
  %1503 = vmatpush2.msra.mxu0 0.0
  %1504 = vmatprep.subr.mxu0 0.0
  %1505 = vmatpush2.msra.mxu0 0.0
  %1506 = vmatprep.subr.mxu0 0.0
  %1507 = vmatpush2.msra.mxu0 0.0
  %1508 = vmatprep.subr.mxu0 0.0
  %1509 = vmatpush2.msra.mxu0 0.0
  %1510 = vmatprep.subr.mxu0 0.0
  %1511 = vmatpush2.msra.mxu0 0.0
  %1512 = vmatprep.subr.mxu0 0.0
  %1513 = vmatpush2.msra.mxu0 0.0
  %1514 = vmatprep.subr.mxu0 0.0
  %1515 = vmatpush2.msra.mxu0 0.0
  %1516 = vmatprep.subr.mxu0 0.0
  %1517 = vmatpush2.msra.mxu0 0.0
  %1518 = vmatprep.subr.mxu0 0.0
  %1519 = vmatpush2.msra.mxu0 0.0
  %1520 = vmatprep.subr.mxu0 0.0
  %1521 = vmatpush2.msra.mxu0 0.0
  %1522 = vmatprep.subr.mxu0 0.0
  %1523 = vmatpush2.msra.mxu0 0.0
  %1524 = vmatprep.mubr.f32.mxu0 0.0
  %1525 = vmatmul.mubr.f32.gmra.mxu0 %v1458
  %v1526 = vpop.f32.mrf.mxu0
  %v1527 = vadd.f32 0.0, %v1526
  %v1528 = vpop.f32.mrf.mxu0
  %1529 = vdwg.mxu0
  %1531 = vrot.lane.b32.xlu0 %v1453, 96
  %v1532 = vpop.permute.xlu0 %1531
  %v1533 = vsel %vm224, %v1532, 0
  %1535 = vmatprep.subr.mxu0 0.0
  %1536 = vmatpush1.msra.mxu0 0.0
  %1537 = vmatprep.subr.mxu0 0.0
  %1538 = vmatpush1.msra.mxu0 0.0
  %1539 = vmatprep.subr.mxu0 0.0
  %1540 = vmatpush1.msra.mxu0 0.0
  %1541 = vmatprep.subr.mxu0 0.0
  %1542 = vmatpush1.msra.mxu0 0.0
  %1543 = vmatprep.subr.mxu0 0.0
  %1544 = vmatpush1.msra.mxu0 0.0
  %1545 = vmatprep.subr.mxu0 0.0
  %1546 = vmatpush1.msra.mxu0 0.0
  %1547 = vmatprep.subr.mxu0 0.0
  %1548 = vmatpush1.msra.mxu0 0.0
  %1549 = vmatprep.subr.mxu0 0.0
  %1550 = vmatpush1.msra.mxu0 0.0
  %1551 = vmatprep.subr.mxu0 0.0
  %1552 = vmatpush1.msra.mxu0 0.0
  %1553 = vmatprep.subr.mxu0 0.0
  %1554 = vmatpush1.msra.mxu0 0.0
  %1555 = vmatprep.subr.mxu0 0.0
  %1556 = vmatpush1.msra.mxu0 0.0
  %1557 = vmatprep.subr.mxu0 0.0
  %1558 = vmatpush1.msra.mxu0 0.0
  %1559 = vmatprep.subr.mxu0 0.0
  %1560 = vmatpush1.msra.mxu0 0.0
  %1561 = vmatprep.subr.mxu0 0.0
  %1562 = vmatpush1.msra.mxu0 0.0
  %1563 = vmatprep.subr.mxu0 0.0
  %1564 = vmatpush1.msra.mxu0 %v219
  %1565 = vmatprep.subr.mxu0 0.0
  %1566 = vmatpush1.msra.mxu0 %v218
  %1567 = vmatprep.subr.mxu0 0.0
  %1568 = vmatpush2.msra.mxu0 0.0
  %1569 = vmatprep.subr.mxu0 0.0
  %1570 = vmatpush2.msra.mxu0 0.0
  %1571 = vmatprep.subr.mxu0 0.0
  %1572 = vmatpush2.msra.mxu0 0.0
  %1573 = vmatprep.subr.mxu0 0.0
  %1574 = vmatpush2.msra.mxu0 0.0
  %1575 = vmatprep.subr.mxu0 0.0
  %1576 = vmatpush2.msra.mxu0 0.0
  %1577 = vmatprep.subr.mxu0 0.0
  %1578 = vmatpush2.msra.mxu0 0.0
  %1579 = vmatprep.subr.mxu0 0.0
  %1580 = vmatpush2.msra.mxu0 0.0
  %1581 = vmatprep.subr.mxu0 0.0
  %1582 = vmatpush2.msra.mxu0 0.0
  %1583 = vmatprep.subr.mxu0 0.0
  %1584 = vmatpush2.msra.mxu0 0.0
  %1585 = vmatprep.subr.mxu0 0.0
  %1586 = vmatpush2.msra.mxu0 0.0
  %1587 = vmatprep.subr.mxu0 0.0
  %1588 = vmatpush2.msra.mxu0 0.0
  %1589 = vmatprep.subr.mxu0 0.0
  %1590 = vmatpush2.msra.mxu0 0.0
  %1591 = vmatprep.subr.mxu0 0.0
  %1592 = vmatpush2.msra.mxu0 0.0
  %1593 = vmatprep.subr.mxu0 0.0
  %1594 = vmatpush2.msra.mxu0 0.0
  %1595 = vmatprep.subr.mxu0 0.0
  %1596 = vmatpush2.msra.mxu0 0.0
  %1597 = vmatprep.subr.mxu0 0.0
  %1598 = vmatpush2.msra.mxu0 0.0
  %1599 = vmatprep.mubr.f32.mxu0 0.0
  %1600 = vmatmul.mubr.f32.gmra.mxu0 %v1533
  %v1601 = vpop.f32.mrf.mxu0
  %v1602 = vadd.f32 0.0, %v1601
  %v1603 = vpop.f32.mrf.mxu0
  %1604 = vdwg.mxu0
  %v1606 = vsel %vm224, 0.0, 0
  %1608 = vmatprep.subr.mxu0 0.0
  %1609 = vmatpush1.msra.mxu0 0.0
  %1610 = vmatprep.subr.mxu0 0.0
  %1611 = vmatpush1.msra.mxu0 0.0
  %1612 = vmatprep.subr.mxu0 0.0
  %1613 = vmatpush1.msra.mxu0 0.0
  %1614 = vmatprep.subr.mxu0 0.0
  %1615 = vmatpush1.msra.mxu0 0.0
  %1616 = vmatprep.subr.mxu0 0.0
  %1617 = vmatpush1.msra.mxu0 0.0
  %1618 = vmatprep.subr.mxu0 0.0
  %1619 = vmatpush1.msra.mxu0 0.0
  %1620 = vmatprep.subr.mxu0 0.0
  %1621 = vmatpush1.msra.mxu0 0.0
  %1622 = vmatprep.subr.mxu0 0.0
  %1623 = vmatpush1.msra.mxu0 0.0
  %1624 = vmatprep.subr.mxu0 0.0
  %1625 = vmatpush1.msra.mxu0 0.0
  %1626 = vmatprep.subr.mxu0 0.0
  %1627 = vmatpush1.msra.mxu0 0.0
  %1628 = vmatprep.subr.mxu0 0.0
  %1629 = vmatpush1.msra.mxu0 0.0
  %1630 = vmatprep.subr.mxu0 0.0
  %1631 = vmatpush1.msra.mxu0 0.0
  %1632 = vmatprep.subr.mxu0 0.0
  %1633 = vmatpush1.msra.mxu0 0.0
  %1634 = vmatprep.subr.mxu0 0.0
  %1635 = vmatpush1.msra.mxu0 0.0
  %1636 = vmatprep.subr.mxu0 0.0
  %1637 = vmatpush1.msra.mxu0 %v219
  %1638 = vmatprep.subr.mxu0 0.0
  %1639 = vmatpush1.msra.mxu0 %v218
  %1640 = vmatprep.subr.mxu0 0.0
  %1641 = vmatpush2.msra.mxu0 0.0
  %1642 = vmatprep.subr.mxu0 0.0
  %1643 = vmatpush2.msra.mxu0 0.0
  %1644 = vmatprep.subr.mxu0 0.0
  %1645 = vmatpush2.msra.mxu0 0.0
  %1646 = vmatprep.subr.mxu0 0.0
  %1647 = vmatpush2.msra.mxu0 0.0
  %1648 = vmatprep.subr.mxu0 0.0
  %1649 = vmatpush2.msra.mxu0 0.0
  %1650 = vmatprep.subr.mxu0 0.0
  %1651 = vmatpush2.msra.mxu0 0.0
  %1652 = vmatprep.subr.mxu0 0.0
  %1653 = vmatpush2.msra.mxu0 0.0
  %1654 = vmatprep.subr.mxu0 0.0
  %1655 = vmatpush2.msra.mxu0 0.0
  %1656 = vmatprep.subr.mxu0 0.0
  %1657 = vmatpush2.msra.mxu0 0.0
  %1658 = vmatprep.subr.mxu0 0.0
  %1659 = vmatpush2.msra.mxu0 0.0
  %1660 = vmatprep.subr.mxu0 0.0
  %1661 = vmatpush2.msra.mxu0 0.0
  %1662 = vmatprep.subr.mxu0 0.0
  %1663 = vmatpush2.msra.mxu0 0.0
  %1664 = vmatprep.subr.mxu0 0.0
  %1665 = vmatpush2.msra.mxu0 0.0
  %1666 = vmatprep.subr.mxu0 0.0
  %1667 = vmatpush2.msra.mxu0 0.0
  %1668 = vmatprep.subr.mxu0 0.0
  %1669 = vmatpush2.msra.mxu0 0.0
  %1670 = vmatprep.subr.mxu0 0.0
  %1671 = vmatpush2.msra.mxu0 0.0
  %1672 = vmatprep.mubr.f32.mxu0 0.0
  %1673 = vmatmul.mubr.f32.gmra.mxu0 %v1606
  %v1674 = vpop.f32.mrf.mxu0
  %v1675 = vadd.f32 0.0, %v1674
  %v1676 = vpop.f32.mrf.mxu0
  %1677 = vdwg.mxu0
  %v1678 = vadd.f32 %v1602, %v1675
  %v1679 = vadd.f32 %v1527, %v1675
  %1681 = vrot.lane.b32.xlu0 %v1527, 64
  %v1682 = vpop.permute.xlu0 %1681
  %v1684 = vadd.f32 %v1454, %v1682
  %v1685 = vxor.u32 %v1684, 2147483648
  %v1686 = vmul.f32 %v1685, 1.442695
  %v1687 = vpow.pop %v1686
  %v1688 = vadd.f32 %v1687, 1.0
  %v1689 = vrcp.pop %v1688
  %v1690 = vmul.f32 1.0, %v1689
  %1691 = vrot.lane.b32.xlu0 %v1452, 32
  %v1692 = vpop.permute.xlu0 %1691
  %v1694 = vmul.f32 %v1690, %v1692
  %1696 = vrot.lane.b32.xlu0 %v1602, 64
  %v1697 = vpop.permute.xlu0 %1696
  %v1699 = vadd.f32 %v1454, %v1697
  %v1700 = vxor.u32 %v1699, 2147483648
  %v1701 = vmul.f32 %v1700, 1.442695
  %v1702 = vpow.pop %v1701
  %v1703 = vadd.f32 %v1702, 1.0
  %v1704 = vrcp.pop %v1703
  %v1705 = vmul.f32 1.0, %v1704
  %1706 = vrot.lane.b32.xlu0 %v1453, 32
  %v1707 = vpop.permute.xlu0 %1706
  %v1709 = vmul.f32 %v1705, %v1707
  %1711 = vrot.lane.b32.xlu0 %v1675, 64
  %v1712 = vpop.permute.xlu0 %1711
  %v1714 = vadd.f32 %v1454, %v1712
  %v1715 = vxor.u32 %v1714, 2147483648
  %v1716 = vmul.f32 %v1715, 1.442695
  %v1717 = vpow.pop %v1716
  %v1718 = vadd.f32 %v1717, 1.0
  %v1719 = vrcp.pop %v1718
  %v1720 = vmul.f32 1.0, %v1719
  %v1721 = vmul.f32 %v1720, 0.0
  %1723 = vrot.lane.b32.xlu0 %v1678, 64
  %v1724 = vpop.permute.xlu0 %1723
  %v1726 = vadd.f32 %v1454, %v1724
  %v1727 = vxor.u32 %v1726, 2147483648
  %v1728 = vmul.f32 %v1727, 1.442695
  %v1729 = vpow.pop %v1728
  %v1730 = vadd.f32 %v1729, 1.0
  %v1731 = vrcp.pop %v1730
  %v1732 = vmul.f32 1.0, %v1731
  %v1733 = vtanh.pop %v1726
  %1735 = vrot.lane.b32.xlu0 %v1733, 80
  %v1736 = vpop.permute.xlu0 %1735
  %v1738 = vmul.f32 %v1732, %v1736
  %1740 = vrot.lane.b32.xlu0 %v1709, 112
  %v1741 = vpop.permute.xlu0 %1740
  %v1743 = vadd.f32 %v1738, %v1741
  %1745 = vrot.lane.b32.xlu0 %v1721, 112
  %v1746 = vpop.permute.xlu0 %1745
  %v1748 = vadd.f32 %v1743, %v1746
  %v1749 = vtanh.pop %v1748
  %1751 = vrot.lane.b32.xlu0 %v1749, 32
  %v1752 = vpop.permute.xlu0 %1751
  %v1754 = vmul.f32 %v1732, %v1752
  %1756 = vrot.lane.b32.xlu0 %v1679, 64
  %v1757 = vpop.permute.xlu0 %1756
  %v1759 = vadd.f32 %v1454, %v1757
  %v1760 = vxor.u32 %v1759, 2147483648
  %v1761 = vmul.f32 %v1760, 1.442695
  %v1762 = vpow.pop %v1761
  %v1763 = vadd.f32 %v1762, 1.0
  %v1764 = vrcp.pop %v1763
  %v1765 = vmul.f32 1.0, %v1764
  %v1766 = vtanh.pop %v1759
  %1768 = vrot.lane.b32.xlu0 %v1766, 80
  %v1769 = vpop.permute.xlu0 %1768
  %v1771 = vmul.f32 %v1765, %v1769
  %1773 = vrot.lane.b32.xlu0 %v1694, 112
  %v1774 = vpop.permute.xlu0 %1773
  %v1776 = vadd.f32 %v1771, %v1774
  %v1777 = vadd.f32 %v1776, %v1746
  %v1778 = vtanh.pop %v1777
  %1780 = vrot.lane.b32.xlu0 %v1778, 32
  %v1781 = vpop.permute.xlu0 %1780
  %v1783 = vmul.f32 %v1765, %v1781
  %1785 = vrot.lane.b32.xlu0 %v1754, 64
  %v1786 = vpop.permute.xlu0 %1785
  %1788 = vst.msk [vmem:[%s6 + $0x2] sm:$0x3] %vm1437, %v1786
  %1790 = vrot.lane.b32.xlu0 %v1783, 64
  %v1791 = vpop.permute.xlu0 %1790
  %1793 = vst.msk [vmem:[%s6 + $0x4] sm:$0x3] %vm1437, %v1791
  %1794 = vrot.lane.b32.xlu0 %v1754, 32
  %v1795 = vpop.permute.xlu0 %1794
  %1797 = vst.msk [vmem:[#allocation4] sm:$0x3] %vm804, %v1795
  %1798 = vrot.lane.b32.xlu0 %v1783, 32
  %v1799 = vpop.permute.xlu0 %1798
  %1801 = vst.msk [vmem:[#allocation4 + $0x2] sm:$0x3] %vm804, %v1799
  %1803 = vrot.lane.b32.xlu0 %v1748, 80
  %v1804 = vpop.permute.xlu0 %1803
  %1806 = vst.msk [vmem:[#allocation4] sm:$0x3] %vm810, %v1804
  %1808 = vrot.lane.b32.xlu0 %v1777, 80
  %v1809 = vpop.permute.xlu0 %1808
  %1811 = vst.msk [vmem:[#allocation4 + $0x2] sm:$0x3] %vm810, %v1809
  %v1812 = vld [vmem:[#allocation4] sm:$0xf]
  %v1813 = vld [vmem:[#allocation2 + $0x6] sm:$0xf]
  %v1814 = vld [vmem:[#allocation2 + $0xa] sm:$0xf]
  %v1815 = vld [vmem:[#allocation3 + $0x2] sm:$0xf]
  %1817 = vrot.lane.b32.xlu0 %v1813, 96
  %v1818 = vpop.permute.xlu0 %1817
  %v1819 = vsel %vm224, %v1818, 0
  %1821 = vmatprep.subr.mxu0 0.0
  %1822 = vmatpush1.msra.mxu0 0.0
  %1823 = vmatprep.subr.mxu0 0.0
  %1824 = vmatpush1.msra.mxu0 0.0
  %1825 = vmatprep.subr.mxu0 0.0
  %1826 = vmatpush1.msra.mxu0 0.0
  %1827 = vmatprep.subr.mxu0 0.0
  %1828 = vmatpush1.msra.mxu0 0.0
  %1829 = vmatprep.subr.mxu0 0.0
  %1830 = vmatpush1.msra.mxu0 0.0
  %1831 = vmatprep.subr.mxu0 0.0
  %1832 = vmatpush1.msra.mxu0 0.0
  %1833 = vmatprep.subr.mxu0 0.0
  %1834 = vmatpush1.msra.mxu0 0.0
  %1835 = vmatprep.subr.mxu0 0.0
  %1836 = vmatpush1.msra.mxu0 0.0
  %1837 = vmatprep.subr.mxu0 0.0
  %1838 = vmatpush1.msra.mxu0 0.0
  %1839 = vmatprep.subr.mxu0 0.0
  %1840 = vmatpush1.msra.mxu0 0.0
  %1841 = vmatprep.subr.mxu0 0.0
  %1842 = vmatpush1.msra.mxu0 0.0
  %1843 = vmatprep.subr.mxu0 0.0
  %1844 = vmatpush1.msra.mxu0 0.0
  %1845 = vmatprep.subr.mxu0 0.0
  %1846 = vmatpush1.msra.mxu0 0.0
  %1847 = vmatprep.subr.mxu0 0.0
  %1848 = vmatpush1.msra.mxu0 0.0
  %1849 = vmatprep.subr.mxu0 0.0
  %1850 = vmatpush1.msra.mxu0 %v219
  %1851 = vmatprep.subr.mxu0 0.0
  %1852 = vmatpush1.msra.mxu0 %v218
  %1853 = vmatprep.subr.mxu0 0.0
  %1854 = vmatpush2.msra.mxu0 0.0
  %1855 = vmatprep.subr.mxu0 0.0
  %1856 = vmatpush2.msra.mxu0 0.0
  %1857 = vmatprep.subr.mxu0 0.0
  %1858 = vmatpush2.msra.mxu0 0.0
  %1859 = vmatprep.subr.mxu0 0.0
  %1860 = vmatpush2.msra.mxu0 0.0
  %1861 = vmatprep.subr.mxu0 0.0
  %1862 = vmatpush2.msra.mxu0 0.0
  %1863 = vmatprep.subr.mxu0 0.0
  %1864 = vmatpush2.msra.mxu0 0.0
  %1865 = vmatprep.subr.mxu0 0.0
  %1866 = vmatpush2.msra.mxu0 0.0
  %1867 = vmatprep.subr.mxu0 0.0
  %1868 = vmatpush2.msra.mxu0 0.0
  %1869 = vmatprep.subr.mxu0 0.0
  %1870 = vmatpush2.msra.mxu0 0.0
  %1871 = vmatprep.subr.mxu0 0.0
  %1872 = vmatpush2.msra.mxu0 0.0
  %1873 = vmatprep.subr.mxu0 0.0
  %1874 = vmatpush2.msra.mxu0 0.0
  %1875 = vmatprep.subr.mxu0 0.0
  %1876 = vmatpush2.msra.mxu0 0.0
  %1877 = vmatprep.subr.mxu0 0.0
  %1878 = vmatpush2.msra.mxu0 0.0
  %1879 = vmatprep.subr.mxu0 0.0
  %1880 = vmatpush2.msra.mxu0 0.0
  %1881 = vmatprep.subr.mxu0 0.0
  %1882 = vmatpush2.msra.mxu0 0.0
  %1883 = vmatprep.subr.mxu0 0.0
  %1884 = vmatpush2.msra.mxu0 0.0
  %1885 = vmatprep.mubr.f32.mxu0 0.0
  %1886 = vmatmul.mubr.f32.gmra.mxu0 %v1819
  %v1887 = vpop.f32.mrf.mxu0
  %v1888 = vadd.f32 0.0, %v1887
  %v1889 = vpop.f32.mrf.mxu0
  %1890 = vdwg.mxu0
  %1892 = vrot.lane.b32.xlu0 %v1814, 96
  %v1893 = vpop.permute.xlu0 %1892
  %v1894 = vsel %vm224, %v1893, 0
  %1896 = vmatprep.subr.mxu0 0.0
  %1897 = vmatpush1.msra.mxu0 0.0
  %1898 = vmatprep.subr.mxu0 0.0
  %1899 = vmatpush1.msra.mxu0 0.0
  %1900 = vmatprep.subr.mxu0 0.0
  %1901 = vmatpush1.msra.mxu0 0.0
  %1902 = vmatprep.subr.mxu0 0.0
  %1903 = vmatpush1.msra.mxu0 0.0
  %1904 = vmatprep.subr.mxu0 0.0
  %1905 = vmatpush1.msra.mxu0 0.0
  %1906 = vmatprep.subr.mxu0 0.0
  %1907 = vmatpush1.msra.mxu0 0.0
  %1908 = vmatprep.subr.mxu0 0.0
  %1909 = vmatpush1.msra.mxu0 0.0
  %1910 = vmatprep.subr.mxu0 0.0
  %1911 = vmatpush1.msra.mxu0 0.0
  %1912 = vmatprep.subr.mxu0 0.0
  %1913 = vmatpush1.msra.mxu0 0.0
  %1914 = vmatprep.subr.mxu0 0.0
  %1915 = vmatpush1.msra.mxu0 0.0
  %1916 = vmatprep.subr.mxu0 0.0
  %1917 = vmatpush1.msra.mxu0 0.0
  %1918 = vmatprep.subr.mxu0 0.0
  %1919 = vmatpush1.msra.mxu0 0.0
  %1920 = vmatprep.subr.mxu0 0.0
  %1921 = vmatpush1.msra.mxu0 0.0
  %1922 = vmatprep.subr.mxu0 0.0
  %1923 = vmatpush1.msra.mxu0 0.0
  %1924 = vmatprep.subr.mxu0 0.0
  %1925 = vmatpush1.msra.mxu0 %v219
  %1926 = vmatprep.subr.mxu0 0.0
  %1927 = vmatpush1.msra.mxu0 %v218
  %1928 = vmatprep.subr.mxu0 0.0
  %1929 = vmatpush2.msra.mxu0 0.0
  %1930 = vmatprep.subr.mxu0 0.0
  %1931 = vmatpush2.msra.mxu0 0.0
  %1932 = vmatprep.subr.mxu0 0.0
  %1933 = vmatpush2.msra.mxu0 0.0
  %1934 = vmatprep.subr.mxu0 0.0
  %1935 = vmatpush2.msra.mxu0 0.0
  %1936 = vmatprep.subr.mxu0 0.0
  %1937 = vmatpush2.msra.mxu0 0.0
  %1938 = vmatprep.subr.mxu0 0.0
  %1939 = vmatpush2.msra.mxu0 0.0
  %1940 = vmatprep.subr.mxu0 0.0
  %1941 = vmatpush2.msra.mxu0 0.0
  %1942 = vmatprep.subr.mxu0 0.0
  %1943 = vmatpush2.msra.mxu0 0.0
  %1944 = vmatprep.subr.mxu0 0.0
  %1945 = vmatpush2.msra.mxu0 0.0
  %1946 = vmatprep.subr.mxu0 0.0
  %1947 = vmatpush2.msra.mxu0 0.0
  %1948 = vmatprep.subr.mxu0 0.0
  %1949 = vmatpush2.msra.mxu0 0.0
  %1950 = vmatprep.subr.mxu0 0.0
  %1951 = vmatpush2.msra.mxu0 0.0
  %1952 = vmatprep.subr.mxu0 0.0
  %1953 = vmatpush2.msra.mxu0 0.0
  %1954 = vmatprep.subr.mxu0 0.0
  %1955 = vmatpush2.msra.mxu0 0.0
  %1956 = vmatprep.subr.mxu0 0.0
  %1957 = vmatpush2.msra.mxu0 0.0
  %1958 = vmatprep.subr.mxu0 0.0
  %1959 = vmatpush2.msra.mxu0 0.0
  %1960 = vmatprep.mubr.f32.mxu0 0.0
  %1961 = vmatmul.mubr.f32.gmra.mxu0 %v1894
  %v1962 = vpop.f32.mrf.mxu0
  %v1963 = vadd.f32 0.0, %v1962
  %v1964 = vpop.f32.mrf.mxu0
  %1965 = vdwg.mxu0
  %v1967 = vsel %vm224, %v1812, 0
  %1969 = vmatprep.subr.mxu0 0.0
  %1970 = vmatpush1.msra.mxu0 0.0
  %1971 = vmatprep.subr.mxu0 0.0
  %1972 = vmatpush1.msra.mxu0 0.0
  %1973 = vmatprep.subr.mxu0 0.0
  %1974 = vmatpush1.msra.mxu0 0.0
  %1975 = vmatprep.subr.mxu0 0.0
  %1976 = vmatpush1.msra.mxu0 0.0
  %1977 = vmatprep.subr.mxu0 0.0
  %1978 = vmatpush1.msra.mxu0 0.0
  %1979 = vmatprep.subr.mxu0 0.0
  %1980 = vmatpush1.msra.mxu0 0.0
  %1981 = vmatprep.subr.mxu0 0.0
  %1982 = vmatpush1.msra.mxu0 0.0
  %1983 = vmatprep.subr.mxu0 0.0
  %1984 = vmatpush1.msra.mxu0 0.0
  %1985 = vmatprep.subr.mxu0 0.0
  %1986 = vmatpush1.msra.mxu0 0.0
  %1987 = vmatprep.subr.mxu0 0.0
  %1988 = vmatpush1.msra.mxu0 0.0
  %1989 = vmatprep.subr.mxu0 0.0
  %1990 = vmatpush1.msra.mxu0 0.0
  %1991 = vmatprep.subr.mxu0 0.0
  %1992 = vmatpush1.msra.mxu0 0.0
  %1993 = vmatprep.subr.mxu0 0.0
  %1994 = vmatpush1.msra.mxu0 0.0
  %1995 = vmatprep.subr.mxu0 0.0
  %1996 = vmatpush1.msra.mxu0 0.0
  %1997 = vmatprep.subr.mxu0 0.0
  %1998 = vmatpush1.msra.mxu0 %v219
  %1999 = vmatprep.subr.mxu0 0.0
  %2000 = vmatpush1.msra.mxu0 %v218
  %2001 = vmatprep.subr.mxu0 0.0
  %2002 = vmatpush2.msra.mxu0 0.0
  %2003 = vmatprep.subr.mxu0 0.0
  %2004 = vmatpush2.msra.mxu0 0.0
  %2005 = vmatprep.subr.mxu0 0.0
  %2006 = vmatpush2.msra.mxu0 0.0
  %2007 = vmatprep.subr.mxu0 0.0
  %2008 = vmatpush2.msra.mxu0 0.0
  %2009 = vmatprep.subr.mxu0 0.0
  %2010 = vmatpush2.msra.mxu0 0.0
  %2011 = vmatprep.subr.mxu0 0.0
  %2012 = vmatpush2.msra.mxu0 0.0
  %2013 = vmatprep.subr.mxu0 0.0
  %2014 = vmatpush2.msra.mxu0 0.0
  %2015 = vmatprep.subr.mxu0 0.0
  %2016 = vmatpush2.msra.mxu0 0.0
  %2017 = vmatprep.subr.mxu0 0.0
  %2018 = vmatpush2.msra.mxu0 0.0
  %2019 = vmatprep.subr.mxu0 0.0
  %2020 = vmatpush2.msra.mxu0 0.0
  %2021 = vmatprep.subr.mxu0 0.0
  %2022 = vmatpush2.msra.mxu0 0.0
  %2023 = vmatprep.subr.mxu0 0.0
  %2024 = vmatpush2.msra.mxu0 0.0
  %2025 = vmatprep.subr.mxu0 0.0
  %2026 = vmatpush2.msra.mxu0 0.0
  %2027 = vmatprep.subr.mxu0 0.0
  %2028 = vmatpush2.msra.mxu0 0.0
  %2029 = vmatprep.subr.mxu0 0.0
  %2030 = vmatpush2.msra.mxu0 0.0
  %2031 = vmatprep.subr.mxu0 0.0
  %2032 = vmatpush2.msra.mxu0 0.0
  %2033 = vmatprep.mubr.f32.mxu0 0.0
  %2034 = vmatmul.mubr.f32.gmra.mxu0 %v1967
  %v2035 = vpop.f32.mrf.mxu0
  %v2036 = vadd.f32 0.0, %v2035
  %v2037 = vpop.f32.mrf.mxu0
  %2038 = vdwg.mxu0
  %v2039 = vadd.f32 %v1963, %v2036
  %v2040 = vadd.f32 %v1888, %v2036
  %2042 = vrot.lane.b32.xlu0 %v1888, 64
  %v2043 = vpop.permute.xlu0 %2042
  %v2045 = vadd.f32 %v1815, %v2043
  %v2046 = vxor.u32 %v2045, 2147483648
  %v2047 = vmul.f32 %v2046, 1.442695
  %v2048 = vpow.pop %v2047
  %v2049 = vadd.f32 %v2048, 1.0
  %v2050 = vrcp.pop %v2049
  %v2051 = vmul.f32 1.0, %v2050
  %2052 = vrot.lane.b32.xlu0 %v1813, 32
  %v2053 = vpop.permute.xlu0 %2052
  %v2055 = vmul.f32 %v2051, %v2053
  %2057 = vrot.lane.b32.xlu0 %v1963, 64
  %v2058 = vpop.permute.xlu0 %2057
  %v2060 = vadd.f32 %v1815, %v2058
  %v2061 = vxor.u32 %v2060, 2147483648
  %v2062 = vmul.f32 %v2061, 1.442695
  %v2063 = vpow.pop %v2062
  %v2064 = vadd.f32 %v2063, 1.0
  %v2065 = vrcp.pop %v2064
  %v2066 = vmul.f32 1.0, %v2065
  %2067 = vrot.lane.b32.xlu0 %v1814, 32
  %v2068 = vpop.permute.xlu0 %2067
  %v2070 = vmul.f32 %v2066, %v2068
  %2072 = vrot.lane.b32.xlu0 %v2036, 64
  %v2073 = vpop.permute.xlu0 %2072
  %v2075 = vadd.f32 %v1815, %v2073
  %v2076 = vxor.u32 %v2075, 2147483648
  %v2077 = vmul.f32 %v2076, 1.442695
  %v2078 = vpow.pop %v2077
  %v2079 = vadd.f32 %v2078, 1.0
  %v2080 = vrcp.pop %v2079
  %v2081 = vmul.f32 1.0, %v2080
  %2082 = vrot.lane.b32.xlu0 %v1812, 64
  %v2083 = vpop.permute.xlu0 %2082
  %v2085 = vmul.f32 %v2081, %v2083
  %2087 = vrot.lane.b32.xlu0 %v2039, 64
  %v2088 = vpop.permute.xlu0 %2087
  %v2090 = vadd.f32 %v1815, %v2088
  %v2091 = vxor.u32 %v2090, 2147483648
  %v2092 = vmul.f32 %v2091, 1.442695
  %v2093 = vpow.pop %v2092
  %v2094 = vadd.f32 %v2093, 1.0
  %v2095 = vrcp.pop %v2094
  %v2096 = vmul.f32 1.0, %v2095
  %v2097 = vtanh.pop %v2090
  %2099 = vrot.lane.b32.xlu0 %v2097, 80
  %v2100 = vpop.permute.xlu0 %2099
  %v2102 = vmul.f32 %v2096, %v2100
  %2104 = vrot.lane.b32.xlu0 %v2070, 112
  %v2105 = vpop.permute.xlu0 %2104
  %v2107 = vadd.f32 %v2102, %v2105
  %2109 = vrot.lane.b32.xlu0 %v2085, 112
  %v2110 = vpop.permute.xlu0 %2109
  %v2112 = vadd.f32 %v2107, %v2110
  %v2113 = vtanh.pop %v2112
  %2115 = vrot.lane.b32.xlu0 %v2113, 32
  %v2116 = vpop.permute.xlu0 %2115
  %v2118 = vmul.f32 %v2096, %v2116
  %2120 = vrot.lane.b32.xlu0 %v2040, 64
  %v2121 = vpop.permute.xlu0 %2120
  %v2123 = vadd.f32 %v1815, %v2121
  %v2124 = vxor.u32 %v2123, 2147483648
  %v2125 = vmul.f32 %v2124, 1.442695
  %v2126 = vpow.pop %v2125
  %v2127 = vadd.f32 %v2126, 1.0
  %v2128 = vrcp.pop %v2127
  %v2129 = vmul.f32 1.0, %v2128
  %v2130 = vtanh.pop %v2123
  %2132 = vrot.lane.b32.xlu0 %v2130, 80
  %v2133 = vpop.permute.xlu0 %2132
  %v2135 = vmul.f32 %v2129, %v2133
  %2137 = vrot.lane.b32.xlu0 %v2055, 112
  %v2138 = vpop.permute.xlu0 %2137
  %v2140 = vadd.f32 %v2135, %v2138
  %v2141 = vadd.f32 %v2140, %v2110
  %v2142 = vtanh.pop %v2141
  %2144 = vrot.lane.b32.xlu0 %v2142, 32
  %v2145 = vpop.permute.xlu0 %2144
  %v2147 = vmul.f32 %v2129, %v2145
  %2149 = vrot.lane.b32.xlu0 %v2118, 64
  %v2150 = vpop.permute.xlu0 %2149
  %2152 = vst.msk [vmem:[%s6 + $0x6] sm:$0xf] %vm1123, %v2150
  %2154 = vrot.lane.b32.xlu0 %v2147, 64
  %v2155 = vpop.permute.xlu0 %2154
  %2157 = vst.msk [vmem:[%s6 + $0xa] sm:$0xf] %vm1123, %v2155
  // Predicated region
  $region26: #{tree_encoder_v2_forward.1} parent=0 // pred_check
    _
  $region27: #{tree_encoder_v2_forward.1} parent=0 // pred_check_branch
    %2159 = sbr.rel (0) target = $region29
  $region28: #{tree_encoder_v2_forward.1} parent=0 // pred_region
    _
  $region29: #{tree_encoder_v2_forward.1} parent=0 // pred_fallthru
    _
  // Predicated region
  $region30: #{tree_encoder_v2_forward.1} parent=0 // pred_check
    _
  $region31: #{tree_encoder_v2_forward.1} parent=0 // pred_check_branch
    %2161 = sbr.rel (0) target = $region33
  $region32: #{tree_encoder_v2_forward.1} parent=0 // pred_region
    _
  $region33: #{tree_encoder_v2_forward.1} parent=0 // pred_fallthru
    _

</llo_original>
